<compile_context>
chip_gen: v5e
topology: v5e:2x2
jax: 0.10.0
libtpu: 0.0.40
codegen_flags: <defaults>
</compile_context>

<pallas_src>
import functools

import jax
import jax.numpy as jnp
from jax.experimental import pallas as pl
from jax.experimental.pallas import tpu as pltpu

LANE = 128


# ---------------------------------------------------------------------------
# Small helpers
# ---------------------------------------------------------------------------

def _rup(x, m):
    return ((x + m - 1) // m) * m


def _pad_axis(a, axis, size):
    if a.shape[axis] == size:
        return a
    pads = [(0, 0)] * a.ndim
    pads[axis] = (0, size - a.shape[axis])
    return jnp.pad(a, pads)


def _pad_rows(a, p_pad):
    if a.shape[0] == p_pad:
        return a
    return jnp.pad(a, ((0, p_pad - a.shape[0]),) + ((0, 0),) * (a.ndim - 1))


def _row_tile(P):
    """Largest multiple-of-8 row tile <= 512 that divides (8-padded) P."""
    p8 = _rup(P, 8)
    cap = min(512, p8)
    for tp in range(cap, 7, -8):
        if p8 % tp == 0:
            return tp, p8
    return cap, _rup(p8, cap)


def _col_tile(C):
    """Lane-dense output-channel tile (<=512) dividing the padded channel count."""
    for tc in (512, 384, 256, 128):
        if tc <= C and C % tc == 0:
            return tc
    return C


def _band_rows(H, W, stride):
    """Rows per conv2 band: divides H, multiple of stride, sublane-aligned output."""
    if H % stride:
        return H  # TODO(synk): odd spatial sizes fall back to whole-image tiles.
    wo = W // stride
    cands = [d for d in range(stride, H + 1, stride) if H % d == 0]
    good = [d for d in cands if d == H or ((d // stride) * wo) % 8 == 0]
    if not good:
        return H
    target = max(stride, 2048 // max(W, 1))
    fits = [d for d in good if d <= target]
    return max(fits) if fits else min(good)


@functools.lru_cache(maxsize=None)
def _vmem_limit():
    # Generation-aware VMEM budget (v5e/v6e: 128 MiB, v7x: 64 MiB per TC).
    try:
        cap = int(pltpu.get_tpu_info().vmem_capacity_bytes)
        return max(32 * 1024 * 1024, min(int(cap * 0.6), 96 * 1024 * 1024))
    except Exception:
        return 48 * 1024 * 1024


def _cparams(n_axes):
    return pltpu.CompilerParams(
        dimension_semantics=("parallel",) * n_axes,
        vmem_limit_bytes=_vmem_limit())


@functools.lru_cache(maxsize=None)
def _buffered1_ok():
    """Probe pl.Buffered(1) (single-buffered constant blocks); degrade gracefully."""
    try:
        def k(x_ref, o_ref):
            o_ref[...] = x_ref[...] + 1.0

        x = jnp.zeros((8, 128), jnp.float32)
        out = pl.pallas_call(
            k,
            out_shape=jax.ShapeDtypeStruct((8, 128), jnp.float32),
            grid=(2,),
            in_specs=[pl.BlockSpec((8, 128), lambda i: (0, 0),
                                   pipeline_mode=pl.Buffered(1))],
            out_specs=pl.BlockSpec((8, 128), lambda i: (0, 0)),
        )(x)
        jax.block_until_ready(out)
        return True
    except Exception:
        return False


def _spec(shape, index_map, *, single_buffer=False):
    """BlockSpec; constant-index blocks are single-buffered when supported."""
    if single_buffer and _buffered1_ok():
        return pl.BlockSpec(shape, index_map, pipeline_mode=pl.Buffered(1))
    return pl.BlockSpec(shape, index_map)


# ---------------------------------------------------------------------------
# Pallas kernels
# ---------------------------------------------------------------------------

def _mm_bias_kernel(x_ref, w_ref, b_ref, o_ref, *, relu):
    # conv 1x1 (+ folded BN): bf16 x bf16 -> f32 accumulate, f32 epilogue.
    y = jnp.dot(x_ref[...], w_ref[...], preferred_element_type=jnp.float32)
    y = y + b_ref[...]
    if relu:
        y = jnp.maximum(y, 0.0)
    o_ref[...] = y.astype(o_ref.dtype)


def _mm_bias_res_relu_kernel(x_ref, r_ref, w_ref, b_ref, o_ref):
    # conv3 1x1 + bn3 + plain residual add (f32) + final ReLU, bf16 store.
    y = jnp.dot(x_ref[...], w_ref[...], preferred_element_type=jnp.float32)
    y = y + b_ref[...] + r_ref[...].astype(jnp.float32)
    o_ref[...] = jnp.maximum(y, 0.0).astype(o_ref.dtype)


def _mm2_bias_relu_kernel(x_ref, z_ref, wx_ref, wz_ref, b_ref, o_ref):
    # conv3 1x1 + bn3 fused with downsample conv 1x1 + bnd; residual add is
    # in-register (f32) and the final ReLU is applied before the single store.
    y = jnp.dot(x_ref[...], wx_ref[...], preferred_element_type=jnp.float32)
    y = y + jnp.dot(z_ref[...], wz_ref[...], preferred_element_type=jnp.float32)
    o_ref[...] = jnp.maximum(y + b_ref[...], 0.0).astype(o_ref.dtype)


def _conv3x3_pool_kernel(x_ref, top_ref, bot_ref, w_ref, b_ref, o_ref,
                         *, Hb, W, stride):
    # x_ref: (Hb, W+2, C) W-padded row band; top/bot: (1, W+2, C) halo rows
    # (clamped indices, gated to zero at the image border); w_ref: (3, 3C, cout).
    C = x_ref.shape[-1]
    j = pl.program_id(1)
    nb = pl.num_programs(1)
    gt = (j > 0).astype(x_ref.dtype)
    gb = (j < nb - 1).astype(x_ref.dtype)
    xr = jnp.concatenate([top_ref[...] * gt, x_ref[...], bot_ref[...] * gb],
                         axis=0)                                   # (Hb+2, W+2, C)
    # One (Hb+2, W, 3C) column slab, then THREE accumulating K=3C dots (per dy
    # shift) -- no 9xC im2col slab, dy slices on the major dim are cheap.
    cols = jnp.concatenate([xr[:, d:d + W, :] for d in range(3)], axis=-1)
    y = jnp.dot(cols[0:Hb].reshape(Hb * W, 3 * C), w_ref[0],
                preferred_element_type=jnp.float32)
    y = y + jnp.dot(cols[1:Hb + 1].reshape(Hb * W, 3 * C), w_ref[1],
                    preferred_element_type=jnp.float32)
    y = y + jnp.dot(cols[2:Hb + 2].reshape(Hb * W, 3 * C), w_ref[2],
                    preferred_element_type=jnp.float32)
    y = jnp.maximum(y + b_ref[...], 0.0)          # (Hb*W, cout); 1/s^2 pre-folded
    if stride > 1:
        s = stride
        cout = y.shape[-1]
        ho_b, wo = Hb // s, W // s
        y = y.reshape(Hb, wo, s, cout)
        yw = y[:, :, 0, :]
        for t in range(1, s):
            yw = yw + y[:, :, t, :]
        yw = yw.reshape(ho_b, s, wo, cout)
        yh = yw[:, 0, :, :]
        for t in range(1, s):
            yh = yh + yw[:, t, :, :]
        y = yh.reshape(ho_b * wo, cout)
    o_ref[...] = y.astype(o_ref.dtype)


# ---------------------------------------------------------------------------
# Wrappers around pallas_call
# ---------------------------------------------------------------------------

def matmul_bias_act(x2d, w, bias, *, relu, out_dtype):
    P, K = x2d.shape
    cout = w.shape[1]
    tp, p_pad = _row_tile(P)
    tc = _col_tile(cout)
    n_pt, n_ct = p_pad // tp, cout // tc
    out = pl.pallas_call(
        functools.partial(_mm_bias_kernel, relu=relu),
        out_shape=jax.ShapeDtypeStruct((p_pad, cout), out_dtype),
        grid=(n_pt, n_ct),
        in_specs=[
            _spec((tp, K), lambda i, j: (i, 0), single_buffer=(n_pt == 1)),
            _spec((K, tc), lambda i, j: (0, j), single_buffer=(n_ct == 1)),
            _spec((1, tc), lambda i, j: (0, j), single_buffer=(n_ct == 1)),
        ],
        out_specs=pl.BlockSpec((tp, tc), lambda i, j: (i, j)),
        compiler_params=_cparams(2),
    )(_pad_rows(x2d, p_pad), w, bias)
    return out[:P]


def matmul_bias_res_relu(x2d, res, w, bias):
    # residual channel count == cout here (identity passthrough path).
    P, K = x2d.shape
    cout = w.shape[1]
    tp, p_pad = _row_tile(P)
    tc = _col_tile(cout)
    n_pt, n_ct = p_pad // tp, cout // tc
    out = pl.pallas_call(
        _mm_bias_res_relu_kernel,
        out_shape=jax.ShapeDtypeStruct((p_pad, cout), jnp.bfloat16),
        grid=(n_pt, n_ct),
        in_specs=[
            _spec((tp, K), lambda i, j: (i, 0), single_buffer=(n_pt == 1)),
            _spec((tp, tc), lambda i, j: (i, j)),
            _spec((K, tc), lambda i, j: (0, j), single_buffer=(n_ct == 1)),
            _spec((1, tc), lambda i, j: (0, j), single_buffer=(n_ct == 1)),
        ],
        out_specs=pl.BlockSpec((tp, tc), lambda i, j: (i, j)),
        compiler_params=_cparams(2),
    )(_pad_rows(x2d, p_pad), _pad_rows(res, p_pad), w, bias)
    return out[:P]


def matmul2_bias_relu(x2d, z2d, wx, wz, bias):
    P, kx = x2d.shape
    kz = z2d.shape[1]
    cout = wx.shape[1]
    tp, p_pad = _row_tile(P)
    tc = _col_tile(cout)
    n_pt, n_ct = p_pad // tp, cout // tc
    out = pl.pallas_call(
        _mm2_bias_relu_kernel,
        out_shape=jax.ShapeDtypeStruct((p_pad, cout), jnp.bfloat16),
        grid=(n_pt, n_ct),
        in_specs=[
            _spec((tp, kx), lambda i, j: (i, 0), single_buffer=(n_pt == 1)),
            _spec((tp, kz), lambda i, j: (i, 0), single_buffer=(n_pt == 1)),
            _spec((kx, tc), lambda i, j: (0, j), single_buffer=(n_ct == 1)),
            _spec((kz, tc), lambda i, j: (0, j), single_buffer=(n_ct == 1)),
            _spec((1, tc), lambda i, j: (0, j), single_buffer=(n_ct == 1)),
        ],
        out_specs=pl.BlockSpec((tp, tc), lambda i, j: (i, j)),
        compiler_params=_cparams(2),
    )(_pad_rows(x2d, p_pad), _pad_rows(z2d, p_pad), wx, wz, bias)
    return out[:P]


def conv3x3_bn_relu_pool(x_nhwc, w9, bias, stride):
    """Fused 3x3 conv (pad=1) + folded BN (incl. 1/s^2) + ReLU + AvgPool(stride)."""
    N, H, W, C = x_nhwc.shape
    cout = w9.shape[-1]
    ho, wo = H // stride, W // stride
    Hb = _band_rows(H, W, stride)
    nb = H // Hb
    obp = (Hb // stride) * wo          # pooled output pixels per band
    # TODO(synk): 1-pixel W halo is still an XLA pad pass over h1; the H halo
    #   is handled in-kernel via the clamped 1-row blocks below.
    xp = jnp.pad(x_nhwc, ((0, 0), (0, 0), (1, 1), (0, 0)))
    return pl.pallas_call(
        functools.partial(_conv3x3_pool_kernel, Hb=Hb, W=W, stride=stride),
        out_shape=jax.ShapeDtypeStruct((N, ho * wo, cout), jnp.bfloat16),
        grid=(N, nb),
        in_specs=[
            pl.BlockSpec((None, Hb, W + 2, C), lambda n, j: (n, j, 0, 0)),
            pl.BlockSpec((None, 1, W + 2, C),
                         lambda n, j: (n, jnp.maximum(j * Hb - 1, 0), 0, 0)),
            pl.BlockSpec((None, 1, W + 2, C),
                         lambda n, j: (n, jnp.minimum((j + 1) * Hb, H - 1), 0, 0)),
            _spec((3, 3 * C, cout), lambda n, j: (0, 0, 0), single_buffer=True),
            _spec((1, cout), lambda n, j: (0, 0), single_buffer=True),
        ],
        out_specs=pl.BlockSpec((None, obp, cout), lambda n, j: (n, j, 0)),
        compiler_params=_cparams(2),
    )(xp, xp, xp, w9, bias)


def avg_pool(x_nhwc, s):
    """AvgPool2d(kernel=s, stride=s) for H, W divisible by s (reference glue)."""
    if s == 1:
        return x_nhwc
    N, H, W, C = x_nhwc.shape
    return x_nhwc.reshape(N, H // s, s, W // s, s, C).mean(axis=(2, 4))


def bn_fold(gamma, beta, mean, var, eps=1e-5):
    scale = gamma / jnp.sqrt(var + eps)
    return scale, beta - mean * scale


# ---------------------------------------------------------------------------
# Bottleneck forward (Pallas path)
# ---------------------------------------------------------------------------

def bottleneck_forward(x_nchw, params, planes, stride):
    # NCHW -> NHWC and cast to bf16 ONCE; activations stay bf16 end-to-end.
    x = jnp.transpose(x_nchw, (0, 2, 3, 1)).astype(jnp.bfloat16)
    N, H, W, cin = x.shape
    out_c = planes * 4
    has_ds = stride > 1 or cin != out_c
    ho, wo = H // stride, W // stride

    # Lane-dense channel padding (no-op when channels are already mult. of 128).
    cin_p = _rup(cin, LANE)
    pl_p = _rup(planes, LANE)
    out_p = _rup(out_c, LANE)

    # Fold BN scales into conv weights; kernels only add the (f32) bias.
    s1, b1 = bn_fold(*params["bn1"])
    s2, b2 = bn_fold(*params["bn2"])
    s3, b3 = bn_fold(*params["bn3"])

    # Fold the AvgPool(stride) 1/s^2 into conv2's folded BN (ReLU is positively
    # homogeneous), so the conv2 pooling epilogue is add-only.
    inv = 1.0 / float(stride * stride)

    w1 = _pad_axis(_pad_axis(params["w1"] * s1[None, :], 0, cin_p), 1, pl_p)
    w1 = w1.astype(jnp.bfloat16)
    w2 = params["w2"] * (s2 * inv)[None, None, None, :]
    w2 = _pad_axis(_pad_axis(w2, 2, pl_p), 3, pl_p)
    w2 = w2.reshape(3, 3 * pl_p, pl_p).astype(jnp.bfloat16)       # per-dy slabs
    w3 = _pad_axis(_pad_axis(params["w3"] * s3[None, :], 0, pl_p), 1, out_p)
    w3 = w3.astype(jnp.bfloat16)
    b1p = _pad_axis(b1.reshape(1, -1), 1, pl_p).astype(jnp.float32)
    b2p = _pad_axis((b2 * inv).reshape(1, -1), 1, pl_p).astype(jnp.float32)
    b3p = _pad_axis(b3.reshape(1, -1), 1, out_p).astype(jnp.float32)

    x_p = _pad_axis(x, 3, cin_p)                    # bf16 NHWC, padded channels
    P = N * H * W
    po = N * ho * wo

    # conv1 (1x1) + bn1 + relu
    h1 = matmul_bias_act(x_p.reshape(P, cin_p), w1, b1p,
                         relu=True, out_dtype=jnp.bfloat16)
    h1 = h1.reshape(N, H, W, pl_p)

    # conv2 (3x3, pad=1) + bn2 + relu + avgpool(stride), fused & row-band tiled
    h2 = conv3x3_bn_relu_pool(h1, w2, b2p, stride).reshape(po, pl_p)

    if has_ds:
        sd, bd = bn_fold(*params["bnd"])
        wd = _pad_axis(_pad_axis(params["wd"] * sd[None, :], 0, cin_p), 1, out_p)
        wd = wd.astype(jnp.bfloat16)
        bdp = _pad_axis(bd.reshape(1, -1), 1, out_p).astype(jnp.float32)
        # TODO(synk): identity-branch AvgPool2d stays as XLA glue (reshape-mean).
        if stride > 1:
            idp = x_p.reshape(N, ho, stride, wo, stride, cin_p).mean(
                axis=(2, 4), dtype=jnp.float32).astype(jnp.bfloat16)
        else:
            idp = x_p
        # conv3 + bn3 + (downsample conv + bnd) + residual + relu in ONE kernel.
        out2d = matmul2_bias_relu(h2, idp.reshape(po, cin_p), w3, wd, b3p + bdp)
    else:
        # cin == out_c here, so cin_p == out_p and the padded residual aligns.
        out2d = matmul_bias_res_relu(h2, x_p.reshape(po, out_p), w3, b3p)

    out = out2d[:, :out_c].reshape(N, ho, wo, out_c)
    return jnp.transpose(out, (0, 3, 1, 2)).astype(jnp.float32)    # -> NCHW f32


# ---------------------------------------------------------------------------
# Pure-JAX reference (mirrors PyTorch eval-mode semantics, f32)
# ---------------------------------------------------------------------------

def reference_forward(x_nchw, params, planes, stride):
    x = jnp.transpose(x_nchw, (0, 2, 3, 1)).astype(jnp.float32)
    eps = 1e-5

    def bn(y, p):
        g, b, m, v = p
        return (y - m) / jnp.sqrt(v + eps) * g + b

    out = jnp.maximum(bn(jnp.einsum('nhwc,cd->nhwd', x, params["w1"]),
                         params["bn1"]), 0.0)
    N, H, W, C = out.shape
    xp = jnp.pad(out, ((0, 0), (1, 1), (1, 1), (0, 0)))
    acc = jnp.zeros((N, H, W, params["w2"].shape[-1]), jnp.float32)
    for dy in range(3):
        for dx in range(3):
            acc = acc + jnp.einsum('nhwc,cd->nhwd',
                                   xp[:, dy:dy + H, dx:dx + W, :],
                                   params["w2"][dy, dx])
    out = jnp.maximum(bn(acc, params["bn2"]), 0.0)
    out = avg_pool(out, stride)
    out = bn(jnp.einsum('nhwc,cd->nhwd', out, params["w3"]), params["bn3"])

    cin = x.shape[-1]
    if stride > 1 or cin != planes * 4:
        idp = avg_pool(x, stride)
        identity = bn(jnp.einsum('nhwc,cd->nhwd', idp, params["wd"]),
                      params["bnd"])
    else:
        identity = x
    out = jnp.maximum(out + identity, 0.0)
    return jnp.transpose(out, (0, 3, 1, 2))


# ---------------------------------------------------------------------------
# Deterministic parameter init + demo
# ---------------------------------------------------------------------------

def make_params(key, inplanes, planes):
    out_c = planes * 4
    ks = jax.random.split(key, 12)

    def conv_w(k, cin, cout):
        return (jax.random.normal(k, (cin, cout), jnp.float32)
                / jnp.sqrt(jnp.float32(cin)))

    def bn_params(k, c):
        k1, k2, k3, k4 = jax.random.split(k, 4)
        gamma = jax.random.uniform(k1, (c,), jnp.float32, 0.5, 1.5)
        beta = 0.1 * jax.random.normal(k2, (c,), jnp.float32)
        mean = 0.1 * jax.random.normal(k3, (c,), jnp.float32)
        var = jax.random.uniform(k4, (c,), jnp.float32, 0.5, 1.5)
        return (gamma, beta, mean, var)

    w2 = (jax.random.normal(ks[1], (3, 3, planes, planes), jnp.float32)
          / jnp.sqrt(jnp.float32(9 * planes)))
    return {
        "w1": conv_w(ks[0], inplanes, planes),
        "w2": w2,                                   # HWIO
        "w3": conv_w(ks[2], planes, out_c),
        "wd": conv_w(ks[3], inplanes, out_c),
        "bn1": bn_params(ks[4], planes),
        "bn2": bn_params(ks[5], planes),
        "bn3": bn_params(ks[6], out_c),
        "bnd": bn_params(ks[7], out_c),
    }


if __name__ == "__main__":
    configs = [
        # (N, H, W, inplanes, planes, stride)
        (2, 16, 16, 8, 8, 2),    # downsample branch (stride 2 + channel expansion)
        (2, 16, 16, 32, 8, 1),   # identity passthrough (stride 1, cin == planes*4)
        (1, 64, 64, 8, 8, 2),    # multi-row-band conv2 path (halo gating across bands)
    ]
    key = jax.random.PRNGKey(0)
    for N, H, W, inplanes, planes, stride in configs:
        key, k_x, k_p = jax.random.split(key, 3)
        x = jax.random.normal(k_x, (N, inplanes, H, W), jnp.float32)   # NCHW input
        params = make_params(k_p, inplanes, planes)

        fwd = jax.jit(functools.partial(bottleneck_forward,
                                        planes=planes, stride=stride))
        out = jax.block_until_ready(fwd(x, params))
        ref = jax.block_until_ready(reference_forward(x, params, planes, stride))

        assert out.shape == (N, planes * 4, H // stride, W // stride), out.shape
        max_err = float(jnp.max(jnp.abs(out - ref)))
        # bf16 MXU operands / bf16 stores -> relaxed tolerance vs f32 reference.
        assert jnp.allclose(out, ref, rtol=6e-2, atol=6e-2), max_err

    print("KERNEL_OK")
</pallas_src>

<mosaic_0001>
module attributes {stable_mosaic.version = 11 : i64} {
  func.func @_mm_bias_kernel(%arg0: i32, %arg1: i32, %arg2: memref<512x128xbf16, #tpu.memory_space<vmem>>, %arg3: memref<128x128xbf16, #tpu.memory_space<vmem>>, %arg4: memref<1x128xf32, #tpu.memory_space<vmem>>, %arg5: memref<512x128xbf16, #tpu.memory_space<vmem>>) attributes {dimension_semantics = [#tpu.dimension_semantics<parallel>, #tpu.dimension_semantics<parallel>], iteration_bounds = array<i64: 1, 1>, scalar_prefetch = 0 : i64, scratch_operands = 0 : i64, tpu.core_type = #tpu.core_type<tc>, window_params = [{pipeline_mode = #tpu.pipeline_mode<synchronous>, transform_indices = @transform_0, window_bounds = array<i64: 512, 128>}, {pipeline_mode = #tpu.pipeline_mode<synchronous>, transform_indices = @transform_1, window_bounds = array<i64: 128, 128>}, {pipeline_mode = #tpu.pipeline_mode<synchronous>, transform_indices = @transform_2, window_bounds = array<i64: 1, 128>}, {transform_indices = @transform_3, window_bounds = array<i64: 512, 128>}]} {
    %c0 = arith.constant 0 : index
    %c0_0 = arith.constant 0 : index
    %0 = vector.load %arg2[%c0, %c0_0] : memref<512x128xbf16, #tpu.memory_space<vmem>>, vector<512x128xbf16>
    %c0_1 = arith.constant 0 : index
    %c0_2 = arith.constant 0 : index
    %1 = vector.load %arg3[%c0_1, %c0_2] : memref<128x128xbf16, #tpu.memory_space<vmem>>, vector<128x128xbf16>
    %cst = arith.constant dense<0.000000e+00> : vector<512x128xf32>
    %2 = tpu.matmul %0, %1, %cst {dimension_numbers = #tpu.dot_dimension_numbers<[1], [0], [0], [1], [0, 0, 1, 1], [], []>} : vector<512x128xbf16>, vector<128x128xbf16>, vector<512x128xf32> -> vector<512x128xf32>
    %c0_3 = arith.constant 0 : index
    %c0_4 = arith.constant 0 : index
    %3 = vector.load %arg4[%c0_3, %c0_4] : memref<1x128xf32, #tpu.memory_space<vmem>>, vector<1x128xf32>
    %4 = vector.broadcast %3 : vector<1x128xf32> to vector<512x128xf32>
    %5 = arith.addf %2, %4 : vector<512x128xf32>
    %cst_5 = arith.constant 0.000000e+00 : f32
    %6 = vector.broadcast %cst_5 : f32 to vector<512x128xf32>
    %7 = arith.maximumf %5, %6 : vector<512x128xf32>
    %8 = arith.truncf %7 : vector<512x128xf32> to vector<512x128xbf16>
    %c0_6 = arith.constant 0 : index
    %c0_7 = arith.constant 0 : index
    %9 = vector.load %arg5[%c0_6, %c0_7] : memref<512x128xbf16, #tpu.memory_space<vmem>>, vector<512x128xbf16>
    tpu.vector_store %arg5[%c0_6, %c0_7], %8 {strides = array<i32>} : memref<512x128xbf16, #tpu.memory_space<vmem>>, vector<512x128xbf16>,
    return
  }
  func.func @transform_0(%arg0: i32, %arg1: i32) -> (i32, i32) {
    %c0_i32 = arith.constant 0 : i32
    %c0_i32_0 = arith.constant 0 : i32
    return %arg0, %c0_i32 : i32, i32
  }
  func.func @transform_1(%arg0: i32, %arg1: i32) -> (i32, i32) {
    %c0_i32 = arith.constant 0 : i32
    %c0_i32_0 = arith.constant 0 : i32
    return %c0_i32, %arg1 : i32, i32
  }
  func.func @transform_2(%arg0: i32, %arg1: i32) -> (i32, i32) {
    %c0_i32 = arith.constant 0 : i32
    %c0_i32_0 = arith.constant 0 : i32
    return %c0_i32, %arg1 : i32, i32
  }
  func.func @transform_3(%arg0: i32, %arg1: i32) -> (i32, i32) {
    %c0_i32 = arith.constant 0 : i32
    return %arg0, %arg1 : i32, i32
  }
}

module attributes {stable_mosaic.version = 11 : i64} {
  func.func @_conv3x3_pool_kernel(%arg0: i32, %arg1: i32, %arg2: memref<1x16x18x128xbf16, #tpu.memory_space<vmem>>, %arg3: memref<1x1x18x128xbf16, #tpu.memory_space<vmem>>, %arg4: memref<1x1x18x128xbf16, #tpu.memory_space<vmem>>, %arg5: memref<3x384x128xbf16, #tpu.memory_space<vmem>>, %arg6: memref<1x128xf32, #tpu.memory_space<vmem>>, %arg7: memref<1x64x128xbf16, #tpu.memory_space<vmem>>) attributes {dimension_semantics = [#tpu.dimension_semantics<parallel>, #tpu.dimension_semantics<parallel>], iteration_bounds = array<i64: 2, 1>, scalar_prefetch = 0 : i64, scratch_operands = 0 : i64, tpu.core_type = #tpu.core_type<tc>, window_params = [{transform_indices = @transform_0, window_bounds = array<i64: 1, 16, 18, 128>}, {transform_indices = @transform_1, window_bounds = array<i64: 1, 1, 18, 128>}, {transform_indices = @transform_2, window_bounds = array<i64: 1, 1, 18, 128>}, {pipeline_mode = #tpu.pipeline_mode<synchronous>, transform_indices = @transform_3, window_bounds = array<i64: 3, 384, 128>}, {pipeline_mode = #tpu.pipeline_mode<synchronous>, transform_indices = @transform_4, window_bounds = array<i64: 1, 128>}, {transform_indices = @transform_5, window_bounds = array<i64: 1, 64, 128>}]} {
    %c0_i32 = arith.constant 0 : i32
    %0 = arith.cmpi sgt, %arg1, %c0_i32 : i32
    %1 = arith.extui %0 : i1 to i32
    %2 = arith.sitofp %1 : i32 to f32
    %3 = arith.truncf %2 : f32 to bf16
    %c0_i32_0 = arith.constant 0 : i32
    %4 = arith.cmpi slt, %arg1, %c0_i32_0 : i32
    %5 = arith.extui %4 : i1 to i32
    %6 = arith.sitofp %5 : i32 to f32
    %7 = arith.truncf %6 : f32 to bf16
    %c0 = arith.constant 0 : index
    %c0_1 = arith.constant 0 : index
    %c0_2 = arith.constant 0 : index
    %c0_3 = arith.constant 0 : index
    %8 = vector.load %arg3[%c0, %c0_1, %c0_2, %c0_3] : memref<1x1x18x128xbf16, #tpu.memory_space<vmem>>, vector<1x1x18x128xbf16>
    %9 = vector.shape_cast %8 : vector<1x1x18x128xbf16> to vector<1x18x128xbf16>
    %10 = vector.broadcast %3 : bf16 to vector<1x18x128xbf16>
    %11 = arith.mulf %9, %10 : vector<1x18x128xbf16>
    %c0_4 = arith.constant 0 : index
    %c0_5 = arith.constant 0 : index
    %c0_6 = arith.constant 0 : index
    %c0_7 = arith.constant 0 : index
    %12 = vector.load %arg2[%c0_4, %c0_5, %c0_6, %c0_7] : memref<1x16x18x128xbf16, #tpu.memory_space<vmem>>, vector<1x16x18x128xbf16>
    %13 = vector.shape_cast %12 : vector<1x16x18x128xbf16> to vector<16x18x128xbf16>
    %c0_8 = arith.constant 0 : index
    %c0_9 = arith.constant 0 : index
    %c0_10 = arith.constant 0 : index
    %c0_11 = arith.constant 0 : index
    %14 = vector.load %arg4[%c0_8, %c0_9, %c0_10, %c0_11] : memref<1x1x18x128xbf16, #tpu.memory_space<vmem>>, vector<1x1x18x128xbf16>
    %15 = vector.shape_cast %14 : vector<1x1x18x128xbf16> to vector<1x18x128xbf16>
    %16 = vector.broadcast %7 : bf16 to vector<1x18x128xbf16>
    %17 = arith.mulf %15, %16 : vector<1x18x128xbf16>
    %18 = tpu.concatenate %11, %13, %17 in 0 : vector<1x18x128xbf16>, vector<16x18x128xbf16>, vector<1x18x128xbf16> -> vector<18x18x128xbf16>
    %19 = vector.extract_strided_slice %18 {offsets = [0, 0, 0], sizes = [18, 16, 128], strides = [1, 1, 1]} : vector<18x18x128xbf16> to vector<18x16x128xbf16>
    %20 = vector.extract_strided_slice %18 {offsets = [0, 1, 0], sizes = [18, 16, 128], strides = [1, 1, 1]} : vector<18x18x128xbf16> to vector<18x16x128xbf16>
    %21 = vector.extract_strided_slice %18 {offsets = [0, 2, 0], sizes = [18, 16, 128], strides = [1, 1, 1]} : vector<18x18x128xbf16> to vector<18x16x128xbf16>
    %22 = tpu.concatenate %19, %20, %21 in 2 : vector<18x16x128xbf16>, vector<18x16x128xbf16>, vector<18x16x128xbf16> -> vector<18x16x384xbf16>
    %23 = vector.extract_strided_slice %22 {offsets = [0, 0, 0], sizes = [16, 16, 384], strides = [1, 1, 1]} : vector<18x16x384xbf16> to vector<16x16x384xbf16>
    %24 = vector.shape_cast %23 : vector<16x16x384xbf16> to vector<256x384xbf16>
    %c0_12 = arith.constant 0 : index
    %c0_13 = arith.constant 0 : index
    %c0_14 = arith.constant 0 : index
    %25 = vector.load %arg5[%c0_12, %c0_13, %c0_14] : memref<3x384x128xbf16, #tpu.memory_space<vmem>>, vector<1x384x128xbf16>
    %26 = vector.shape_cast %25 : vector<1x384x128xbf16> to vector<384x128xbf16>
    %cst = arith.constant dense<0.000000e+00> : vector<256x128xf32>
    %27 = tpu.matmul %24, %26, %cst {dimension_numbers = #tpu.dot_dimension_numbers<[1], [0], [0], [1], [0, 0, 1, 1], [], []>} : vector<256x384xbf16>, vector<384x128xbf16>, vector<256x128xf32> -> vector<256x128xf32>
    %28 = vector.extract_strided_slice %22 {offsets = [1, 0, 0], sizes = [16, 16, 384], strides = [1, 1, 1]} : vector<18x16x384xbf16> to vector<16x16x384xbf16>
    %29 = vector.shape_cast %28 : vector<16x16x384xbf16> to vector<256x384xbf16>
    %c1 = arith.constant 1 : index
    %c0_15 = arith.constant 0 : index
    %c0_16 = arith.constant 0 : index
    %30 = vector.load %arg5[%c1, %c0_15, %c0_16] : memref<3x384x128xbf16, #tpu.memory_space<vmem>>, vector<1x384x128xbf16>
    %31 = vector.shape_cast %30 : vector<1x384x128xbf16> to vector<384x128xbf16>
    %cst_17 = arith.constant dense<0.000000e+00> : vector<256x128xf32>
    %32 = tpu.matmul %29, %31, %cst_17 {dimension_numbers = #tpu.dot_dimension_numbers<[1], [0], [0], [1], [0, 0, 1, 1], [], []>} : vector<256x384xbf16>, vector<384x128xbf16>, vector<256x128xf32> -> vector<256x128xf32>
    %33 = arith.addf %27, %32 : vector<256x128xf32>
    %34 = vector.extract_strided_slice %22 {offsets = [2, 0, 0], sizes = [16, 16, 384], strides = [1, 1, 1]} : vector<18x16x384xbf16> to vector<16x16x384xbf16>
    %35 = vector.shape_cast %34 : vector<16x16x384xbf16> to vector<256x384xbf16>
    %c2 = arith.constant 2 : index
    %c0_18 = arith.constant 0 : index
    %c0_19 = arith.constant 0 : index
    %36 = vector.load %arg5[%c2, %c0_18, %c0_19] : memref<3x384x128xbf16, #tpu.memory_space<vmem>>, vector<1x384x128xbf16>
    %37 = vector.shape_cast %36 : vector<1x384x128xbf16> to vector<384x128xbf16>
    %cst_20 = arith.constant dense<0.000000e+00> : vector<256x128xf32>
    %38 = tpu.matmul %35, %37, %cst_20 {dimension_numbers = #tpu.dot_dimension_numbers<[1], [0], [0], [1], [0, 0, 1, 1], [], []>} : vector<256x384xbf16>, vector<384x128xbf16>, vector<256x128xf32> -> vector<256x128xf32>
    %39 = arith.addf %33, %38 : vector<256x128xf32>
    %c0_21 = arith.constant 0 : index
    %c0_22 = arith.constant 0 : index
    %40 = vector.load %arg6[%c0_21, %c0_22] : memref<1x128xf32, #tpu.memory_space<vmem>>, vector<1x128xf32>
    %41 = vector.broadcast %40 : vector<1x128xf32> to vector<256x128xf32>
    %42 = arith.addf %39, %41 : vector<256x128xf32>
    %cst_23 = arith.constant 0.000000e+00 : f32
    %43 = vector.broadcast %cst_23 : f32 to vector<256x128xf32>
    %44 = arith.maximumf %42, %43 : vector<256x128xf32>
    %45 = vector.shape_cast %44 : vector<256x128xf32> to vector<16x8x2x128xf32>
    %46 = vector.extract_strided_slice %45 {offsets = [0, 0, 0, 0], sizes = [16, 8, 1, 128], strides = [1, 1, 1, 1]} : vector<16x8x2x128xf32> to vector<16x8x1x128xf32>
    %47 = vector.shape_cast %46 : vector<16x8x1x128xf32> to vector<16x8x128xf32>
    %48 = vector.extract_strided_slice %45 {offsets = [0, 0, 1, 0], sizes = [16, 8, 1, 128], strides = [1, 1, 1, 1]} : vector<16x8x2x128xf32> to vector<16x8x1x128xf32>
    %49 = vector.shape_cast %48 : vector<16x8x1x128xf32> to vector<16x8x128xf32>
    %50 = arith.addf %47, %49 : vector<16x8x128xf32>
    %51 = vector.shape_cast %50 : vector<16x8x128xf32> to vector<8x2x8x128xf32>
    %52 = vector.extract_strided_slice %51 {offsets = [0, 0, 0, 0], sizes = [8, 1, 8, 128], strides = [1, 1, 1, 1]} : vector<8x2x8x128xf32> to vector<8x1x8x128xf32>
    %53 = vector.shape_cast %52 : vector<8x1x8x128xf32> to vector<8x8x128xf32>
    %54 = vector.extract_strided_slice %51 {offsets = [0, 1, 0, 0], sizes = [8, 1, 8, 128], strides = [1, 1, 1, 1]} : vector<8x2x8x128xf32> to vector<8x1x8x128xf32>
    %55 = vector.shape_cast %54 : vector<8x1x8x128xf32> to vector<8x8x128xf32>
    %56 = arith.addf %53, %55 : vector<8x8x128xf32>
    %57 = vector.shape_cast %56 : vector<8x8x128xf32> to vector<64x128xf32>
    %58 = arith.truncf %57 : vector<64x128xf32> to vector<64x128xbf16>
    %c0_24 = arith.constant 0 : index
    %c0_25 = arith.constant 0 : index
    %c0_26 = arith.constant 0 : index
    %59 = vector.load %arg7[%c0_24, %c0_25, %c0_26] : memref<1x64x128xbf16, #tpu.memory_space<vmem>>, vector<1x64x128xbf16>
    %60 = vector.shape_cast %59 : vector<1x64x128xbf16> to vector<64x128xbf16>
    %61 = vector.shape_cast %58 : vector<64x128xbf16> to vector<1x64x128xbf16>
    tpu.vector_store %arg7[%c0_24, %c0_25, %c0_26], %61 {strides = array<i32>} : memref<1x64x128xbf16, #tpu.memory_space<vmem>>, vector<1x64x128xbf16>,
    return
  }
  func.func @transform_0(%arg0: i32, %arg1: i32) -> (i32, i32, i32, i32) {
    %c0_i32 = arith.constant 0 : i32
    %c0_i32_0 = arith.constant 0 : i32
    %c0_i32_1 = arith.constant 0 : i32
    return %arg0, %arg1, %c0_i32, %c0_i32_0 : i32, i32, i32, i32
  }
  func.func @transform_1(%arg0: i32, %arg1: i32) -> (i32, i32, i32, i32) {
    %c16_i32 = arith.constant 16 : i32
    %0 = arith.muli %arg1, %c16_i32 : i32
    %c1_i32 = arith.constant 1 : i32
    %1 = arith.subi %0, %c1_i32 : i32
    %c0_i32 = arith.constant 0 : i32
    %2 = arith.maxsi %1, %c0_i32 : i32
    %c0_i32_0 = arith.constant 0 : i32
    %c0_i32_1 = arith.constant 0 : i32
    %c0_i32_2 = arith.constant 0 : i32
    return %arg0, %2, %c0_i32_0, %c0_i32_1 : i32, i32, i32, i32
  }
  func.func @transform_2(%arg0: i32, %arg1: i32) -> (i32, i32, i32, i32) {
    %c1_i32 = arith.constant 1 : i32
    %0 = arith.addi %arg1, %c1_i32 : i32
    %c16_i32 = arith.constant 16 : i32
    %1 = arith.muli %0, %c16_i32 : i32
    %c15_i32 = arith.constant 15 : i32
    %2 = arith.minsi %1, %c15_i32 : i32
    %c0_i32 = arith.constant 0 : i32
    %c0_i32_0 = arith.constant 0 : i32
    %c0_i32_1 = arith.constant 0 : i32
    return %arg0, %2, %c0_i32, %c0_i32_0 : i32, i32, i32, i32
  }
  func.func @transform_3(%arg0: i32, %arg1: i32) -> (i32, i32, i32) {
    %c0_i32 = arith.constant 0 : i32
    %c0_i32_0 = arith.constant 0 : i32
    %c0_i32_1 = arith.constant 0 : i32
    %c0_i32_2 = arith.constant 0 : i32
    return %c0_i32, %c0_i32_0, %c0_i32_1 : i32, i32, i32
  }
  func.func @transform_4(%arg0: i32, %arg1: i32) -> (i32, i32) {
    %c0_i32 = arith.constant 0 : i32
    %c0_i32_0 = arith.constant 0 : i32
    %c0_i32_1 = arith.constant 0 : i32
    return %c0_i32, %c0_i32_0 : i32, i32
  }
  func.func @transform_5(%arg0: i32, %arg1: i32) -> (i32, i32, i32) {
    %c0_i32 = arith.constant 0 : i32
    %c0_i32_0 = arith.constant 0 : i32
    return %arg0, %arg1, %c0_i32 : i32, i32, i32
  }
}

module attributes {stable_mosaic.version = 11 : i64} {
  func.func @_mm2_bias_relu_kernel(%arg0: i32, %arg1: i32, %arg2: memref<128x128xbf16, #tpu.memory_space<vmem>>, %arg3: memref<128x128xbf16, #tpu.memory_space<vmem>>, %arg4: memref<128x128xbf16, #tpu.memory_space<vmem>>, %arg5: memref<128x128xbf16, #tpu.memory_space<vmem>>, %arg6: memref<1x128xf32, #tpu.memory_space<vmem>>, %arg7: memref<128x128xbf16, #tpu.memory_space<vmem>>) attributes {dimension_semantics = [#tpu.dimension_semantics<parallel>, #tpu.dimension_semantics<parallel>], iteration_bounds = array<i64: 1, 1>, scalar_prefetch = 0 : i64, scratch_operands = 0 : i64, tpu.core_type = #tpu.core_type<tc>, window_params = [{pipeline_mode = #tpu.pipeline_mode<synchronous>, transform_indices = @transform_0, window_bounds = array<i64: 128, 128>}, {pipeline_mode = #tpu.pipeline_mode<synchronous>, transform_indices = @transform_1, window_bounds = array<i64: 128, 128>}, {pipeline_mode = #tpu.pipeline_mode<synchronous>, transform_indices = @transform_2, window_bounds = array<i64: 128, 128>}, {pipeline_mode = #tpu.pipeline_mode<synchronous>, transform_indices = @transform_3, window_bounds = array<i64: 128, 128>}, {pipeline_mode = #tpu.pipeline_mode<synchronous>, transform_indices = @transform_4, window_bounds = array<i64: 1, 128>}, {transform_indices = @transform_5, window_bounds = array<i64: 128, 128>}]} {
    %c0 = arith.constant 0 : index
    %c0_0 = arith.constant 0 : index
    %0 = vector.load %arg2[%c0, %c0_0] : memref<128x128xbf16, #tpu.memory_space<vmem>>, vector<128x128xbf16>
    %c0_1 = arith.constant 0 : index
    %c0_2 = arith.constant 0 : index
    %1 = vector.load %arg4[%c0_1, %c0_2] : memref<128x128xbf16, #tpu.memory_space<vmem>>, vector<128x128xbf16>
    %cst = arith.constant dense<0.000000e+00> : vector<128x128xf32>
    %2 = tpu.matmul %0, %1, %cst {dimension_numbers = #tpu.dot_dimension_numbers<[1], [0], [0], [1], [0, 0, 1, 1], [], []>} : vector<128x128xbf16>, vector<128x128xbf16>, vector<128x128xf32> -> vector<128x128xf32>
    %c0_3 = arith.constant 0 : index
    %c0_4 = arith.constant 0 : index
    %3 = vector.load %arg3[%c0_3, %c0_4] : memref<128x128xbf16, #tpu.memory_space<vmem>>, vector<128x128xbf16>
    %c0_5 = arith.constant 0 : index
    %c0_6 = arith.constant 0 : index
    %4 = vector.load %arg5[%c0_5, %c0_6] : memref<128x128xbf16, #tpu.memory_space<vmem>>, vector<128x128xbf16>
    %cst_7 = arith.constant dense<0.000000e+00> : vector<128x128xf32>
    %5 = tpu.matmul %3, %4, %cst_7 {dimension_numbers = #tpu.dot_dimension_numbers<[1], [0], [0], [1], [0, 0, 1, 1], [], []>} : vector<128x128xbf16>, vector<128x128xbf16>, vector<128x128xf32> -> vector<128x128xf32>
    %6 = arith.addf %2, %5 : vector<128x128xf32>
    %c0_8 = arith.constant 0 : index
    %c0_9 = arith.constant 0 : index
    %7 = vector.load %arg6[%c0_8, %c0_9] : memref<1x128xf32, #tpu.memory_space<vmem>>, vector<1x128xf32>
    %8 = vector.broadcast %7 : vector<1x128xf32> to vector<128x128xf32>
    %9 = arith.addf %6, %8 : vector<128x128xf32>
    %cst_10 = arith.constant 0.000000e+00 : f32
    %10 = vector.broadcast %cst_10 : f32 to vector<128x128xf32>
    %11 = arith.maximumf %9, %10 : vector<128x128xf32>
    %12 = arith.truncf %11 : vector<128x128xf32> to vector<128x128xbf16>
    %c0_11 = arith.constant 0 : index
    %c0_12 = arith.constant 0 : index
    %13 = vector.load %arg7[%c0_11, %c0_12] : memref<128x128xbf16, #tpu.memory_space<vmem>>, vector<128x128xbf16>
    tpu.vector_store %arg7[%c0_11, %c0_12], %12 {strides = array<i32>} : memref<128x128xbf16, #tpu.memory_space<vmem>>, vector<128x128xbf16>,
    return
  }
  func.func @transform_0(%arg0: i32, %arg1: i32) -> (i32, i32) {
    %c0_i32 = arith.constant 0 : i32
    %c0_i32_0 = arith.constant 0 : i32
    return %arg0, %c0_i32 : i32, i32
  }
  func.func @transform_1(%arg0: i32, %arg1: i32) -> (i32, i32) {
    %c0_i32 = arith.constant 0 : i32
    %c0_i32_0 = arith.constant 0 : i32
    return %arg0, %c0_i32 : i32, i32
  }
  func.func @transform_2(%arg0: i32, %arg1: i32) -> (i32, i32) {
    %c0_i32 = arith.constant 0 : i32
    %c0_i32_0 = arith.constant 0 : i32
    return %c0_i32, %arg1 : i32, i32
  }
  func.func @transform_3(%arg0: i32, %arg1: i32) -> (i32, i32) {
    %c0_i32 = arith.constant 0 : i32
    %c0_i32_0 = arith.constant 0 : i32
    return %c0_i32, %arg1 : i32, i32
  }
  func.func @transform_4(%arg0: i32, %arg1: i32) -> (i32, i32) {
    %c0_i32 = arith.constant 0 : i32
    %c0_i32_0 = arith.constant 0 : i32
    return %c0_i32, %arg1 : i32, i32
  }
  func.func @transform_5(%arg0: i32, %arg1: i32) -> (i32, i32) {
    %c0_i32 = arith.constant 0 : i32
    return %arg0, %arg1 : i32, i32
  }
}

</mosaic_0001>

<llo_original>
// kernel: bottleneck_forward.3
$region0: #{bottleneck_forward.3}
  #allocation0 [shape = 'u32[]', space=smem, size = 0x4, offset = 0x4, fixed_abs, tag = 'smem constant byte address 0x4 - core index']
  #allocation1 [shape = 'u32[72,128]{1,0:T(1,128)}', space=vmem, size = 0x9000, scoped, tag = 'internal scratch']
  %s0 = inlined_call_operand.vmem [shape: bf16[512,128], index: 0, kind: input, shape index: {}]
  %s1 = inlined_call_operand.vmem [shape: bf16[128,128], index: 1, kind: input, shape index: {}]
  %s2 = inlined_call_operand.vmem [shape: f32[1,128], index: 2, kind: input, shape index: {}]
  %s3 = inlined_call_operand.vmem [shape: bf16[512,128], index: 3, kind: output, shape index: {}]
  %s4 = sld [smem:[#allocation0]]
  $region22: #{bottleneck_forward.3} parent=0
    _
  %s6 = ssub.s32 1, %s4
  %s7 = scalar_select 0, %s6, %s4
  // Predicated region
  $region2: #{bottleneck_forward.3} parent=0 // pred_check
    _
  $region3: #{bottleneck_forward.3} parent=0 // pred_check_branch
    %9 = sbr.rel (0) target = $region5
  $region4: #{bottleneck_forward.3} parent=0 // pred_region
    _
  $region5: #{bottleneck_forward.3} parent=0 // pred_fallthru
    _
  // Predicated region
  $region6: #{bottleneck_forward.3} parent=0 // pred_check
    _
  $region7: #{bottleneck_forward.3} parent=0 // pred_check_branch
    %11 = sbr.rel (0) target = $region9
  $region8: #{bottleneck_forward.3} parent=0 // pred_region
    _
  $region9: #{bottleneck_forward.3} parent=0 // pred_fallthru
    _
  // Predicated region
  $region10: #{bottleneck_forward.3} parent=0 // pred_check
    _
  $region11: #{bottleneck_forward.3} parent=0 // pred_check_branch
    %13 = sbr.rel (0) target = $region13
  $region12: #{bottleneck_forward.3} parent=0 // pred_region
    _
  $region13: #{bottleneck_forward.3} parent=0 // pred_fallthru
    _
  %v14 = vld [vmem:[%s0] sm:$0xf]
  %v15 = vld [vmem:[%s0 + $0x4] sm:$0xf]
  %v16 = vld [vmem:[%s0 + $0x8] sm:$0xf]
  %v17 = vld [vmem:[%s0 + $0xc] sm:$0xf]
  %v18 = vld [vmem:[%s0 + $0x10] sm:$0xf]
  %v19 = vld [vmem:[%s0 + $0x14] sm:$0xf]
  %v20 = vld [vmem:[%s0 + $0x18] sm:$0xf]
  %v21 = vld [vmem:[%s0 + $0x1c] sm:$0xf]
  %v22 = vld [vmem:[%s0 + $0x20] sm:$0xf]
  %v23 = vld [vmem:[%s0 + $0x24] sm:$0xf]
  %v24 = vld [vmem:[%s0 + $0x28] sm:$0xf]
  %v25 = vld [vmem:[%s0 + $0x2c] sm:$0xf]
  %v26 = vld [vmem:[%s0 + $0x30] sm:$0xf]
  %v27 = vld [vmem:[%s0 + $0x34] sm:$0xf]
  %v28 = vld [vmem:[%s0 + $0x38] sm:$0xf]
  %v29 = vld [vmem:[%s0 + $0x3c] sm:$0xf]
  %v30 = vld [vmem:[%s0 + $0x40] sm:$0xf]
  %v31 = vld [vmem:[%s0 + $0x44] sm:$0xf]
  %v32 = vld [vmem:[%s0 + $0x48] sm:$0xf]
  %v33 = vld [vmem:[%s0 + $0x4c] sm:$0xf]
  %v34 = vld [vmem:[%s0 + $0x50] sm:$0xf]
  %v35 = vld [vmem:[%s0 + $0x54] sm:$0xf]
  %v36 = vld [vmem:[%s0 + $0x58] sm:$0xf]
  %v37 = vld [vmem:[%s0 + $0x5c] sm:$0xf]
  %v38 = vld [vmem:[%s0 + $0x60] sm:$0xf]
  %v39 = vld [vmem:[%s0 + $0x64] sm:$0xf]
  %v40 = vld [vmem:[%s0 + $0x68] sm:$0xf]
  %v41 = vld [vmem:[%s0 + $0x6c] sm:$0xf]
  %v42 = vld [vmem:[%s0 + $0x70] sm:$0xf]
  %v43 = vld [vmem:[%s0 + $0x74] sm:$0xf]
  %v44 = vld [vmem:[%s0 + $0x78] sm:$0xf]
  %v45 = vld [vmem:[%s0 + $0x7c] sm:$0xf]
  %v46 = vld [vmem:[%s0 + $0x80] sm:$0xf]
  %v47 = vld [vmem:[%s0 + $0x84] sm:$0xf]
  %v48 = vld [vmem:[%s0 + $0x88] sm:$0xf]
  %v49 = vld [vmem:[%s0 + $0x8c] sm:$0xf]
  %v50 = vld [vmem:[%s0 + $0x90] sm:$0xf]
  %v51 = vld [vmem:[%s0 + $0x94] sm:$0xf]
  %v52 = vld [vmem:[%s0 + $0x98] sm:$0xf]
  %v53 = vld [vmem:[%s0 + $0x9c] sm:$0xf]
  %v54 = vld [vmem:[%s0 + $0xa0] sm:$0xf]
  %v55 = vld [vmem:[%s0 + $0xa4] sm:$0xf]
  %v56 = vld [vmem:[%s0 + $0xa8] sm:$0xf]
  %v57 = vld [vmem:[%s0 + $0xac] sm:$0xf]
  %v58 = vld [vmem:[%s0 + $0xb0] sm:$0xf]
  %v59 = vld [vmem:[%s0 + $0xb4] sm:$0xf]
  %v60 = vld [vmem:[%s0 + $0xb8] sm:$0xf]
  %v61 = vld [vmem:[%s0 + $0xbc] sm:$0xf]
  %v62 = vld [vmem:[%s0 + $0xc0] sm:$0xf]
  %v63 = vld [vmem:[%s0 + $0xc4] sm:$0xf]
  %v64 = vld [vmem:[%s0 + $0xc8] sm:$0xf]
  %v65 = vld [vmem:[%s0 + $0xcc] sm:$0xf]
  %v66 = vld [vmem:[%s0 + $0xd0] sm:$0xf]
  %v67 = vld [vmem:[%s0 + $0xd4] sm:$0xf]
  %v68 = vld [vmem:[%s0 + $0xd8] sm:$0xf]
  %v69 = vld [vmem:[%s0 + $0xdc] sm:$0xf]
  %v70 = vld [vmem:[%s0 + $0xe0] sm:$0xf]
  %v71 = vld [vmem:[%s0 + $0xe4] sm:$0xf]
  %v72 = vld [vmem:[%s0 + $0xe8] sm:$0xf]
  %v73 = vld [vmem:[%s0 + $0xec] sm:$0xf]
  %v74 = vld [vmem:[%s0 + $0xf0] sm:$0xf]
  %v75 = vld [vmem:[%s0 + $0xf4] sm:$0xf]
  %v76 = vld [vmem:[%s0 + $0xf8] sm:$0xf]
  %v77 = vld [vmem:[%s0 + $0xfc] sm:$0xf]
  %v78 = vld [vmem:[%s1] sm:$0xf]
  %v79 = vld [vmem:[%s1 + $0x4] sm:$0xf]
  %v80 = vld [vmem:[%s1 + $0x8] sm:$0xf]
  %v81 = vld [vmem:[%s1 + $0xc] sm:$0xf]
  %v82 = vld [vmem:[%s1 + $0x10] sm:$0xf]
  %v83 = vld [vmem:[%s1 + $0x14] sm:$0xf]
  %v84 = vld [vmem:[%s1 + $0x18] sm:$0xf]
  %v85 = vld [vmem:[%s1 + $0x1c] sm:$0xf]
  %v86 = vld [vmem:[%s1 + $0x20] sm:$0xf]
  %v87 = vld [vmem:[%s1 + $0x24] sm:$0xf]
  %v88 = vld [vmem:[%s1 + $0x28] sm:$0xf]
  %v89 = vld [vmem:[%s1 + $0x2c] sm:$0xf]
  %v90 = vld [vmem:[%s1 + $0x30] sm:$0xf]
  %v91 = vld [vmem:[%s1 + $0x34] sm:$0xf]
  %v92 = vld [vmem:[%s1 + $0x38] sm:$0xf]
  %v93 = vld [vmem:[%s1 + $0x3c] sm:$0xf]
  %v94 = vld [vmem:[%s2] sm:$0x1]
  %v96 = vperm.slane %v94, 0
  %v162 = vunpack.c.l.b16 %v14
  %v163 = vunpack.c.l.b16 %v15
  %v164 = vunpack.c.l.b16 %v16
  %v165 = vunpack.c.l.b16 %v17
  %v166 = vunpack.c.l.b16 %v18
  %v167 = vunpack.c.l.b16 %v19
  %v168 = vunpack.c.l.b16 %v20
  %v169 = vunpack.c.l.b16 %v21
  %v170 = vunpack.c.l.b16 %v22
  %v171 = vunpack.c.l.b16 %v23
  %v172 = vunpack.c.l.b16 %v24
  %v173 = vunpack.c.l.b16 %v25
  %v174 = vunpack.c.l.b16 %v26
  %v175 = vunpack.c.l.b16 %v27
  %v176 = vunpack.c.l.b16 %v28
  %v177 = vunpack.c.l.b16 %v29
  %v178 = vunpack.c.l.b16 %v30
  %v179 = vunpack.c.l.b16 %v31
  %v180 = vunpack.c.l.b16 %v32
  %v181 = vunpack.c.l.b16 %v33
  %v182 = vunpack.c.l.b16 %v34
  %v183 = vunpack.c.l.b16 %v35
  %v184 = vunpack.c.l.b16 %v36
  %v185 = vunpack.c.l.b16 %v37
  %v186 = vunpack.c.l.b16 %v38
  %v187 = vunpack.c.l.b16 %v39
  %v188 = vunpack.c.l.b16 %v40
  %v189 = vunpack.c.l.b16 %v41
  %v190 = vunpack.c.l.b16 %v42
  %v191 = vunpack.c.l.b16 %v43
  %v192 = vunpack.c.l.b16 %v44
  %v193 = vunpack.c.l.b16 %v45
  %v194 = vunpack.c.l.b16 %v46
  %v195 = vunpack.c.l.b16 %v47
  %v196 = vunpack.c.l.b16 %v48
  %v197 = vunpack.c.l.b16 %v49
  %v198 = vunpack.c.l.b16 %v50
  %v199 = vunpack.c.l.b16 %v51
  %v200 = vunpack.c.l.b16 %v52
  %v201 = vunpack.c.l.b16 %v53
  %v202 = vunpack.c.l.b16 %v54
  %v203 = vunpack.c.l.b16 %v55
  %v204 = vunpack.c.l.b16 %v56
  %v205 = vunpack.c.l.b16 %v57
  %v206 = vunpack.c.l.b16 %v58
  %v207 = vunpack.c.l.b16 %v59
  %v208 = vunpack.c.l.b16 %v60
  %v209 = vunpack.c.l.b16 %v61
  %v210 = vunpack.c.l.b16 %v62
  %v211 = vunpack.c.l.b16 %v63
  %v212 = vunpack.c.l.b16 %v64
  %v213 = vunpack.c.l.b16 %v65
  %v214 = vunpack.c.l.b16 %v66
  %v215 = vunpack.c.l.b16 %v67
  %v216 = vunpack.c.l.b16 %v68
  %v217 = vunpack.c.l.b16 %v69
  %v218 = vunpack.c.l.b16 %v70
  %v219 = vunpack.c.l.b16 %v71
  %v220 = vunpack.c.l.b16 %v72
  %v221 = vunpack.c.l.b16 %v73
  %v222 = vunpack.c.l.b16 %v74
  %v223 = vunpack.c.l.b16 %v75
  %v224 = vunpack.c.l.b16 %v76
  %v225 = vunpack.c.l.b16 %v77
  %v226 = vpack.c.b16 %v163, %v162
  %v227 = vpack.c.b16 %v165, %v164
  %v228 = vpack.c.b16 %v167, %v166
  %v229 = vpack.c.b16 %v169, %v168
  %v230 = vpack.c.b16 %v171, %v170
  %v231 = vpack.c.b16 %v173, %v172
  %v232 = vpack.c.b16 %v175, %v174
  %v233 = vpack.c.b16 %v177, %v176
  %v234 = vpack.c.b16 %v179, %v178
  %v235 = vpack.c.b16 %v181, %v180
  %v236 = vpack.c.b16 %v183, %v182
  %v237 = vpack.c.b16 %v185, %v184
  %v238 = vpack.c.b16 %v187, %v186
  %v239 = vpack.c.b16 %v189, %v188
  %v240 = vpack.c.b16 %v191, %v190
  %v241 = vpack.c.b16 %v193, %v192
  %v242 = vpack.c.b16 %v195, %v194
  %v243 = vpack.c.b16 %v197, %v196
  %v244 = vpack.c.b16 %v199, %v198
  %v245 = vpack.c.b16 %v201, %v200
  %v246 = vpack.c.b16 %v203, %v202
  %v247 = vpack.c.b16 %v205, %v204
  %v248 = vpack.c.b16 %v207, %v206
  %v249 = vpack.c.b16 %v209, %v208
  %v250 = vpack.c.b16 %v211, %v210
  %v251 = vpack.c.b16 %v213, %v212
  %v252 = vpack.c.b16 %v215, %v214
  %v253 = vpack.c.b16 %v217, %v216
  %v254 = vpack.c.b16 %v219, %v218
  %v255 = vpack.c.b16 %v221, %v220
  %v256 = vpack.c.b16 %v223, %v222
  %v257 = vpack.c.b16 %v225, %v224
  %v306 = vunpack.c.l.b16 %v78
  %v307 = vunpack.c.l.b16 %v79
  %v308 = vunpack.c.l.b16 %v80
  %v309 = vunpack.c.l.b16 %v81
  %v310 = vunpack.c.l.b16 %v82
  %v311 = vunpack.c.l.b16 %v83
  %v312 = vunpack.c.l.b16 %v84
  %v313 = vunpack.c.l.b16 %v85
  %v314 = vunpack.c.l.b16 %v86
  %v315 = vunpack.c.l.b16 %v87
  %v316 = vunpack.c.l.b16 %v88
  %v317 = vunpack.c.l.b16 %v89
  %v318 = vunpack.c.l.b16 %v90
  %v319 = vunpack.c.l.b16 %v91
  %v320 = vunpack.c.l.b16 %v92
  %v321 = vunpack.c.l.b16 %v93
  %v322 = vpack.c.b16 %v307, %v306
  %v323 = vpack.c.b16 %v309, %v308
  %v324 = vpack.c.b16 %v311, %v310
  %v325 = vpack.c.b16 %v313, %v312
  %v326 = vpack.c.b16 %v315, %v314
  %v327 = vpack.c.b16 %v317, %v316
  %v328 = vpack.c.b16 %v319, %v318
  %v329 = vpack.c.b16 %v321, %v320
  %338 = vmatpush.bf16.msra.mxu0 %v329
  %339 = vmatpush.bf16.msra.mxu0 %v328
  %340 = vmatpush.bf16.msra.mxu0 %v327
  %341 = vmatpush.bf16.msra.mxu0 %v326
  %342 = vmatpush.bf16.msra.mxu0 %v325
  %343 = vmatpush.bf16.msra.mxu0 %v324
  %344 = vmatpush.bf16.msra.mxu0 %v323
  %345 = vmatpush.bf16.msra.mxu0 %v322
  %346 = vmatmul.bf16.gmra.mxu0 %v226
  %v347 = vpop.f32.mrf.mxu0
  %v348 = vadd.f32 %v96, %v347
  %v349 = vpop.f32.mrf.mxu0
  %v350 = vadd.f32 %v96, %v349
  %351 = vmatmul.bf16.gmra.mxu0 %v227
  %v352 = vpop.f32.mrf.mxu0
  %v353 = vadd.f32 %v96, %v352
  %v354 = vpop.f32.mrf.mxu0
  %v355 = vadd.f32 %v96, %v354
  %356 = vmatmul.bf16.gmra.mxu0 %v228
  %v357 = vpop.f32.mrf.mxu0
  %v358 = vadd.f32 %v96, %v357
  %v359 = vpop.f32.mrf.mxu0
  %v360 = vadd.f32 %v96, %v359
  %361 = vmatmul.bf16.gmra.mxu0 %v229
  %v362 = vpop.f32.mrf.mxu0
  %v363 = vadd.f32 %v96, %v362
  %v364 = vpop.f32.mrf.mxu0
  %v365 = vadd.f32 %v96, %v364
  %366 = vmatmul.bf16.gmra.mxu0 %v230
  %v367 = vpop.f32.mrf.mxu0
  %v368 = vadd.f32 %v96, %v367
  %v369 = vpop.f32.mrf.mxu0
  %v370 = vadd.f32 %v96, %v369
  %371 = vmatmul.bf16.gmra.mxu0 %v231
  %v372 = vpop.f32.mrf.mxu0
  %v373 = vadd.f32 %v96, %v372
  %v374 = vpop.f32.mrf.mxu0
  %v375 = vadd.f32 %v96, %v374
  %376 = vmatmul.bf16.gmra.mxu0 %v232
  %v377 = vpop.f32.mrf.mxu0
  %v378 = vadd.f32 %v96, %v377
  %v379 = vpop.f32.mrf.mxu0
  %v380 = vadd.f32 %v96, %v379
  %381 = vmatmul.bf16.gmra.mxu0 %v233
  %v382 = vpop.f32.mrf.mxu0
  %v383 = vadd.f32 %v96, %v382
  %v384 = vpop.f32.mrf.mxu0
  %v385 = vadd.f32 %v96, %v384
  %386 = vmatmul.bf16.gmra.mxu0 %v234
  %v387 = vpop.f32.mrf.mxu0
  %v388 = vadd.f32 %v96, %v387
  %v389 = vpop.f32.mrf.mxu0
  %v390 = vadd.f32 %v96, %v389
  %391 = vmatmul.bf16.gmra.mxu0 %v235
  %v392 = vpop.f32.mrf.mxu0
  %v393 = vadd.f32 %v96, %v392
  %v394 = vpop.f32.mrf.mxu0
  %v395 = vadd.f32 %v96, %v394
  %396 = vmatmul.bf16.gmra.mxu0 %v236
  %v397 = vpop.f32.mrf.mxu0
  %v398 = vadd.f32 %v96, %v397
  %v399 = vpop.f32.mrf.mxu0
  %v400 = vadd.f32 %v96, %v399
  %401 = vmatmul.bf16.gmra.mxu0 %v237
  %v402 = vpop.f32.mrf.mxu0
  %v403 = vadd.f32 %v96, %v402
  %v404 = vpop.f32.mrf.mxu0
  %v405 = vadd.f32 %v96, %v404
  %406 = vmatmul.bf16.gmra.mxu0 %v238
  %v407 = vpop.f32.mrf.mxu0
  %v408 = vadd.f32 %v96, %v407
  %v409 = vpop.f32.mrf.mxu0
  %v410 = vadd.f32 %v96, %v409
  %411 = vmatmul.bf16.gmra.mxu0 %v239
  %v412 = vpop.f32.mrf.mxu0
  %v413 = vadd.f32 %v96, %v412
  %v414 = vpop.f32.mrf.mxu0
  %v415 = vadd.f32 %v96, %v414
  %416 = vmatmul.bf16.gmra.mxu0 %v240
  %v417 = vpop.f32.mrf.mxu0
  %v418 = vadd.f32 %v96, %v417
  %v419 = vpop.f32.mrf.mxu0
  %v420 = vadd.f32 %v96, %v419
  %421 = vmatmul.bf16.gmra.mxu0 %v241
  %v422 = vpop.f32.mrf.mxu0
  %v423 = vadd.f32 %v96, %v422
  %v424 = vpop.f32.mrf.mxu0
  %v425 = vadd.f32 %v96, %v424
  %426 = vmatmul.bf16.gmra.mxu0 %v242
  %v427 = vpop.f32.mrf.mxu0
  %v428 = vadd.f32 %v96, %v427
  %v429 = vpop.f32.mrf.mxu0
  %v430 = vadd.f32 %v96, %v429
  %431 = vmatmul.bf16.gmra.mxu0 %v243
  %v432 = vpop.f32.mrf.mxu0
  %v433 = vadd.f32 %v96, %v432
  %v434 = vpop.f32.mrf.mxu0
  %v435 = vadd.f32 %v96, %v434
  %436 = vmatmul.bf16.gmra.mxu0 %v244
  %v437 = vpop.f32.mrf.mxu0
  %v438 = vadd.f32 %v96, %v437
  %v439 = vpop.f32.mrf.mxu0
  %v440 = vadd.f32 %v96, %v439
  %441 = vmatmul.bf16.gmra.mxu0 %v245
  %v442 = vpop.f32.mrf.mxu0
  %v443 = vadd.f32 %v96, %v442
  %v444 = vpop.f32.mrf.mxu0
  %v445 = vadd.f32 %v96, %v444
  %446 = vmatmul.bf16.gmra.mxu0 %v246
  %v447 = vpop.f32.mrf.mxu0
  %v448 = vadd.f32 %v96, %v447
  %v449 = vpop.f32.mrf.mxu0
  %v450 = vadd.f32 %v96, %v449
  %451 = vmatmul.bf16.gmra.mxu0 %v247
  %v452 = vpop.f32.mrf.mxu0
  %v453 = vadd.f32 %v96, %v452
  %v454 = vpop.f32.mrf.mxu0
  %v455 = vadd.f32 %v96, %v454
  %456 = vmatmul.bf16.gmra.mxu0 %v248
  %v457 = vpop.f32.mrf.mxu0
  %v458 = vadd.f32 %v96, %v457
  %v459 = vpop.f32.mrf.mxu0
  %v460 = vadd.f32 %v96, %v459
  %461 = vmatmul.bf16.gmra.mxu0 %v249
  %v462 = vpop.f32.mrf.mxu0
  %v463 = vadd.f32 %v96, %v462
  %v464 = vpop.f32.mrf.mxu0
  %v465 = vadd.f32 %v96, %v464
  %466 = vmatmul.bf16.gmra.mxu0 %v250
  %v467 = vpop.f32.mrf.mxu0
  %v468 = vadd.f32 %v96, %v467
  %v469 = vpop.f32.mrf.mxu0
  %v470 = vadd.f32 %v96, %v469
  %471 = vmatmul.bf16.gmra.mxu0 %v251
  %v472 = vpop.f32.mrf.mxu0
  %v473 = vadd.f32 %v96, %v472
  %v474 = vpop.f32.mrf.mxu0
  %v475 = vadd.f32 %v96, %v474
  %476 = vmatmul.bf16.gmra.mxu0 %v252
  %v477 = vpop.f32.mrf.mxu0
  %v478 = vadd.f32 %v96, %v477
  %v479 = vpop.f32.mrf.mxu0
  %v480 = vadd.f32 %v96, %v479
  %481 = vmatmul.bf16.gmra.mxu0 %v253
  %v482 = vpop.f32.mrf.mxu0
  %v483 = vadd.f32 %v96, %v482
  %v484 = vpop.f32.mrf.mxu0
  %v485 = vadd.f32 %v96, %v484
  %486 = vmatmul.bf16.gmra.mxu0 %v254
  %v487 = vpop.f32.mrf.mxu0
  %v488 = vadd.f32 %v96, %v487
  %v489 = vpop.f32.mrf.mxu0
  %v490 = vadd.f32 %v96, %v489
  %491 = vmatmul.bf16.gmra.mxu0 %v255
  %v492 = vpop.f32.mrf.mxu0
  %v493 = vadd.f32 %v96, %v492
  %v494 = vpop.f32.mrf.mxu0
  %v495 = vadd.f32 %v96, %v494
  %496 = vmatmul.bf16.gmra.mxu0 %v256
  %v497 = vpop.f32.mrf.mxu0
  %v498 = vadd.f32 %v96, %v497
  %v499 = vpop.f32.mrf.mxu0
  %v500 = vadd.f32 %v96, %v499
  %501 = vmatmul.bf16.gmra.mxu0 %v257
  %v502 = vpop.f32.mrf.mxu0
  %v503 = vadd.f32 %v96, %v502
  %v504 = vpop.f32.mrf.mxu0
  %v505 = vadd.f32 %v96, %v504
  %506 = vdwg.mxu0
  %v507 = vmax.f32 %v348, 0.0
  %v508 = vmax.f32 %v350, 0.0
  %v509 = vmax.f32 %v353, 0.0
  %v510 = vmax.f32 %v355, 0.0
  %v511 = vmax.f32 %v358, 0.0
  %v512 = vmax.f32 %v360, 0.0
  %v513 = vmax.f32 %v363, 0.0
  %v514 = vmax.f32 %v365, 0.0
  %v515 = vmax.f32 %v368, 0.0
  %v516 = vmax.f32 %v370, 0.0
  %v517 = vmax.f32 %v373, 0.0
  %v518 = vmax.f32 %v375, 0.0
  %v519 = vmax.f32 %v378, 0.0
  %v520 = vmax.f32 %v380, 0.0
  %v521 = vmax.f32 %v383, 0.0
  %v522 = vmax.f32 %v385, 0.0
  %v523 = vmax.f32 %v388, 0.0
  %v524 = vmax.f32 %v390, 0.0
  %v525 = vmax.f32 %v393, 0.0
  %v526 = vmax.f32 %v395, 0.0
  %v527 = vmax.f32 %v398, 0.0
  %v528 = vmax.f32 %v400, 0.0
  %v529 = vmax.f32 %v403, 0.0
  %v530 = vmax.f32 %v405, 0.0
  %v531 = vmax.f32 %v408, 0.0
  %v532 = vmax.f32 %v410, 0.0
  %v533 = vmax.f32 %v413, 0.0
  %v534 = vmax.f32 %v415, 0.0
  %v535 = vmax.f32 %v418, 0.0
  %v536 = vmax.f32 %v420, 0.0
  %v537 = vmax.f32 %v423, 0.0
  %v538 = vmax.f32 %v425, 0.0
  %v539 = vmax.f32 %v428, 0.0
  %v540 = vmax.f32 %v430, 0.0
  %v541 = vmax.f32 %v433, 0.0
  %v542 = vmax.f32 %v435, 0.0
  %v543 = vmax.f32 %v438, 0.0
  %v544 = vmax.f32 %v440, 0.0
  %v545 = vmax.f32 %v443, 0.0
  %v546 = vmax.f32 %v445, 0.0
  %v547 = vmax.f32 %v448, 0.0
  %v548 = vmax.f32 %v450, 0.0
  %v549 = vmax.f32 %v453, 0.0
  %v550 = vmax.f32 %v455, 0.0
  %v551 = vmax.f32 %v458, 0.0
  %v552 = vmax.f32 %v460, 0.0
  %v553 = vmax.f32 %v463, 0.0
  %v554 = vmax.f32 %v465, 0.0
  %v555 = vmax.f32 %v468, 0.0
  %v556 = vmax.f32 %v470, 0.0
  %v557 = vmax.f32 %v473, 0.0
  %v558 = vmax.f32 %v475, 0.0
  %v559 = vmax.f32 %v478, 0.0
  %v560 = vmax.f32 %v480, 0.0
  %v561 = vmax.f32 %v483, 0.0
  %v562 = vmax.f32 %v485, 0.0
  %v563 = vmax.f32 %v488, 0.0
  %v564 = vmax.f32 %v490, 0.0
  %v565 = vmax.f32 %v493, 0.0
  %v566 = vmax.f32 %v495, 0.0
  %v567 = vmax.f32 %v498, 0.0
  %v568 = vmax.f32 %v500, 0.0
  %v569 = vmax.f32 %v503, 0.0
  %v570 = vmax.f32 %v505, 0.0
  %v571 = vpack.c.bf16 %v507, %v507
  %v572 = vpack.c.bf16 %v508, %v508
  %v573 = vpack.c.bf16 %v509, %v509
  %v574 = vpack.c.bf16 %v510, %v510
  %v575 = vpack.c.bf16 %v511, %v511
  %v576 = vpack.c.bf16 %v512, %v512
  %v577 = vpack.c.bf16 %v513, %v513
  %v578 = vpack.c.bf16 %v514, %v514
  %v579 = vpack.c.bf16 %v515, %v515
  %v580 = vpack.c.bf16 %v516, %v516
  %v581 = vpack.c.bf16 %v517, %v517
  %v582 = vpack.c.bf16 %v518, %v518
  %v583 = vpack.c.bf16 %v519, %v519
  %v584 = vpack.c.bf16 %v520, %v520
  %v585 = vpack.c.bf16 %v521, %v521
  %v586 = vpack.c.bf16 %v522, %v522
  %v587 = vpack.c.bf16 %v523, %v523
  %v588 = vpack.c.bf16 %v524, %v524
  %v589 = vpack.c.bf16 %v525, %v525
  %v590 = vpack.c.bf16 %v526, %v526
  %v591 = vpack.c.bf16 %v527, %v527
  %v592 = vpack.c.bf16 %v528, %v528
  %v593 = vpack.c.bf16 %v529, %v529
  %v594 = vpack.c.bf16 %v530, %v530
  %v595 = vpack.c.bf16 %v531, %v531
  %v596 = vpack.c.bf16 %v532, %v532
  %v597 = vpack.c.bf16 %v533, %v533
  %v598 = vpack.c.bf16 %v534, %v534
  %v599 = vpack.c.bf16 %v535, %v535
  %v600 = vpack.c.bf16 %v536, %v536
  %v601 = vpack.c.bf16 %v537, %v537
  %v602 = vpack.c.bf16 %v538, %v538
  %v603 = vpack.c.bf16 %v539, %v539
  %v604 = vpack.c.bf16 %v540, %v540
  %v605 = vpack.c.bf16 %v541, %v541
  %v606 = vpack.c.bf16 %v542, %v542
  %v607 = vpack.c.bf16 %v543, %v543
  %v608 = vpack.c.bf16 %v544, %v544
  %v609 = vpack.c.bf16 %v545, %v545
  %v610 = vpack.c.bf16 %v546, %v546
  %v611 = vpack.c.bf16 %v547, %v547
  %v612 = vpack.c.bf16 %v548, %v548
  %v613 = vpack.c.bf16 %v549, %v549
  %v614 = vpack.c.bf16 %v550, %v550
  %v615 = vpack.c.bf16 %v551, %v551
  %v616 = vpack.c.bf16 %v552, %v552
  %v617 = vpack.c.bf16 %v553, %v553
  %v618 = vpack.c.bf16 %v554, %v554
  %v619 = vpack.c.bf16 %v555, %v555
  %v620 = vpack.c.bf16 %v556, %v556
  %v621 = vpack.c.bf16 %v557, %v557
  %v622 = vpack.c.bf16 %v558, %v558
  %v623 = vpack.c.bf16 %v559, %v559
  %v624 = vpack.c.bf16 %v560, %v560
  %v625 = vpack.c.bf16 %v561, %v561
  %v626 = vpack.c.bf16 %v562, %v562
  %v627 = vpack.c.bf16 %v563, %v563
  %v628 = vpack.c.bf16 %v564, %v564
  %v629 = vpack.c.bf16 %v565, %v565
  %v630 = vpack.c.bf16 %v566, %v566
  %v631 = vpack.c.bf16 %v567, %v567
  %v632 = vpack.c.bf16 %v568, %v568
  %v633 = vpack.c.bf16 %v569, %v569
  %v634 = vpack.c.bf16 %v570, %v570
  %635 = vst [vmem:[%s3] sm:$0xf] %v571
  %636 = vst [vmem:[%s3 + $0x4] sm:$0xf] %v572
  %637 = vst [vmem:[%s3 + $0x8] sm:$0xf] %v573
  %638 = vst [vmem:[%s3 + $0xc] sm:$0xf] %v574
  %639 = vst [vmem:[%s3 + $0x10] sm:$0xf] %v575
  %640 = vst [vmem:[%s3 + $0x14] sm:$0xf] %v576
  %641 = vst [vmem:[%s3 + $0x18] sm:$0xf] %v577
  %642 = vst [vmem:[%s3 + $0x1c] sm:$0xf] %v578
  %643 = vst [vmem:[%s3 + $0x20] sm:$0xf] %v579
  %644 = vst [vmem:[%s3 + $0x24] sm:$0xf] %v580
  %645 = vst [vmem:[%s3 + $0x28] sm:$0xf] %v581
  %646 = vst [vmem:[%s3 + $0x2c] sm:$0xf] %v582
  %647 = vst [vmem:[%s3 + $0x30] sm:$0xf] %v583
  %648 = vst [vmem:[%s3 + $0x34] sm:$0xf] %v584
  %649 = vst [vmem:[%s3 + $0x38] sm:$0xf] %v585
  %650 = vst [vmem:[%s3 + $0x3c] sm:$0xf] %v586
  %651 = vst [vmem:[%s3 + $0x40] sm:$0xf] %v587
  %652 = vst [vmem:[%s3 + $0x44] sm:$0xf] %v588
  %653 = vst [vmem:[%s3 + $0x48] sm:$0xf] %v589
  %654 = vst [vmem:[%s3 + $0x4c] sm:$0xf] %v590
  %655 = vst [vmem:[%s3 + $0x50] sm:$0xf] %v591
  %656 = vst [vmem:[%s3 + $0x54] sm:$0xf] %v592
  %657 = vst [vmem:[%s3 + $0x58] sm:$0xf] %v593
  %658 = vst [vmem:[%s3 + $0x5c] sm:$0xf] %v594
  %659 = vst [vmem:[%s3 + $0x60] sm:$0xf] %v595
  %660 = vst [vmem:[%s3 + $0x64] sm:$0xf] %v596
  %661 = vst [vmem:[%s3 + $0x68] sm:$0xf] %v597
  %662 = vst [vmem:[%s3 + $0x6c] sm:$0xf] %v598
  %663 = vst [vmem:[%s3 + $0x70] sm:$0xf] %v599
  %664 = vst [vmem:[%s3 + $0x74] sm:$0xf] %v600
  %665 = vst [vmem:[%s3 + $0x78] sm:$0xf] %v601
  %666 = vst [vmem:[%s3 + $0x7c] sm:$0xf] %v602
  %667 = vst [vmem:[%s3 + $0x80] sm:$0xf] %v603
  %668 = vst [vmem:[%s3 + $0x84] sm:$0xf] %v604
  %669 = vst [vmem:[%s3 + $0x88] sm:$0xf] %v605
  %670 = vst [vmem:[%s3 + $0x8c] sm:$0xf] %v606
  %671 = vst [vmem:[%s3 + $0x90] sm:$0xf] %v607
  %672 = vst [vmem:[%s3 + $0x94] sm:$0xf] %v608
  %673 = vst [vmem:[%s3 + $0x98] sm:$0xf] %v609
  %674 = vst [vmem:[%s3 + $0x9c] sm:$0xf] %v610
  %675 = vst [vmem:[%s3 + $0xa0] sm:$0xf] %v611
  %676 = vst [vmem:[%s3 + $0xa4] sm:$0xf] %v612
  %677 = vst [vmem:[%s3 + $0xa8] sm:$0xf] %v613
  %678 = vst [vmem:[%s3 + $0xac] sm:$0xf] %v614
  %679 = vst [vmem:[%s3 + $0xb0] sm:$0xf] %v615
  %680 = vst [vmem:[%s3 + $0xb4] sm:$0xf] %v616
  %681 = vst [vmem:[%s3 + $0xb8] sm:$0xf] %v617
  %682 = vst [vmem:[%s3 + $0xbc] sm:$0xf] %v618
  %683 = vst [vmem:[%s3 + $0xc0] sm:$0xf] %v619
  %684 = vst [vmem:[%s3 + $0xc4] sm:$0xf] %v620
  %685 = vst [vmem:[%s3 + $0xc8] sm:$0xf] %v621
  %686 = vst [vmem:[%s3 + $0xcc] sm:$0xf] %v622
  %687 = vst [vmem:[%s3 + $0xd0] sm:$0xf] %v623
  %688 = vst [vmem:[%s3 + $0xd4] sm:$0xf] %v624
  %689 = vst [vmem:[%s3 + $0xd8] sm:$0xf] %v625
  %690 = vst [vmem:[%s3 + $0xdc] sm:$0xf] %v626
  %691 = vst [vmem:[%s3 + $0xe0] sm:$0xf] %v627
  %692 = vst [vmem:[%s3 + $0xe4] sm:$0xf] %v628
  %693 = vst [vmem:[%s3 + $0xe8] sm:$0xf] %v629
  %694 = vst [vmem:[%s3 + $0xec] sm:$0xf] %v630
  %695 = vst [vmem:[%s3 + $0xf0] sm:$0xf] %v631
  %696 = vst [vmem:[%s3 + $0xf4] sm:$0xf] %v632
  %697 = vst [vmem:[%s3 + $0xf8] sm:$0xf] %v633
  %698 = vst [vmem:[%s3 + $0xfc] sm:$0xf] %v634
  // Predicated region
  $region14: #{bottleneck_forward.3} parent=0 // pred_check
    _
  $region15: #{bottleneck_forward.3} parent=0 // pred_check_branch
    %700 = sbr.rel (0) target = $region17
  $region16: #{bottleneck_forward.3} parent=0 // pred_region
    _
  $region17: #{bottleneck_forward.3} parent=0 // pred_fallthru
    _
  // Predicated region
  $region18: #{bottleneck_forward.3} parent=0 // pred_check
    _
  $region19: #{bottleneck_forward.3} parent=0 // pred_check_branch
    %702 = sbr.rel (0) target = $region21
  $region20: #{bottleneck_forward.3} parent=0 // pred_region
    _
  $region21: #{bottleneck_forward.3} parent=0 // pred_fallthru
    _

// kernel: bottleneck_forward.4
$region0: #{bottleneck_forward.4}
  #allocation0 [shape = 'u32[]', space=smem, size = 0x4, offset = 0x4, fixed_abs, tag = 'smem constant byte address 0x4 - core index']
  #allocation1 [shape = 'u32[72,128]{1,0:T(1,128)}', space=vmem, size = 0x9000, scoped, tag = 'internal scratch']
  %s0 = inlined_call_operand.vmem [shape: bf16[2,16,18,128], index: 0, kind: input, shape index: {}, may-alias: {0,1,2}]
  %s1 = inlined_call_operand.vmem [shape: bf16[2,16,18,128], index: 1, kind: input, shape index: {}, may-alias: {0,1,2}]
  %s2 = inlined_call_operand.vmem [shape: bf16[2,16,18,128], index: 2, kind: input, shape index: {}, may-alias: {0,1,2}]
  %s3 = inlined_call_operand.vmem [shape: bf16[3,384,128], index: 3, kind: input, shape index: {}]
  %s4 = inlined_call_operand.vmem [shape: f32[1,128], index: 4, kind: input, shape index: {}]
  %s5 = inlined_call_operand.vmem [shape: bf16[2,64,128], index: 5, kind: output, shape index: {}]
  %s6 = sld [smem:[#allocation0]]
  $region53: #{bottleneck_forward.4} parent=0
    _
  %s8 = ssub.s32 1, %s6
  %s9 = scalar_select 0, %s8, %s6
  loop: start=0, step=1, limit=4
  $region2: #{bottleneck_forward.4} parent=0 // loop_pre_header
    _
  $region3: #{bottleneck_forward.4} parent=0 // loop_header
    %s11 = sphi 0, %s15
    %p12 = scmp.ge.s32.totalorder %s11, 4
    %s18 = sphi 0, %s30
    %s19 = sphi 0, %s26
    %s20 = sphi 0, %s18
    %s21 = sphi 0, %s19
    %s22 = sphi 0, %s20
    %s23 = sphi 0, %s21
    %s35 = sphi 0, %s37
    %s38 = sphi 0, %s35
    %s39 = sphi 0, %s38
    %s55 = sphi 0, %s39
    %s71 = sphi 0, %s73
    %s74 = sphi 0, %s71
    %s75 = sphi 0, %s74
    %s91 = sphi 0, %s75
    %s107 = sphi 0, %s109
    %s110 = sphi 0, %s107
    %s111 = sphi 0, %s110
    %s127 = sphi 0, %s111
    %s131 = sphi 0, %s131
    %s133 = sphi 0, %s131
    %s134 = sphi 0, %s133
    %s148 = sphi 0, %s134
    %s152 = sphi 0, %s152
    %s154 = sphi 0, %s152
    %s155 = sphi 0, %s154
    %s169 = sphi 0, %s155
    %s177 = sphi 0, %s179
    %s180 = sphi 0, %s177
    %s181 = sphi 0, %s180
    %s197 = sphi 0, %s181
  $region4: #{bottleneck_forward.4} parent=0 // loop_header_branch
    %14 = sbr.rel (%p12) target = $region8
  $region5: #{bottleneck_forward.4} parent=0 // loop_body
    %s16 = ssub.s32 %s11, 1
    %s17 = ssub.s32 %s11, 2
    %s24 = sadd.s32 1, %s19
    %p25 = scmp.ge.s32.totalorder %s24, 1
    %s26 = scalar_select %p25, 0, %s24
    %s27 = sadd.s32 1, %s18
    %s28 = scalar_select %p25, %s27, %s18
    %p29 = scmp.ge.s32.totalorder %s28, 2
    %s30 = scalar_select %p29, 0, %s28
    %s31 = ssub.s32 %s18, %s30
    %s32 = ssub.s32 %s19, %s26
    %s33 = sor.u32 %s31, %s32
    %p34 = scmp.eq.s32.totalorder %s33, 0
    %s36 = sadd.s32 %s35, 1
    %s37 = scalar_select %p34, %s35, %s36
    %p40 = pneg %p34
    %p41 = scmp.eq.s32.totalorder %s11, 1
    %p42 = por %p40, %p41
    %p43 = scmp.ne.s32.totalorder %s35, %s38
    %p44 = scmp.eq.s32.totalorder %s11, 0
    %p45 = por %p43, %p44
    %p46 = scmp.ne.s32.totalorder %s35, %s38
    %p47 = scmp.eq.s32.totalorder %s16, 1
    %p48 = por %p46, %p47
    %p49 = scmp.ne.s32.totalorder %s38, %s39
    %p50 = scmp.eq.s32.totalorder %s16, 0
    %p51 = por %p49, %p50
    %p52 = scmp.ne.s32.totalorder %s38, %s39
    %p53 = scmp.eq.s32.totalorder %s17, 1
    %p54 = por %p52, %p53
    %p56 = scmp.ne.s32.totalorder %s39, %s55
    %p57 = scmp.eq.s32.totalorder %s17, 0
    %p58 = por %p56, %p57
    %s59 = smul.u32 %s19, 16
    %s60 = ssub.s32 %s59, 1
    %p61 = scmp.gt.s32.totalorder %s60, 0
    %s62 = scalar_select %p61, %s60, 0
    %s63 = smul.u32 %s26, 16
    %s64 = ssub.s32 %s63, 1
    %p65 = scmp.gt.s32.totalorder %s64, 0
    %s66 = scalar_select %p65, %s64, 0
    %s67 = ssub.s32 %s18, %s30
    %s68 = ssub.s32 %s62, %s66
    %s69 = sor.u32 %s67, %s68
    %p70 = scmp.eq.s32.totalorder %s69, 0
    %s72 = sadd.s32 %s71, 1
    %s73 = scalar_select %p70, %s71, %s72
    %p76 = pneg %p70
    %p77 = scmp.eq.s32.totalorder %s11, 1
    %p78 = por %p76, %p77
    %p79 = scmp.ne.s32.totalorder %s71, %s74
    %p80 = scmp.eq.s32.totalorder %s11, 0
    %p81 = por %p79, %p80
    %p82 = scmp.ne.s32.totalorder %s71, %s74
    %p83 = scmp.eq.s32.totalorder %s16, 1
    %p84 = por %p82, %p83
    %p85 = scmp.ne.s32.totalorder %s74, %s75
    %p86 = scmp.eq.s32.totalorder %s16, 0
    %p87 = por %p85, %p86
    %p88 = scmp.ne.s32.totalorder %s74, %s75
    %p89 = scmp.eq.s32.totalorder %s17, 1
    %p90 = por %p88, %p89
    %p92 = scmp.ne.s32.totalorder %s75, %s91
    %p93 = scmp.eq.s32.totalorder %s17, 0
    %p94 = por %p92, %p93
    %s95 = sadd.s32 %s19, 1
    %s96 = smul.u32 %s95, 16
    %p97 = scmp.lt.s32.totalorder %s96, 15
    %s98 = scalar_select %p97, %s96, 15
    %s99 = sadd.s32 %s26, 1
    %s100 = smul.u32 %s99, 16
    %p101 = scmp.lt.s32.totalorder %s100, 15
    %s102 = scalar_select %p101, %s100, 15
    %s103 = ssub.s32 %s18, %s30
    %s104 = ssub.s32 %s98, %s102
    %s105 = sor.u32 %s103, %s104
    %p106 = scmp.eq.s32.totalorder %s105, 0
    %s108 = sadd.s32 %s107, 1
    %s109 = scalar_select %p106, %s107, %s108
    %p112 = pneg %p106
    %p113 = scmp.eq.s32.totalorder %s11, 1
    %p114 = por %p112, %p113
    %p115 = scmp.ne.s32.totalorder %s107, %s110
    %p116 = scmp.eq.s32.totalorder %s11, 0
    %p117 = por %p115, %p116
    %p118 = scmp.ne.s32.totalorder %s107, %s110
    %p119 = scmp.eq.s32.totalorder %s16, 1
    %p120 = por %p118, %p119
    %p121 = scmp.ne.s32.totalorder %s110, %s111
    %p122 = scmp.eq.s32.totalorder %s16, 0
    %p123 = por %p121, %p122
    %p124 = scmp.ne.s32.totalorder %s110, %s111
    %p125 = scmp.eq.s32.totalorder %s17, 1
    %p126 = por %p124, %p125
    %p128 = scmp.ne.s32.totalorder %s111, %s127
    %p129 = scmp.eq.s32.totalorder %s17, 0
    %p130 = por %p128, %p129
    %s132 = sadd.s32 %s131, 1
    %p135 = scmp.eq.s32.totalorder %s11, 1
    %p136 = scmp.ne.s32.totalorder %s131, %s133
    %p137 = scmp.eq.s32.totalorder %s11, 0
    %p138 = por %p136, %p137
    %p139 = scmp.ne.s32.totalorder %s131, %s133
    %p140 = scmp.eq.s32.totalorder %s16, 1
    %p141 = por %p139, %p140
    %p142 = scmp.ne.s32.totalorder %s133, %s134
    %p143 = scmp.eq.s32.totalorder %s16, 0
    %p144 = por %p142, %p143
    %p145 = scmp.ne.s32.totalorder %s133, %s134
    %p146 = scmp.eq.s32.totalorder %s17, 1
    %p147 = por %p145, %p146
    %p149 = scmp.ne.s32.totalorder %s134, %s148
    %p150 = scmp.eq.s32.totalorder %s17, 0
    %p151 = por %p149, %p150
    %s153 = sadd.s32 %s152, 1
    %p156 = scmp.eq.s32.totalorder %s11, 1
    %p157 = scmp.ne.s32.totalorder %s152, %s154
    %p158 = scmp.eq.s32.totalorder %s11, 0
    %p159 = por %p157, %p158
    %p160 = scmp.ne.s32.totalorder %s152, %s154
    %p161 = scmp.eq.s32.totalorder %s16, 1
    %p162 = por %p160, %p161
    %p163 = scmp.ne.s32.totalorder %s154, %s155
    %p164 = scmp.eq.s32.totalorder %s16, 0
    %p165 = por %p163, %p164
    %p166 = scmp.ne.s32.totalorder %s154, %s155
    %p167 = scmp.eq.s32.totalorder %s17, 1
    %p168 = por %p166, %p167
    %p170 = scmp.ne.s32.totalorder %s155, %s169
    %p171 = scmp.eq.s32.totalorder %s17, 0
    %p172 = por %p170, %p171
    %s173 = ssub.s32 %s18, %s30
    %s174 = ssub.s32 %s19, %s26
    %s175 = sor.u32 %s173, %s174
    %p176 = scmp.eq.s32.totalorder %s175, 0
    %s178 = sadd.s32 %s177, 1
    %s179 = scalar_select %p176, %s177, %s178
    %p182 = pneg %p176
    %p183 = scmp.eq.s32.totalorder %s11, 1
    %p184 = por %p182, %p183
    %p185 = scmp.ne.s32.totalorder %s177, %s180
    %p186 = scmp.eq.s32.totalorder %s11, 0
    %p187 = por %p185, %p186
    %p188 = scmp.ne.s32.totalorder %s177, %s180
    %p189 = scmp.eq.s32.totalorder %s16, 1
    %p190 = por %p188, %p189
    %p191 = scmp.ne.s32.totalorder %s180, %s181
    %p192 = scmp.eq.s32.totalorder %s16, 0
    %p193 = por %p191, %p192
    %p194 = scmp.ne.s32.totalorder %s180, %s181
    %p195 = scmp.eq.s32.totalorder %s17, 1
    %p196 = por %p194, %p195
    %p198 = scmp.ne.s32.totalorder %s181, %s197
    %p199 = scmp.eq.s32.totalorder %s17, 0
    %p200 = por %p198, %p199
    %p201 = scmp.le.s32.totalorder 1, %s11
    %p202 = scmp.lt.s32.totalorder %s11, 3
    %p203 = pnand %p201, %p202
    %p204 = pneg %p203
    // Predicated region
    $region9: #{bottleneck_forward.4} parent=5 // pred_check
      _
    $region10: #{bottleneck_forward.4} parent=5 // pred_check_branch
      %206 = sbr.rel (%p203) target = $region12
    $region11: #{bottleneck_forward.4} parent=5 // pred_region
      %s207 = ssub.s32 %s11, 1
      // Predicated region
      $region13: #{bottleneck_forward.4} parent=11 // pred_check
        %p208 = pneg %p144
      $region14: #{bottleneck_forward.4} parent=11 // pred_check_branch
        %210 = sbr.rel (%p208) target = $region16
      $region15: #{bottleneck_forward.4} parent=11 // pred_region
        _
      $region16: #{bottleneck_forward.4} parent=11 // pred_fallthru
        _
      // Predicated region
      $region17: #{bottleneck_forward.4} parent=11 // pred_check
        %p211 = pneg %p165
      $region18: #{bottleneck_forward.4} parent=11 // pred_check_branch
        %213 = sbr.rel (%p211) target = $region20
      $region19: #{bottleneck_forward.4} parent=11 // pred_region
        _
      $region20: #{bottleneck_forward.4} parent=11 // pred_fallthru
        _
    $region12: #{bottleneck_forward.4} parent=5 // pred_fallthru
      _
    %p214 = scmp.lt.s32.totalorder %s11, 2
    // Predicated region
    $region21: #{bottleneck_forward.4} parent=5 // pred_check
      %p215 = pneg %p214
    $region22: #{bottleneck_forward.4} parent=5 // pred_check_branch
      %217 = sbr.rel (%p215) target = $region24
    $region23: #{bottleneck_forward.4} parent=5 // pred_region
      // Predicated region
      $region25: #{bottleneck_forward.4} parent=23 // pred_check
        %p218 = pneg %p45
      $region26: #{bottleneck_forward.4} parent=23 // pred_check_branch
        %220 = sbr.rel (%p218) target = $region28
      $region27: #{bottleneck_forward.4} parent=23 // pred_region
        %s221 = smul.u32 16, %s19
        %p222 = scmp.lt.s32.totalorder %s18, 1
        %s223 = scalar_select %p222, %s18, 1
        %p224 = scmp.lt.s32.totalorder %s221, 15
        %s225 = scalar_select %p224, %s221, 15
        %s226 = smul.addr %s225, 3
        %s227 = smul.addr %s223, 48
        %s228 = sadd.s32 %s226, %s227
        %s229 = smul.addr %s228, 4
        %s230 = scalar_lea.vmem %s0, %s229
        %s231 = smul.u32 16, %s19
      $region28: #{bottleneck_forward.4} parent=23 // pred_fallthru
        _
      // Predicated region
      $region29: #{bottleneck_forward.4} parent=23 // pred_check
        %p232 = pneg %p81
      $region30: #{bottleneck_forward.4} parent=23 // pred_check_branch
        %234 = sbr.rel (%p232) target = $region32
      $region31: #{bottleneck_forward.4} parent=23 // pred_region
        %s235 = smul.u32 %s19, 16
        %s236 = ssub.s32 %s235, 1
        %p237 = scmp.gt.s32.totalorder %s236, 0
        %s238 = scalar_select %p237, %s236, 0
        %p239 = scmp.lt.s32.totalorder %s18, 1
        %s240 = scalar_select %p239, %s18, 1
        %p241 = scmp.lt.s32.totalorder %s238, 15
        %s242 = scalar_select %p241, %s238, 15
        %s243 = smul.addr %s242, 3
        %s244 = smul.addr %s240, 48
        %s245 = sadd.s32 %s243, %s244
        %s246 = smul.addr %s245, 4
        %s247 = scalar_lea.vmem %s1, %s246
        %s248 = smul.u32 %s19, 16
        %s249 = ssub.s32 %s248, 1
        %p250 = scmp.gt.s32.totalorder %s249, 0
        %s251 = scalar_select %p250, %s249, 0
      $region32: #{bottleneck_forward.4} parent=23 // pred_fallthru
        _
      // Predicated region
      $region33: #{bottleneck_forward.4} parent=23 // pred_check
        %p252 = pneg %p117
      $region34: #{bottleneck_forward.4} parent=23 // pred_check_branch
        %254 = sbr.rel (%p252) target = $region36
      $region35: #{bottleneck_forward.4} parent=23 // pred_region
        %s255 = sadd.s32 %s19, 1
        %s256 = smul.u32 %s255, 16
        %p257 = scmp.lt.s32.totalorder %s256, 15
        %s258 = scalar_select %p257, %s256, 15
        %p259 = scmp.lt.s32.totalorder %s18, 1
        %s260 = scalar_select %p259, %s18, 1
        %p261 = scmp.lt.s32.totalorder %s258, 15
        %s262 = scalar_select %p261, %s258, 15
        %s263 = smul.addr %s262, 3
        %s264 = smul.addr %s260, 48
        %s265 = sadd.s32 %s263, %s264
        %s266 = smul.addr %s265, 4
        %s267 = scalar_lea.vmem %s2, %s266
        %s268 = sadd.s32 %s19, 1
        %s269 = smul.u32 %s268, 16
        %p270 = scmp.lt.s32.totalorder %s269, 15
        %s271 = scalar_select %p270, %s269, 15
      $region36: #{bottleneck_forward.4} parent=23 // pred_fallthru
        _
    $region24: #{bottleneck_forward.4} parent=5 // pred_fallthru
      _
    %p272 = scmp.le.s32.totalorder 1, %s11
    %p273 = scmp.lt.s32.totalorder %s11, 3
    %p274 = pnand %p272, %p273
    %p275 = pneg %p274
    // Predicated region
    $region37: #{bottleneck_forward.4} parent=5 // pred_check
      _
    $region38: #{bottleneck_forward.4} parent=5 // pred_check_branch
      %277 = sbr.rel (%p274) target = $region40
    $region39: #{bottleneck_forward.4} parent=5 // pred_region
      %s278 = ssub.s32 %s11, 1
      %s279 = smul.u32 16, %s21
      %p280 = scmp.lt.s32.totalorder %s20, 1
      %s281 = scalar_select %p280, %s20, 1
      %p282 = scmp.lt.s32.totalorder %s279, 15
      %s283 = scalar_select %p282, %s279, 15
      %s284 = smul.addr %s283, 3
      %s285 = smul.addr %s281, 48
      %s286 = sadd.s32 %s284, %s285
      %s287 = smul.addr %s286, 4
      %s288 = scalar_lea.vmem %s0, %s287
      %p289 = pneg %p51
      %p290 = pneg %p48
      %s291 = smul.u32 %s21, 16
      %s292 = ssub.s32 %s291, 1
      %p293 = scmp.gt.s32.totalorder %s292, 0
      %s294 = scalar_select %p293, %s292, 0
      %p295 = scmp.lt.s32.totalorder %s20, 1
      %s296 = scalar_select %p295, %s20, 1
      %p297 = scmp.lt.s32.totalorder %s294, 15
      %s298 = scalar_select %p297, %s294, 15
      %s299 = smul.addr %s298, 3
      %s300 = smul.addr %s296, 48
      %s301 = sadd.s32 %s299, %s300
      %s302 = smul.addr %s301, 4
      %s303 = scalar_lea.vmem %s1, %s302
      %p304 = pneg %p87
      %p305 = pneg %p84
      %s306 = sadd.s32 %s21, 1
      %s307 = smul.u32 %s306, 16
      %p308 = scmp.lt.s32.totalorder %s307, 15
      %s309 = scalar_select %p308, %s307, 15
      %p310 = scmp.lt.s32.totalorder %s20, 1
      %s311 = scalar_select %p310, %s20, 1
      %p312 = scmp.lt.s32.totalorder %s309, 15
      %s313 = scalar_select %p312, %s309, 15
      %s314 = smul.addr %s313, 3
      %s315 = smul.addr %s311, 48
      %s316 = sadd.s32 %s314, %s315
      %s317 = smul.addr %s316, 4
      %s318 = scalar_lea.vmem %s2, %s317
      %p319 = pneg %p123
      %p320 = pneg %p120
      %p321 = pneg %p144
      %p322 = pneg %p141
      %p323 = pneg %p165
      %p324 = pneg %p162
      %p325 = pneg %p193
      %p326 = pneg %p190
      %s327 = smul.u32 8, %s21
      %p328 = scmp.lt.s32.totalorder %s20, 1
      %s329 = scalar_select %p328, %s20, 1
      %p330 = scmp.lt.s32.totalorder %s327, 7
      %s331 = scalar_select %p330, %s327, 7
      %s332 = smul.addr %s329, 8
      %s333 = sadd.s32 %s331, %s332
      %s334 = smul.addr %s333, 4
      %s335 = scalar_lea.vmem %s5, %s334
      %s336 = smul.u32 16, %s21
      %p337 = scmp.lt.s32.totalorder %s20, 1
      %s338 = scalar_select %p337, %s20, 1
      %p339 = scmp.lt.s32.totalorder %s336, 15
      %s340 = scalar_select %p339, %s336, 15
      %s341 = smul.addr %s340, 3
      %s342 = smul.addr %s338, 48
      %s343 = sadd.s32 %s341, %s342
      %s344 = smul.addr %s343, 4
      %s345 = scalar_lea.vmem %s0, %s344
      %s346 = smul.u32 16, %s21
      %s347 = smul.u32 %s21, 16
      %s348 = ssub.s32 %s347, 1
      %p349 = scmp.gt.s32.totalorder %s348, 0
      %s350 = scalar_select %p349, %s348, 0
      %p351 = scmp.lt.s32.totalorder %s20, 1
      %s352 = scalar_select %p351, %s20, 1
      %p353 = scmp.lt.s32.totalorder %s350, 15
      %s354 = scalar_select %p353, %s350, 15
      %s355 = smul.addr %s354, 3
      %s356 = smul.addr %s352, 48
      %s357 = sadd.s32 %s355, %s356
      %s358 = smul.addr %s357, 4
      %s359 = scalar_lea.vmem %s1, %s358
      %s360 = smul.u32 %s21, 16
      %s361 = ssub.s32 %s360, 1
      %p362 = scmp.gt.s32.totalorder %s361, 0
      %s363 = scalar_select %p362, %s361, 0
      %s364 = sadd.s32 %s21, 1
      %s365 = smul.u32 %s364, 16
      %p366 = scmp.lt.s32.totalorder %s365, 15
      %s367 = scalar_select %p366, %s365, 15
      %p368 = scmp.lt.s32.totalorder %s20, 1
      %s369 = scalar_select %p368, %s20, 1
      %p370 = scmp.lt.s32.totalorder %s367, 15
      %s371 = scalar_select %p370, %s367, 15
      %s372 = smul.addr %s371, 3
      %s373 = smul.addr %s369, 48
      %s374 = sadd.s32 %s372, %s373
      %s375 = smul.addr %s374, 4
      %s376 = scalar_lea.vmem %s2, %s375
      %s377 = sadd.s32 %s21, 1
      %s378 = smul.u32 %s377, 16
      %p379 = scmp.lt.s32.totalorder %s378, 15
      %s380 = scalar_select %p379, %s378, 15
      %s381 = smul.u32 8, %s21
      %p382 = scmp.lt.s32.totalorder %s20, 1
      %s383 = scalar_select %p382, %s20, 1
      %p384 = scmp.lt.s32.totalorder %s381, 7
      %s385 = scalar_select %p384, %s381, 7
      %s386 = smul.addr %s383, 8
      %s387 = sadd.s32 %s385, %s386
      %s388 = smul.addr %s387, 4
      %s389 = scalar_lea.vmem %s5, %s388
      %s390 = smul.u32 8, %s21
      %p391 = scmp.gt.s32.totalorder %s21, 0
      %s392 = scalar_select %p391, 1, 0
      %s393 = scvt.s32.f32 %s392
      %p395 = scmp.ne.f32.partialorder %s393, %s393
      %s396 = sshrl.u32 %s393, 16
      %s397 = sand.u32 %s396, 1
      %s398 = sadd.s32 32767, %s397
      %s399 = sadd.s32 %s393, %s398
      %s400 = sand.u32 %s399, 4294901760
      %s401 = scalar_select %p395, 2143289344, %s400
      %s403 = sshrl.u32 %s401, 16
      %p404 = scmp.lt.s32.totalorder %s21, 0
      %s405 = scalar_select %p404, 1, 0
      %s406 = scvt.s32.f32 %s405
      %p408 = scmp.ne.f32.partialorder %s406, %s406
      %s409 = sshrl.u32 %s406, 16
      %s410 = sand.u32 %s409, 1
      %s411 = sadd.s32 32767, %s410
      %s412 = sadd.s32 %s406, %s411
      %s413 = sand.u32 %s412, 4294901760
      %s414 = scalar_select %p408, 2143289344, %s413
      %s416 = sshrl.u32 %s414, 16
      %v417 = vld [vmem:[%s359] sm:$0xf]
      %v418 = vld [vmem:[%s359 + $0x4] sm:$0xf]
      %v419 = vld [vmem:[%s359 + $0x8] sm:$0x1]
      %s420 = sshll.u32 %s403, 16
      %s421 = sor.u32 %s403, %s420
      %v422 = vstv %s421
      %v424 = vunpack.c.l.bf16 %v417
      %v425 = vunpack.c.l.bf16 %v418
      %v426 = vunpack.c.l.bf16 %v419
      %v427 = vunpack.c.l.bf16 %v422
      %v428 = vmul.f32 %v424, %v427
      %v429 = vmul.f32 %v425, %v427
      %v430 = vmul.f32 %v426, %v427
      %v431 = vpack.c.bf16 %v428, %v428
      %v432 = vpack.c.bf16 %v429, %v429
      %v433 = vpack.c.bf16 %v430, %v430
      %v434 = vld [vmem:[%s345] sm:$0xf]
      %v435 = vld [vmem:[%s345 + $0x4] sm:$0xf]
      %v436 = vld [vmem:[%s345 + $0x8] sm:$0x1]
      %v437 = vld [vmem:[%s345 + $0xc] sm:$0xf]
      %v438 = vld [vmem:[%s345 + $0x10] sm:$0xf]
      %v439 = vld [vmem:[%s345 + $0x14] sm:$0x1]
      %v440 = vld [vmem:[%s345 + $0x18] sm:$0xf]
      %v441 = vld [vmem:[%s345 + $0x1c] sm:$0xf]
      %v442 = vld [vmem:[%s345 + $0x20] sm:$0x1]
      %v443 = vld [vmem:[%s345 + $0x24] sm:$0xf]
      %v444 = vld [vmem:[%s345 + $0x28] sm:$0xf]
      %v445 = vld [vmem:[%s345 + $0x2c] sm:$0x1]
      %v446 = vld [vmem:[%s345 + $0x30] sm:$0xf]
      %v447 = vld [vmem:[%s345 + $0x34] sm:$0xf]
      %v448 = vld [vmem:[%s345 + $0x38] sm:$0x1]
      %v449 = vld [vmem:[%s345 + $0x3c] sm:$0xf]
      %v450 = vld [vmem:[%s345 + $0x40] sm:$0xf]
      %v451 = vld [vmem:[%s345 + $0x44] sm:$0x1]
      %v452 = vld [vmem:[%s345 + $0x48] sm:$0xf]
      %v453 = vld [vmem:[%s345 + $0x4c] sm:$0xf]
      %v454 = vld [vmem:[%s345 + $0x50] sm:$0x1]
      %v455 = vld [vmem:[%s345 + $0x54] sm:$0xf]
      %v456 = vld [vmem:[%s345 + $0x58] sm:$0xf]
      %v457 = vld [vmem:[%s345 + $0x5c] sm:$0x1]
      %v458 = vld [vmem:[%s345 + $0x60] sm:$0xf]
      %v459 = vld [vmem:[%s345 + $0x64] sm:$0xf]
      %v460 = vld [vmem:[%s345 + $0x68] sm:$0x1]
      %v461 = vld [vmem:[%s345 + $0x6c] sm:$0xf]
      %v462 = vld [vmem:[%s345 + $0x70] sm:$0xf]
      %v463 = vld [vmem:[%s345 + $0x74] sm:$0x1]
      %v464 = vld [vmem:[%s345 + $0x78] sm:$0xf]
      %v465 = vld [vmem:[%s345 + $0x7c] sm:$0xf]
      %v466 = vld [vmem:[%s345 + $0x80] sm:$0x1]
      %v467 = vld [vmem:[%s345 + $0x84] sm:$0xf]
      %v468 = vld [vmem:[%s345 + $0x88] sm:$0xf]
      %v469 = vld [vmem:[%s345 + $0x8c] sm:$0x1]
      %v470 = vld [vmem:[%s345 + $0x90] sm:$0xf]
      %v471 = vld [vmem:[%s345 + $0x94] sm:$0xf]
      %v472 = vld [vmem:[%s345 + $0x98] sm:$0x1]
      %v473 = vld [vmem:[%s345 + $0x9c] sm:$0xf]
      %v474 = vld [vmem:[%s345 + $0xa0] sm:$0xf]
      %v475 = vld [vmem:[%s345 + $0xa4] sm:$0x1]
      %v476 = vld [vmem:[%s345 + $0xa8] sm:$0xf]
      %v477 = vld [vmem:[%s345 + $0xac] sm:$0xf]
      %v478 = vld [vmem:[%s345 + $0xb0] sm:$0x1]
      %v479 = vld [vmem:[%s345 + $0xb4] sm:$0xf]
      %v480 = vld [vmem:[%s345 + $0xb8] sm:$0xf]
      %v481 = vld [vmem:[%s345 + $0xbc] sm:$0x1]
      %v482 = vld [vmem:[%s376] sm:$0xf]
      %v483 = vld [vmem:[%s376 + $0x4] sm:$0xf]
      %v484 = vld [vmem:[%s376 + $0x8] sm:$0x1]
      %s485 = sshll.u32 %s416, 16
      %s486 = sor.u32 %s416, %s485
      %v487 = vstv %s486
      %v489 = vunpack.c.l.bf16 %v482
      %v490 = vunpack.c.l.bf16 %v483
      %v491 = vunpack.c.l.bf16 %v484
      %v492 = vunpack.c.l.bf16 %v487
      %v493 = vmul.f32 %v489, %v492
      %v494 = vmul.f32 %v490, %v492
      %v495 = vmul.f32 %v491, %v492
      %v496 = vpack.c.bf16 %v493, %v493
      %v497 = vpack.c.bf16 %v494, %v494
      %v498 = vpack.c.bf16 %v495, %v495
      %v535 = vunpack.c.l.b16 %v431
      %v536 = vunpack.c.l.b16 %v432
      %v537 = vunpack.c.l.b16 %v434
      %v538 = vunpack.c.l.b16 %v435
      %v539 = vunpack.c.l.b16 %v437
      %v540 = vunpack.c.l.b16 %v438
      %v541 = vunpack.c.l.b16 %v440
      %v542 = vunpack.c.l.b16 %v441
      %v543 = vunpack.c.l.b16 %v443
      %v544 = vunpack.c.l.b16 %v444
      %v545 = vunpack.c.l.b16 %v446
      %v546 = vunpack.c.l.b16 %v447
      %v547 = vunpack.c.l.b16 %v449
      %v548 = vunpack.c.l.b16 %v450
      %v549 = vunpack.c.l.b16 %v452
      %v550 = vunpack.c.l.b16 %v453
      %v551 = vunpack.c.l.b16 %v455
      %v552 = vunpack.c.l.b16 %v456
      %v553 = vunpack.c.l.b16 %v458
      %v554 = vunpack.c.l.b16 %v459
      %v555 = vunpack.c.l.b16 %v461
      %v556 = vunpack.c.l.b16 %v462
      %v557 = vunpack.c.l.b16 %v464
      %v558 = vunpack.c.l.b16 %v465
      %v559 = vunpack.c.l.b16 %v467
      %v560 = vunpack.c.l.b16 %v468
      %v561 = vunpack.c.l.b16 %v470
      %v562 = vunpack.c.l.b16 %v471
      %v563 = vunpack.c.l.b16 %v473
      %v564 = vunpack.c.l.b16 %v474
      %v565 = vunpack.c.l.b16 %v476
      %v566 = vunpack.c.l.b16 %v477
      %v567 = vunpack.c.l.b16 %v479
      %v568 = vunpack.c.l.b16 %v480
      %v569 = vunpack.c.l.b16 %v496
      %v570 = vunpack.c.l.b16 %v497
      %v571 = vpack.c.b16 %v536, %v535
      %v572 = vpack.c.b16 %v538, %v537
      %v573 = vpack.c.b16 %v540, %v539
      %v574 = vpack.c.b16 %v542, %v541
      %v575 = vpack.c.b16 %v544, %v543
      %v576 = vpack.c.b16 %v546, %v545
      %v577 = vpack.c.b16 %v548, %v547
      %v578 = vpack.c.b16 %v550, %v549
      %v579 = vpack.c.b16 %v552, %v551
      %v580 = vpack.c.b16 %v554, %v553
      %v581 = vpack.c.b16 %v556, %v555
      %v582 = vpack.c.b16 %v558, %v557
      %v583 = vpack.c.b16 %v560, %v559
      %v584 = vpack.c.b16 %v562, %v561
      %v585 = vpack.c.b16 %v564, %v563
      %v586 = vpack.c.b16 %v566, %v565
      %v587 = vpack.c.b16 %v568, %v567
      %v588 = vpack.c.b16 %v570, %v569
      %v625 = vunpack.c.l.b16 %v433
      %v626 = vunpack.c.l.b16 %v436
      %v627 = vunpack.c.l.b16 %v439
      %v628 = vunpack.c.l.b16 %v442
      %v629 = vunpack.c.l.b16 %v445
      %v630 = vunpack.c.l.b16 %v448
      %v631 = vunpack.c.l.b16 %v451
      %v632 = vunpack.c.l.b16 %v454
      %v633 = vunpack.c.l.b16 %v457
      %v634 = vunpack.c.l.b16 %v460
      %v635 = vunpack.c.l.b16 %v463
      %v636 = vunpack.c.l.b16 %v466
      %v637 = vunpack.c.l.b16 %v469
      %v638 = vunpack.c.l.b16 %v472
      %v639 = vunpack.c.l.b16 %v475
      %v640 = vunpack.c.l.b16 %v478
      %v641 = vunpack.c.l.b16 %v481
      %v642 = vunpack.c.l.b16 %v498
      %v643 = vpack.c.b16 %v625, %v625
      %v644 = vpack.c.b16 %v626, %v626
      %v645 = vpack.c.b16 %v627, %v627
      %v646 = vpack.c.b16 %v628, %v628
      %v647 = vpack.c.b16 %v629, %v629
      %v648 = vpack.c.b16 %v630, %v630
      %v649 = vpack.c.b16 %v631, %v631
      %v650 = vpack.c.b16 %v632, %v632
      %v651 = vpack.c.b16 %v633, %v633
      %v652 = vpack.c.b16 %v634, %v634
      %v653 = vpack.c.b16 %v635, %v635
      %v654 = vpack.c.b16 %v636, %v636
      %v655 = vpack.c.b16 %v637, %v637
      %v656 = vpack.c.b16 %v638, %v638
      %v657 = vpack.c.b16 %v639, %v639
      %v658 = vpack.c.b16 %v640, %v640
      %v659 = vpack.c.b16 %v641, %v641
      %v660 = vpack.c.b16 %v642, %v642
      %vm661 = vsmask.f32 7424
      %v663 = vshrl.u32 %v571, 16
      %v665 = vshll.u32 %v571, 16
      %v667 = vrot.slane %v665, 1
      %v668 = vor.u32 %v663, %v667
      %v670 = vshll.u32 %v643, 16
      %v672 = vrot.slane %v670, 1
      %v673 = vsel %vm661, %v668, %v672
      %v675 = vshrl.u32 %v572, 16
      %v677 = vshll.u32 %v572, 16
      %v679 = vrot.slane %v677, 1
      %v680 = vor.u32 %v675, %v679
      %v682 = vshll.u32 %v644, 16
      %v684 = vrot.slane %v682, 1
      %v685 = vsel %vm661, %v680, %v684
      %v687 = vshrl.u32 %v573, 16
      %v689 = vshll.u32 %v573, 16
      %v691 = vrot.slane %v689, 1
      %v692 = vor.u32 %v687, %v691
      %v694 = vshll.u32 %v645, 16
      %v696 = vrot.slane %v694, 1
      %v697 = vsel %vm661, %v692, %v696
      %v699 = vshrl.u32 %v574, 16
      %v701 = vshll.u32 %v574, 16
      %v703 = vrot.slane %v701, 1
      %v704 = vor.u32 %v699, %v703
      %v706 = vshll.u32 %v646, 16
      %v708 = vrot.slane %v706, 1
      %v709 = vsel %vm661, %v704, %v708
      %v711 = vshrl.u32 %v575, 16
      %v713 = vshll.u32 %v575, 16
      %v715 = vrot.slane %v713, 1
      %v716 = vor.u32 %v711, %v715
      %v718 = vshll.u32 %v647, 16
      %v720 = vrot.slane %v718, 1
      %v721 = vsel %vm661, %v716, %v720
      %v723 = vshrl.u32 %v576, 16
      %v725 = vshll.u32 %v576, 16
      %v727 = vrot.slane %v725, 1
      %v728 = vor.u32 %v723, %v727
      %v730 = vshll.u32 %v648, 16
      %v732 = vrot.slane %v730, 1
      %v733 = vsel %vm661, %v728, %v732
      %v735 = vshrl.u32 %v577, 16
      %v737 = vshll.u32 %v577, 16
      %v739 = vrot.slane %v737, 1
      %v740 = vor.u32 %v735, %v739
      %v742 = vshll.u32 %v649, 16
      %v744 = vrot.slane %v742, 1
      %v745 = vsel %vm661, %v740, %v744
      %v747 = vshrl.u32 %v578, 16
      %v749 = vshll.u32 %v578, 16
      %v751 = vrot.slane %v749, 1
      %v752 = vor.u32 %v747, %v751
      %v754 = vshll.u32 %v650, 16
      %v756 = vrot.slane %v754, 1
      %v757 = vsel %vm661, %v752, %v756
      %v759 = vshrl.u32 %v579, 16
      %v761 = vshll.u32 %v579, 16
      %v763 = vrot.slane %v761, 1
      %v764 = vor.u32 %v759, %v763
      %v766 = vshll.u32 %v651, 16
      %v768 = vrot.slane %v766, 1
      %v769 = vsel %vm661, %v764, %v768
      %v771 = vshrl.u32 %v580, 16
      %v773 = vshll.u32 %v580, 16
      %v775 = vrot.slane %v773, 1
      %v776 = vor.u32 %v771, %v775
      %v778 = vshll.u32 %v652, 16
      %v780 = vrot.slane %v778, 1
      %v781 = vsel %vm661, %v776, %v780
      %v783 = vshrl.u32 %v581, 16
      %v785 = vshll.u32 %v581, 16
      %v787 = vrot.slane %v785, 1
      %v788 = vor.u32 %v783, %v787
      %v790 = vshll.u32 %v653, 16
      %v792 = vrot.slane %v790, 1
      %v793 = vsel %vm661, %v788, %v792
      %v795 = vshrl.u32 %v582, 16
      %v797 = vshll.u32 %v582, 16
      %v799 = vrot.slane %v797, 1
      %v800 = vor.u32 %v795, %v799
      %v802 = vshll.u32 %v654, 16
      %v804 = vrot.slane %v802, 1
      %v805 = vsel %vm661, %v800, %v804
      %v807 = vshrl.u32 %v583, 16
      %v809 = vshll.u32 %v583, 16
      %v811 = vrot.slane %v809, 1
      %v812 = vor.u32 %v807, %v811
      %v814 = vshll.u32 %v655, 16
      %v816 = vrot.slane %v814, 1
      %v817 = vsel %vm661, %v812, %v816
      %v819 = vshrl.u32 %v584, 16
      %v821 = vshll.u32 %v584, 16
      %v823 = vrot.slane %v821, 1
      %v824 = vor.u32 %v819, %v823
      %v826 = vshll.u32 %v656, 16
      %v828 = vrot.slane %v826, 1
      %v829 = vsel %vm661, %v824, %v828
      %v831 = vshrl.u32 %v585, 16
      %v833 = vshll.u32 %v585, 16
      %v835 = vrot.slane %v833, 1
      %v836 = vor.u32 %v831, %v835
      %v838 = vshll.u32 %v657, 16
      %v840 = vrot.slane %v838, 1
      %v841 = vsel %vm661, %v836, %v840
      %v843 = vshrl.u32 %v586, 16
      %v845 = vshll.u32 %v586, 16
      %v847 = vrot.slane %v845, 1
      %v848 = vor.u32 %v843, %v847
      %v850 = vshll.u32 %v658, 16
      %v852 = vrot.slane %v850, 1
      %v853 = vsel %vm661, %v848, %v852
      %v855 = vshrl.u32 %v587, 16
      %v857 = vshll.u32 %v587, 16
      %v859 = vrot.slane %v857, 1
      %v860 = vor.u32 %v855, %v859
      %v862 = vshll.u32 %v659, 16
      %v864 = vrot.slane %v862, 1
      %v865 = vsel %vm661, %v860, %v864
      %v867 = vshrl.u32 %v588, 16
      %v869 = vshll.u32 %v588, 16
      %v871 = vrot.slane %v869, 1
      %v872 = vor.u32 %v867, %v871
      %v874 = vshll.u32 %v660, 16
      %v876 = vrot.slane %v874, 1
      %v877 = vsel %vm661, %v872, %v876
      %vm896 = vcmask 1046528
      %v897 = vrot.slane %v571, 1
      %v898 = vrot.slane %v643, 1
      %v899 = vsel %vm896, %v897, %v898
      %v900 = vrot.slane %v572, 1
      %v901 = vrot.slane %v644, 1
      %v902 = vsel %vm896, %v900, %v901
      %v903 = vrot.slane %v573, 1
      %v904 = vrot.slane %v645, 1
      %v905 = vsel %vm896, %v903, %v904
      %v906 = vrot.slane %v574, 1
      %v907 = vrot.slane %v646, 1
      %v908 = vsel %vm896, %v906, %v907
      %v909 = vrot.slane %v575, 1
      %v910 = vrot.slane %v647, 1
      %v911 = vsel %vm896, %v909, %v910
      %v912 = vrot.slane %v576, 1
      %v913 = vrot.slane %v648, 1
      %v914 = vsel %vm896, %v912, %v913
      %v915 = vrot.slane %v577, 1
      %v916 = vrot.slane %v649, 1
      %v917 = vsel %vm896, %v915, %v916
      %v918 = vrot.slane %v578, 1
      %v919 = vrot.slane %v650, 1
      %v920 = vsel %vm896, %v918, %v919
      %v921 = vrot.slane %v579, 1
      %v922 = vrot.slane %v651, 1
      %v923 = vsel %vm896, %v921, %v922
      %v924 = vrot.slane %v580, 1
      %v925 = vrot.slane %v652, 1
      %v926 = vsel %vm896, %v924, %v925
      %v927 = vrot.slane %v581, 1
      %v928 = vrot.slane %v653, 1
      %v929 = vsel %vm896, %v927, %v928
      %v930 = vrot.slane %v582, 1
      %v931 = vrot.slane %v654, 1
      %v932 = vsel %vm896, %v930, %v931
      %v933 = vrot.slane %v583, 1
      %v934 = vrot.slane %v655, 1
      %v935 = vsel %vm896, %v933, %v934
      %v936 = vrot.slane %v584, 1
      %v937 = vrot.slane %v656, 1
      %v938 = vsel %vm896, %v936, %v937
      %v939 = vrot.slane %v585, 1
      %v940 = vrot.slane %v657, 1
      %v941 = vsel %vm896, %v939, %v940
      %v942 = vrot.slane %v586, 1
      %v943 = vrot.slane %v658, 1
      %v944 = vsel %vm896, %v942, %v943
      %v945 = vrot.slane %v587, 1
      %v946 = vrot.slane %v659, 1
      %v947 = vsel %vm896, %v945, %v946
      %v948 = vrot.slane %v588, 1
      %v949 = vrot.slane %v660, 1
      %v950 = vsel %vm896, %v948, %v949
      %v969 = vld [vmem:[%s3] sm:$0xf]
      %v970 = vld [vmem:[%s3 + $0x4] sm:$0xf]
      %v971 = vld [vmem:[%s3 + $0x8] sm:$0xf]
      %v972 = vld [vmem:[%s3 + $0xc] sm:$0xf]
      %v973 = vld [vmem:[%s3 + $0x10] sm:$0xf]
      %v974 = vld [vmem:[%s3 + $0x14] sm:$0xf]
      %v975 = vld [vmem:[%s3 + $0x18] sm:$0xf]
      %v976 = vld [vmem:[%s3 + $0x1c] sm:$0xf]
      %v977 = vld [vmem:[%s3 + $0x20] sm:$0xf]
      %v978 = vld [vmem:[%s3 + $0x24] sm:$0xf]
      %v979 = vld [vmem:[%s3 + $0x28] sm:$0xf]
      %v980 = vld [vmem:[%s3 + $0x2c] sm:$0xf]
      %v981 = vld [vmem:[%s3 + $0x30] sm:$0xf]
      %v982 = vld [vmem:[%s3 + $0x34] sm:$0xf]
      %v983 = vld [vmem:[%s3 + $0x38] sm:$0xf]
      %v984 = vld [vmem:[%s3 + $0x3c] sm:$0xf]
      %v985 = vld [vmem:[%s3 + $0x40] sm:$0xf]
      %v986 = vld [vmem:[%s3 + $0x44] sm:$0xf]
      %v987 = vld [vmem:[%s3 + $0x48] sm:$0xf]
      %v988 = vld [vmem:[%s3 + $0x4c] sm:$0xf]
      %v989 = vld [vmem:[%s3 + $0x50] sm:$0xf]
      %v990 = vld [vmem:[%s3 + $0x54] sm:$0xf]
      %v991 = vld [vmem:[%s3 + $0x58] sm:$0xf]
      %v992 = vld [vmem:[%s3 + $0x5c] sm:$0xf]
      %v993 = vld [vmem:[%s3 + $0x60] sm:$0xf]
      %v994 = vld [vmem:[%s3 + $0x64] sm:$0xf]
      %v995 = vld [vmem:[%s3 + $0x68] sm:$0xf]
      %v996 = vld [vmem:[%s3 + $0x6c] sm:$0xf]
      %v997 = vld [vmem:[%s3 + $0x70] sm:$0xf]
      %v998 = vld [vmem:[%s3 + $0x74] sm:$0xf]
      %v999 = vld [vmem:[%s3 + $0x78] sm:$0xf]
      %v1000 = vld [vmem:[%s3 + $0x7c] sm:$0xf]
      %v1001 = vld [vmem:[%s3 + $0x80] sm:$0xf]
      %v1002 = vld [vmem:[%s3 + $0x84] sm:$0xf]
      %v1003 = vld [vmem:[%s3 + $0x88] sm:$0xf]
      %v1004 = vld [vmem:[%s3 + $0x8c] sm:$0xf]
      %v1005 = vld [vmem:[%s3 + $0x90] sm:$0xf]
      %v1006 = vld [vmem:[%s3 + $0x94] sm:$0xf]
      %v1007 = vld [vmem:[%s3 + $0x98] sm:$0xf]
      %v1008 = vld [vmem:[%s3 + $0x9c] sm:$0xf]
      %v1009 = vld [vmem:[%s3 + $0xa0] sm:$0xf]
      %v1010 = vld [vmem:[%s3 + $0xa4] sm:$0xf]
      %v1011 = vld [vmem:[%s3 + $0xa8] sm:$0xf]
      %v1012 = vld [vmem:[%s3 + $0xac] sm:$0xf]
      %v1013 = vld [vmem:[%s3 + $0xb0] sm:$0xf]
      %v1014 = vld [vmem:[%s3 + $0xb4] sm:$0xf]
      %v1015 = vld [vmem:[%s3 + $0xb8] sm:$0xf]
      %v1016 = vld [vmem:[%s3 + $0xbc] sm:$0xf]
      %s1017 = scalar_lea.vmem %s3, 192
      %v1018 = vld [vmem:[%s1017] sm:$0xf]
      %v1019 = vld [vmem:[%s1017 + $0x4] sm:$0xf]
      %v1020 = vld [vmem:[%s1017 + $0x8] sm:$0xf]
      %v1021 = vld [vmem:[%s1017 + $0xc] sm:$0xf]
      %v1022 = vld [vmem:[%s1017 + $0x10] sm:$0xf]
      %v1023 = vld [vmem:[%s1017 + $0x14] sm:$0xf]
      %v1024 = vld [vmem:[%s1017 + $0x18] sm:$0xf]
      %v1025 = vld [vmem:[%s1017 + $0x1c] sm:$0xf]
      %v1026 = vld [vmem:[%s1017 + $0x20] sm:$0xf]
      %v1027 = vld [vmem:[%s1017 + $0x24] sm:$0xf]
      %v1028 = vld [vmem:[%s1017 + $0x28] sm:$0xf]
      %v1029 = vld [vmem:[%s1017 + $0x2c] sm:$0xf]
      %v1030 = vld [vmem:[%s1017 + $0x30] sm:$0xf]
      %v1031 = vld [vmem:[%s1017 + $0x34] sm:$0xf]
      %v1032 = vld [vmem:[%s1017 + $0x38] sm:$0xf]
      %v1033 = vld [vmem:[%s1017 + $0x3c] sm:$0xf]
      %v1034 = vld [vmem:[%s1017 + $0x40] sm:$0xf]
      %v1035 = vld [vmem:[%s1017 + $0x44] sm:$0xf]
      %v1036 = vld [vmem:[%s1017 + $0x48] sm:$0xf]
      %v1037 = vld [vmem:[%s1017 + $0x4c] sm:$0xf]
      %v1038 = vld [vmem:[%s1017 + $0x50] sm:$0xf]
      %v1039 = vld [vmem:[%s1017 + $0x54] sm:$0xf]
      %v1040 = vld [vmem:[%s1017 + $0x58] sm:$0xf]
      %v1041 = vld [vmem:[%s1017 + $0x5c] sm:$0xf]
      %v1042 = vld [vmem:[%s1017 + $0x60] sm:$0xf]
      %v1043 = vld [vmem:[%s1017 + $0x64] sm:$0xf]
      %v1044 = vld [vmem:[%s1017 + $0x68] sm:$0xf]
      %v1045 = vld [vmem:[%s1017 + $0x6c] sm:$0xf]
      %v1046 = vld [vmem:[%s1017 + $0x70] sm:$0xf]
      %v1047 = vld [vmem:[%s1017 + $0x74] sm:$0xf]
      %v1048 = vld [vmem:[%s1017 + $0x78] sm:$0xf]
      %v1049 = vld [vmem:[%s1017 + $0x7c] sm:$0xf]
      %v1050 = vld [vmem:[%s1017 + $0x80] sm:$0xf]
      %v1051 = vld [vmem:[%s1017 + $0x84] sm:$0xf]
      %v1052 = vld [vmem:[%s1017 + $0x88] sm:$0xf]
      %v1053 = vld [vmem:[%s1017 + $0x8c] sm:$0xf]
      %v1054 = vld [vmem:[%s1017 + $0x90] sm:$0xf]
      %v1055 = vld [vmem:[%s1017 + $0x94] sm:$0xf]
      %v1056 = vld [vmem:[%s1017 + $0x98] sm:$0xf]
      %v1057 = vld [vmem:[%s1017 + $0x9c] sm:$0xf]
      %v1058 = vld [vmem:[%s1017 + $0xa0] sm:$0xf]
      %v1059 = vld [vmem:[%s1017 + $0xa4] sm:$0xf]
      %v1060 = vld [vmem:[%s1017 + $0xa8] sm:$0xf]
      %v1061 = vld [vmem:[%s1017 + $0xac] sm:$0xf]
      %v1062 = vld [vmem:[%s1017 + $0xb0] sm:$0xf]
      %v1063 = vld [vmem:[%s1017 + $0xb4] sm:$0xf]
      %v1064 = vld [vmem:[%s1017 + $0xb8] sm:$0xf]
      %v1065 = vld [vmem:[%s1017 + $0xbc] sm:$0xf]
      %v1114 = vunpack.c.l.b16 %v1018
      %v1115 = vunpack.c.l.b16 %v1019
      %v1116 = vunpack.c.l.b16 %v1020
      %v1117 = vunpack.c.l.b16 %v1021
      %v1118 = vunpack.c.l.b16 %v1022
      %v1119 = vunpack.c.l.b16 %v1023
      %v1120 = vunpack.c.l.b16 %v1024
      %v1121 = vunpack.c.l.b16 %v1025
      %v1122 = vunpack.c.l.b16 %v1026
      %v1123 = vunpack.c.l.b16 %v1027
      %v1124 = vunpack.c.l.b16 %v1028
      %v1125 = vunpack.c.l.b16 %v1029
      %v1126 = vunpack.c.l.b16 %v1030
      %v1127 = vunpack.c.l.b16 %v1031
      %v1128 = vunpack.c.l.b16 %v1032
      %v1129 = vunpack.c.l.b16 %v1033
      %v1130 = vunpack.c.l.b16 %v1034
      %v1131 = vunpack.c.l.b16 %v1035
      %v1132 = vunpack.c.l.b16 %v1036
      %v1133 = vunpack.c.l.b16 %v1037
      %v1134 = vunpack.c.l.b16 %v1038
      %v1135 = vunpack.c.l.b16 %v1039
      %v1136 = vunpack.c.l.b16 %v1040
      %v1137 = vunpack.c.l.b16 %v1041
      %v1138 = vunpack.c.l.b16 %v1042
      %v1139 = vunpack.c.l.b16 %v1043
      %v1140 = vunpack.c.l.b16 %v1044
      %v1141 = vunpack.c.l.b16 %v1045
      %v1142 = vunpack.c.l.b16 %v1046
      %v1143 = vunpack.c.l.b16 %v1047
      %v1144 = vunpack.c.l.b16 %v1048
      %v1145 = vunpack.c.l.b16 %v1049
      %v1146 = vunpack.c.l.b16 %v1050
      %v1147 = vunpack.c.l.b16 %v1051
      %v1148 = vunpack.c.l.b16 %v1052
      %v1149 = vunpack.c.l.b16 %v1053
      %v1150 = vunpack.c.l.b16 %v1054
      %v1151 = vunpack.c.l.b16 %v1055
      %v1152 = vunpack.c.l.b16 %v1056
      %v1153 = vunpack.c.l.b16 %v1057
      %v1154 = vunpack.c.l.b16 %v1058
      %v1155 = vunpack.c.l.b16 %v1059
      %v1156 = vunpack.c.l.b16 %v1060
      %v1157 = vunpack.c.l.b16 %v1061
      %v1158 = vunpack.c.l.b16 %v1062
      %v1159 = vunpack.c.l.b16 %v1063
      %v1160 = vunpack.c.l.b16 %v1064
      %v1161 = vunpack.c.l.b16 %v1065
      %v1162 = vpack.c.b16 %v1115, %v1114
      %v1163 = vpack.c.b16 %v1117, %v1116
      %v1164 = vpack.c.b16 %v1119, %v1118
      %v1165 = vpack.c.b16 %v1121, %v1120
      %v1166 = vpack.c.b16 %v1123, %v1122
      %v1167 = vpack.c.b16 %v1125, %v1124
      %v1168 = vpack.c.b16 %v1127, %v1126
      %v1169 = vpack.c.b16 %v1129, %v1128
      %v1170 = vpack.c.b16 %v1131, %v1130
      %v1171 = vpack.c.b16 %v1133, %v1132
      %v1172 = vpack.c.b16 %v1135, %v1134
      %v1173 = vpack.c.b16 %v1137, %v1136
      %v1174 = vpack.c.b16 %v1139, %v1138
      %v1175 = vpack.c.b16 %v1141, %v1140
      %v1176 = vpack.c.b16 %v1143, %v1142
      %v1177 = vpack.c.b16 %v1145, %v1144
      %v1178 = vpack.c.b16 %v1147, %v1146
      %v1179 = vpack.c.b16 %v1149, %v1148
      %v1180 = vpack.c.b16 %v1151, %v1150
      %v1181 = vpack.c.b16 %v1153, %v1152
      %v1182 = vpack.c.b16 %v1155, %v1154
      %v1183 = vpack.c.b16 %v1157, %v1156
      %v1184 = vpack.c.b16 %v1159, %v1158
      %v1185 = vpack.c.b16 %v1161, %v1160
      %1210 = vmatpush.bf16.msra.mxu0 %v1169
      %1211 = vmatpush.bf16.msra.mxu0 %v1168
      %1212 = vmatpush.bf16.msra.mxu0 %v1167
      %1213 = vmatpush.bf16.msra.mxu0 %v1166
      %1214 = vmatpush.bf16.msra.mxu0 %v1165
      %1215 = vmatpush.bf16.msra.mxu0 %v1164
      %1216 = vmatpush.bf16.msra.mxu0 %v1163
      %1217 = vmatpush.bf16.msra.mxu0 %v1162
      %1218 = vmatmul.bf16.gmra.mxu0 %v572
      %v1219 = vpop.f32.mrf.mxu0
      %v1220 = vadd.f32 0.0, %v1219
      %v1221 = vpop.f32.mrf.mxu0
      %v1222 = vadd.f32 0.0, %v1221
      %1223 = vmatmul.bf16.gmra.mxu0 %v573
      %v1224 = vpop.f32.mrf.mxu0
      %v1225 = vadd.f32 0.0, %v1224
      %v1226 = vpop.f32.mrf.mxu0
      %v1227 = vadd.f32 0.0, %v1226
      %1228 = vmatmul.bf16.gmra.mxu0 %v574
      %v1229 = vpop.f32.mrf.mxu0
      %v1230 = vadd.f32 0.0, %v1229
      %v1231 = vpop.f32.mrf.mxu0
      %v1232 = vadd.f32 0.0, %v1231
      %1233 = vmatmul.bf16.gmra.mxu0 %v575
      %v1234 = vpop.f32.mrf.mxu0
      %v1235 = vadd.f32 0.0, %v1234
      %v1236 = vpop.f32.mrf.mxu0
      %v1237 = vadd.f32 0.0, %v1236
      %1238 = vmatmul.bf16.gmra.mxu0 %v576
      %v1239 = vpop.f32.mrf.mxu0
      %v1240 = vadd.f32 0.0, %v1239
      %v1241 = vpop.f32.mrf.mxu0
      %v1242 = vadd.f32 0.0, %v1241
      %1243 = vmatmul.bf16.gmra.mxu0 %v577
      %v1244 = vpop.f32.mrf.mxu0
      %v1245 = vadd.f32 0.0, %v1244
      %v1246 = vpop.f32.mrf.mxu0
      %v1247 = vadd.f32 0.0, %v1246
      %1248 = vmatmul.bf16.gmra.mxu0 %v578
      %v1249 = vpop.f32.mrf.mxu0
      %v1250 = vadd.f32 0.0, %v1249
      %v1251 = vpop.f32.mrf.mxu0
      %v1252 = vadd.f32 0.0, %v1251
      %1253 = vmatmul.bf16.gmra.mxu0 %v579
      %v1254 = vpop.f32.mrf.mxu0
      %v1255 = vadd.f32 0.0, %v1254
      %v1256 = vpop.f32.mrf.mxu0
      %v1257 = vadd.f32 0.0, %v1256
      %1258 = vmatmul.bf16.gmra.mxu0 %v580
      %v1259 = vpop.f32.mrf.mxu0
      %v1260 = vadd.f32 0.0, %v1259
      %v1261 = vpop.f32.mrf.mxu0
      %v1262 = vadd.f32 0.0, %v1261
      %1263 = vmatmul.bf16.gmra.mxu0 %v581
      %v1264 = vpop.f32.mrf.mxu0
      %v1265 = vadd.f32 0.0, %v1264
      %v1266 = vpop.f32.mrf.mxu0
      %v1267 = vadd.f32 0.0, %v1266
      %1268 = vmatmul.bf16.gmra.mxu0 %v582
      %v1269 = vpop.f32.mrf.mxu0
      %v1270 = vadd.f32 0.0, %v1269
      %v1271 = vpop.f32.mrf.mxu0
      %v1272 = vadd.f32 0.0, %v1271
      %1273 = vmatmul.bf16.gmra.mxu0 %v583
      %v1274 = vpop.f32.mrf.mxu0
      %v1275 = vadd.f32 0.0, %v1274
      %v1276 = vpop.f32.mrf.mxu0
      %v1277 = vadd.f32 0.0, %v1276
      %1278 = vmatmul.bf16.gmra.mxu0 %v584
      %v1279 = vpop.f32.mrf.mxu0
      %v1280 = vadd.f32 0.0, %v1279
      %v1281 = vpop.f32.mrf.mxu0
      %v1282 = vadd.f32 0.0, %v1281
      %1283 = vmatmul.bf16.gmra.mxu0 %v585
      %v1284 = vpop.f32.mrf.mxu0
      %v1285 = vadd.f32 0.0, %v1284
      %v1286 = vpop.f32.mrf.mxu0
      %v1287 = vadd.f32 0.0, %v1286
      %1288 = vmatmul.bf16.gmra.mxu0 %v586
      %v1289 = vpop.f32.mrf.mxu0
      %v1290 = vadd.f32 0.0, %v1289
      %v1291 = vpop.f32.mrf.mxu0
      %v1292 = vadd.f32 0.0, %v1291
      %1293 = vmatmul.bf16.gmra.mxu0 %v587
      %v1294 = vpop.f32.mrf.mxu0
      %v1295 = vadd.f32 0.0, %v1294
      %v1296 = vpop.f32.mrf.mxu0
      %v1297 = vadd.f32 0.0, %v1296
      %1298 = vdwg.mxu0
      %1299 = vmatpush.bf16.msra.mxu0 %v1177
      %1300 = vmatpush.bf16.msra.mxu0 %v1176
      %1301 = vmatpush.bf16.msra.mxu0 %v1175
      %1302 = vmatpush.bf16.msra.mxu0 %v1174
      %1303 = vmatpush.bf16.msra.mxu0 %v1173
      %1304 = vmatpush.bf16.msra.mxu0 %v1172
      %1305 = vmatpush.bf16.msra.mxu0 %v1171
      %1306 = vmatpush.bf16.msra.mxu0 %v1170
      %1307 = vmatmul.bf16.gmra.mxu0 %v685
      %v1308 = vpop.f32.mrf.mxu0
      %v1309 = vadd.f32 %v1220, %v1308
      %v1310 = vpop.f32.mrf.mxu0
      %v1311 = vadd.f32 %v1222, %v1310
      %1312 = vmatmul.bf16.gmra.mxu0 %v697
      %v1313 = vpop.f32.mrf.mxu0
      %v1314 = vadd.f32 %v1225, %v1313
      %v1315 = vpop.f32.mrf.mxu0
      %v1316 = vadd.f32 %v1227, %v1315
      %1317 = vmatmul.bf16.gmra.mxu0 %v709
      %v1318 = vpop.f32.mrf.mxu0
      %v1319 = vadd.f32 %v1230, %v1318
      %v1320 = vpop.f32.mrf.mxu0
      %v1321 = vadd.f32 %v1232, %v1320
      %1322 = vmatmul.bf16.gmra.mxu0 %v721
      %v1323 = vpop.f32.mrf.mxu0
      %v1324 = vadd.f32 %v1235, %v1323
      %v1325 = vpop.f32.mrf.mxu0
      %v1326 = vadd.f32 %v1237, %v1325
      %1327 = vmatmul.bf16.gmra.mxu0 %v733
      %v1328 = vpop.f32.mrf.mxu0
      %v1329 = vadd.f32 %v1240, %v1328
      %v1330 = vpop.f32.mrf.mxu0
      %v1331 = vadd.f32 %v1242, %v1330
      %1332 = vmatmul.bf16.gmra.mxu0 %v745
      %v1333 = vpop.f32.mrf.mxu0
      %v1334 = vadd.f32 %v1245, %v1333
      %v1335 = vpop.f32.mrf.mxu0
      %v1336 = vadd.f32 %v1247, %v1335
      %1337 = vmatmul.bf16.gmra.mxu0 %v757
      %v1338 = vpop.f32.mrf.mxu0
      %v1339 = vadd.f32 %v1250, %v1338
      %v1340 = vpop.f32.mrf.mxu0
      %v1341 = vadd.f32 %v1252, %v1340
      %1342 = vmatmul.bf16.gmra.mxu0 %v769
      %v1343 = vpop.f32.mrf.mxu0
      %v1344 = vadd.f32 %v1255, %v1343
      %v1345 = vpop.f32.mrf.mxu0
      %v1346 = vadd.f32 %v1257, %v1345
      %1347 = vmatmul.bf16.gmra.mxu0 %v781
      %v1348 = vpop.f32.mrf.mxu0
      %v1349 = vadd.f32 %v1260, %v1348
      %v1350 = vpop.f32.mrf.mxu0
      %v1351 = vadd.f32 %v1262, %v1350
      %1352 = vmatmul.bf16.gmra.mxu0 %v793
      %v1353 = vpop.f32.mrf.mxu0
      %v1354 = vadd.f32 %v1265, %v1353
      %v1355 = vpop.f32.mrf.mxu0
      %v1356 = vadd.f32 %v1267, %v1355
      %1357 = vmatmul.bf16.gmra.mxu0 %v805
      %v1358 = vpop.f32.mrf.mxu0
      %v1359 = vadd.f32 %v1270, %v1358
      %v1360 = vpop.f32.mrf.mxu0
      %v1361 = vadd.f32 %v1272, %v1360
      %1362 = vmatmul.bf16.gmra.mxu0 %v817
      %v1363 = vpop.f32.mrf.mxu0
      %v1364 = vadd.f32 %v1275, %v1363
      %v1365 = vpop.f32.mrf.mxu0
      %v1366 = vadd.f32 %v1277, %v1365
      %1367 = vmatmul.bf16.gmra.mxu0 %v829
      %v1368 = vpop.f32.mrf.mxu0
      %v1369 = vadd.f32 %v1280, %v1368
      %v1370 = vpop.f32.mrf.mxu0
      %v1371 = vadd.f32 %v1282, %v1370
      %1372 = vmatmul.bf16.gmra.mxu0 %v841
      %v1373 = vpop.f32.mrf.mxu0
      %v1374 = vadd.f32 %v1285, %v1373
      %v1375 = vpop.f32.mrf.mxu0
      %v1376 = vadd.f32 %v1287, %v1375
      %1377 = vmatmul.bf16.gmra.mxu0 %v853
      %v1378 = vpop.f32.mrf.mxu0
      %v1379 = vadd.f32 %v1290, %v1378
      %v1380 = vpop.f32.mrf.mxu0
      %v1381 = vadd.f32 %v1292, %v1380
      %1382 = vmatmul.bf16.gmra.mxu0 %v865
      %v1383 = vpop.f32.mrf.mxu0
      %v1384 = vadd.f32 %v1295, %v1383
      %v1385 = vpop.f32.mrf.mxu0
      %v1386 = vadd.f32 %v1297, %v1385
      %1387 = vdwg.mxu0
      %1388 = vmatpush.bf16.msra.mxu0 %v1185
      %1389 = vmatpush.bf16.msra.mxu0 %v1184
      %1390 = vmatpush.bf16.msra.mxu0 %v1183
      %1391 = vmatpush.bf16.msra.mxu0 %v1182
      %1392 = vmatpush.bf16.msra.mxu0 %v1181
      %1393 = vmatpush.bf16.msra.mxu0 %v1180
      %1394 = vmatpush.bf16.msra.mxu0 %v1179
      %1395 = vmatpush.bf16.msra.mxu0 %v1178
      %1396 = vmatmul.bf16.gmra.mxu0 %v902
      %v1397 = vpop.f32.mrf.mxu0
      %v1398 = vadd.f32 %v1309, %v1397
      %v1399 = vpop.f32.mrf.mxu0
      %v1400 = vadd.f32 %v1311, %v1399
      %1401 = vmatmul.bf16.gmra.mxu0 %v905
      %v1402 = vpop.f32.mrf.mxu0
      %v1403 = vadd.f32 %v1314, %v1402
      %v1404 = vpop.f32.mrf.mxu0
      %v1405 = vadd.f32 %v1316, %v1404
      %1406 = vmatmul.bf16.gmra.mxu0 %v908
      %v1407 = vpop.f32.mrf.mxu0
      %v1408 = vadd.f32 %v1319, %v1407
      %v1409 = vpop.f32.mrf.mxu0
      %v1410 = vadd.f32 %v1321, %v1409
      %1411 = vmatmul.bf16.gmra.mxu0 %v911
      %v1412 = vpop.f32.mrf.mxu0
      %v1413 = vadd.f32 %v1324, %v1412
      %v1414 = vpop.f32.mrf.mxu0
      %v1415 = vadd.f32 %v1326, %v1414
      %1416 = vmatmul.bf16.gmra.mxu0 %v914
      %v1417 = vpop.f32.mrf.mxu0
      %v1418 = vadd.f32 %v1329, %v1417
      %v1419 = vpop.f32.mrf.mxu0
      %v1420 = vadd.f32 %v1331, %v1419
      %1421 = vmatmul.bf16.gmra.mxu0 %v917
      %v1422 = vpop.f32.mrf.mxu0
      %v1423 = vadd.f32 %v1334, %v1422
      %v1424 = vpop.f32.mrf.mxu0
      %v1425 = vadd.f32 %v1336, %v1424
      %1426 = vmatmul.bf16.gmra.mxu0 %v920
      %v1427 = vpop.f32.mrf.mxu0
      %v1428 = vadd.f32 %v1339, %v1427
      %v1429 = vpop.f32.mrf.mxu0
      %v1430 = vadd.f32 %v1341, %v1429
      %1431 = vmatmul.bf16.gmra.mxu0 %v923
      %v1432 = vpop.f32.mrf.mxu0
      %v1433 = vadd.f32 %v1344, %v1432
      %v1434 = vpop.f32.mrf.mxu0
      %v1435 = vadd.f32 %v1346, %v1434
      %1436 = vmatmul.bf16.gmra.mxu0 %v926
      %v1437 = vpop.f32.mrf.mxu0
      %v1438 = vadd.f32 %v1349, %v1437
      %v1439 = vpop.f32.mrf.mxu0
      %v1440 = vadd.f32 %v1351, %v1439
      %1441 = vmatmul.bf16.gmra.mxu0 %v929
      %v1442 = vpop.f32.mrf.mxu0
      %v1443 = vadd.f32 %v1354, %v1442
      %v1444 = vpop.f32.mrf.mxu0
      %v1445 = vadd.f32 %v1356, %v1444
      %1446 = vmatmul.bf16.gmra.mxu0 %v932
      %v1447 = vpop.f32.mrf.mxu0
      %v1448 = vadd.f32 %v1359, %v1447
      %v1449 = vpop.f32.mrf.mxu0
      %v1450 = vadd.f32 %v1361, %v1449
      %1451 = vmatmul.bf16.gmra.mxu0 %v935
      %v1452 = vpop.f32.mrf.mxu0
      %v1453 = vadd.f32 %v1364, %v1452
      %v1454 = vpop.f32.mrf.mxu0
      %v1455 = vadd.f32 %v1366, %v1454
      %1456 = vmatmul.bf16.gmra.mxu0 %v938
      %v1457 = vpop.f32.mrf.mxu0
      %v1458 = vadd.f32 %v1369, %v1457
      %v1459 = vpop.f32.mrf.mxu0
      %v1460 = vadd.f32 %v1371, %v1459
      %1461 = vmatmul.bf16.gmra.mxu0 %v941
      %v1462 = vpop.f32.mrf.mxu0
      %v1463 = vadd.f32 %v1374, %v1462
      %v1464 = vpop.f32.mrf.mxu0
      %v1465 = vadd.f32 %v1376, %v1464
      %1466 = vmatmul.bf16.gmra.mxu0 %v944
      %v1467 = vpop.f32.mrf.mxu0
      %v1468 = vadd.f32 %v1379, %v1467
      %v1469 = vpop.f32.mrf.mxu0
      %v1470 = vadd.f32 %v1381, %v1469
      %1471 = vmatmul.bf16.gmra.mxu0 %v947
      %v1472 = vpop.f32.mrf.mxu0
      %v1473 = vadd.f32 %v1384, %v1472
      %v1474 = vpop.f32.mrf.mxu0
      %v1475 = vadd.f32 %v1386, %v1474
      %1476 = vdwg.mxu0
      %v1525 = vunpack.c.l.b16 %v969
      %v1526 = vunpack.c.l.b16 %v970
      %v1527 = vunpack.c.l.b16 %v971
      %v1528 = vunpack.c.l.b16 %v972
      %v1529 = vunpack.c.l.b16 %v973
      %v1530 = vunpack.c.l.b16 %v974
      %v1531 = vunpack.c.l.b16 %v975
      %v1532 = vunpack.c.l.b16 %v976
      %v1533 = vunpack.c.l.b16 %v977
      %v1534 = vunpack.c.l.b16 %v978
      %v1535 = vunpack.c.l.b16 %v979
      %v1536 = vunpack.c.l.b16 %v980
      %v1537 = vunpack.c.l.b16 %v981
      %v1538 = vunpack.c.l.b16 %v982
      %v1539 = vunpack.c.l.b16 %v983
      %v1540 = vunpack.c.l.b16 %v984
      %v1541 = vunpack.c.l.b16 %v985
      %v1542 = vunpack.c.l.b16 %v986
      %v1543 = vunpack.c.l.b16 %v987
      %v1544 = vunpack.c.l.b16 %v988
      %v1545 = vunpack.c.l.b16 %v989
      %v1546 = vunpack.c.l.b16 %v990
      %v1547 = vunpack.c.l.b16 %v991
      %v1548 = vunpack.c.l.b16 %v992
      %v1549 = vunpack.c.l.b16 %v993
      %v1550 = vunpack.c.l.b16 %v994
      %v1551 = vunpack.c.l.b16 %v995
      %v1552 = vunpack.c.l.b16 %v996
      %v1553 = vunpack.c.l.b16 %v997
      %v1554 = vunpack.c.l.b16 %v998
      %v1555 = vunpack.c.l.b16 %v999
      %v1556 = vunpack.c.l.b16 %v1000
      %v1557 = vunpack.c.l.b16 %v1001
      %v1558 = vunpack.c.l.b16 %v1002
      %v1559 = vunpack.c.l.b16 %v1003
      %v1560 = vunpack.c.l.b16 %v1004
      %v1561 = vunpack.c.l.b16 %v1005
      %v1562 = vunpack.c.l.b16 %v1006
      %v1563 = vunpack.c.l.b16 %v1007
      %v1564 = vunpack.c.l.b16 %v1008
      %v1565 = vunpack.c.l.b16 %v1009
      %v1566 = vunpack.c.l.b16 %v1010
      %v1567 = vunpack.c.l.b16 %v1011
      %v1568 = vunpack.c.l.b16 %v1012
      %v1569 = vunpack.c.l.b16 %v1013
      %v1570 = vunpack.c.l.b16 %v1014
      %v1571 = vunpack.c.l.b16 %v1015
      %v1572 = vunpack.c.l.b16 %v1016
      %v1573 = vpack.c.b16 %v1526, %v1525
      %v1574 = vpack.c.b16 %v1528, %v1527
      %v1575 = vpack.c.b16 %v1530, %v1529
      %v1576 = vpack.c.b16 %v1532, %v1531
      %v1577 = vpack.c.b16 %v1534, %v1533
      %v1578 = vpack.c.b16 %v1536, %v1535
      %v1579 = vpack.c.b16 %v1538, %v1537
      %v1580 = vpack.c.b16 %v1540, %v1539
      %v1581 = vpack.c.b16 %v1542, %v1541
      %v1582 = vpack.c.b16 %v1544, %v1543
      %v1583 = vpack.c.b16 %v1546, %v1545
      %v1584 = vpack.c.b16 %v1548, %v1547
      %v1585 = vpack.c.b16 %v1550, %v1549
      %v1586 = vpack.c.b16 %v1552, %v1551
      %v1587 = vpack.c.b16 %v1554, %v1553
      %v1588 = vpack.c.b16 %v1556, %v1555
      %v1589 = vpack.c.b16 %v1558, %v1557
      %v1590 = vpack.c.b16 %v1560, %v1559
      %v1591 = vpack.c.b16 %v1562, %v1561
      %v1592 = vpack.c.b16 %v1564, %v1563
      %v1593 = vpack.c.b16 %v1566, %v1565
      %v1594 = vpack.c.b16 %v1568, %v1567
      %v1595 = vpack.c.b16 %v1570, %v1569
      %v1596 = vpack.c.b16 %v1572, %v1571
      %1621 = vmatpush.bf16.msra.mxu0 %v1580
      %1622 = vmatpush.bf16.msra.mxu0 %v1579
      %1623 = vmatpush.bf16.msra.mxu0 %v1578
      %1624 = vmatpush.bf16.msra.mxu0 %v1577
      %1625 = vmatpush.bf16.msra.mxu0 %v1576
      %1626 = vmatpush.bf16.msra.mxu0 %v1575
      %1627 = vmatpush.bf16.msra.mxu0 %v1574
      %1628 = vmatpush.bf16.msra.mxu0 %v1573
      %1629 = vmatmul.bf16.gmra.mxu0 %v571
      %v1630 = vpop.f32.mrf.mxu0
      %v1631 = vadd.f32 %v1398, %v1630
      %v1632 = vpop.f32.mrf.mxu0
      %v1633 = vadd.f32 %v1400, %v1632
      %1634 = vmatmul.bf16.gmra.mxu0 %v572
      %v1635 = vpop.f32.mrf.mxu0
      %v1636 = vadd.f32 %v1403, %v1635
      %v1637 = vpop.f32.mrf.mxu0
      %v1638 = vadd.f32 %v1405, %v1637
      %1639 = vmatmul.bf16.gmra.mxu0 %v573
      %v1640 = vpop.f32.mrf.mxu0
      %v1641 = vadd.f32 %v1408, %v1640
      %v1642 = vpop.f32.mrf.mxu0
      %v1643 = vadd.f32 %v1410, %v1642
      %1644 = vmatmul.bf16.gmra.mxu0 %v574
      %v1645 = vpop.f32.mrf.mxu0
      %v1646 = vadd.f32 %v1413, %v1645
      %v1647 = vpop.f32.mrf.mxu0
      %v1648 = vadd.f32 %v1415, %v1647
      %1649 = vmatmul.bf16.gmra.mxu0 %v575
      %v1650 = vpop.f32.mrf.mxu0
      %v1651 = vadd.f32 %v1418, %v1650
      %v1652 = vpop.f32.mrf.mxu0
      %v1653 = vadd.f32 %v1420, %v1652
      %1654 = vmatmul.bf16.gmra.mxu0 %v576
      %v1655 = vpop.f32.mrf.mxu0
      %v1656 = vadd.f32 %v1423, %v1655
      %v1657 = vpop.f32.mrf.mxu0
      %v1658 = vadd.f32 %v1425, %v1657
      %1659 = vmatmul.bf16.gmra.mxu0 %v577
      %v1660 = vpop.f32.mrf.mxu0
      %v1661 = vadd.f32 %v1428, %v1660
      %v1662 = vpop.f32.mrf.mxu0
      %v1663 = vadd.f32 %v1430, %v1662
      %1664 = vmatmul.bf16.gmra.mxu0 %v578
      %v1665 = vpop.f32.mrf.mxu0
      %v1666 = vadd.f32 %v1433, %v1665
      %v1667 = vpop.f32.mrf.mxu0
      %v1668 = vadd.f32 %v1435, %v1667
      %1669 = vmatmul.bf16.gmra.mxu0 %v579
      %v1670 = vpop.f32.mrf.mxu0
      %v1671 = vadd.f32 %v1438, %v1670
      %v1672 = vpop.f32.mrf.mxu0
      %v1673 = vadd.f32 %v1440, %v1672
      %1674 = vmatmul.bf16.gmra.mxu0 %v580
      %v1675 = vpop.f32.mrf.mxu0
      %v1676 = vadd.f32 %v1443, %v1675
      %v1677 = vpop.f32.mrf.mxu0
      %v1678 = vadd.f32 %v1445, %v1677
      %1679 = vmatmul.bf16.gmra.mxu0 %v581
      %v1680 = vpop.f32.mrf.mxu0
      %v1681 = vadd.f32 %v1448, %v1680
      %v1682 = vpop.f32.mrf.mxu0
      %v1683 = vadd.f32 %v1450, %v1682
      %1684 = vmatmul.bf16.gmra.mxu0 %v582
      %v1685 = vpop.f32.mrf.mxu0
      %v1686 = vadd.f32 %v1453, %v1685
      %v1687 = vpop.f32.mrf.mxu0
      %v1688 = vadd.f32 %v1455, %v1687
      %1689 = vmatmul.bf16.gmra.mxu0 %v583
      %v1690 = vpop.f32.mrf.mxu0
      %v1691 = vadd.f32 %v1458, %v1690
      %v1692 = vpop.f32.mrf.mxu0
      %v1693 = vadd.f32 %v1460, %v1692
      %1694 = vmatmul.bf16.gmra.mxu0 %v584
      %v1695 = vpop.f32.mrf.mxu0
      %v1696 = vadd.f32 %v1463, %v1695
      %v1697 = vpop.f32.mrf.mxu0
      %v1698 = vadd.f32 %v1465, %v1697
      %1699 = vmatmul.bf16.gmra.mxu0 %v585
      %v1700 = vpop.f32.mrf.mxu0
      %v1701 = vadd.f32 %v1468, %v1700
      %v1702 = vpop.f32.mrf.mxu0
      %v1703 = vadd.f32 %v1470, %v1702
      %1704 = vmatmul.bf16.gmra.mxu0 %v586
      %v1705 = vpop.f32.mrf.mxu0
      %v1706 = vadd.f32 %v1473, %v1705
      %v1707 = vpop.f32.mrf.mxu0
      %v1708 = vadd.f32 %v1475, %v1707
      %1709 = vdwg.mxu0
      %1710 = vmatpush.bf16.msra.mxu0 %v1588
      %1711 = vmatpush.bf16.msra.mxu0 %v1587
      %1712 = vmatpush.bf16.msra.mxu0 %v1586
      %1713 = vmatpush.bf16.msra.mxu0 %v1585
      %1714 = vmatpush.bf16.msra.mxu0 %v1584
      %1715 = vmatpush.bf16.msra.mxu0 %v1583
      %1716 = vmatpush.bf16.msra.mxu0 %v1582
      %1717 = vmatpush.bf16.msra.mxu0 %v1581
      %1718 = vmatmul.bf16.gmra.mxu0 %v673
      %v1719 = vpop.f32.mrf.mxu0
      %v1720 = vadd.f32 %v1631, %v1719
      %v1721 = vpop.f32.mrf.mxu0
      %v1722 = vadd.f32 %v1633, %v1721
      %1723 = vmatmul.bf16.gmra.mxu0 %v685
      %v1724 = vpop.f32.mrf.mxu0
      %v1725 = vadd.f32 %v1636, %v1724
      %v1726 = vpop.f32.mrf.mxu0
      %v1727 = vadd.f32 %v1638, %v1726
      %1728 = vmatmul.bf16.gmra.mxu0 %v697
      %v1729 = vpop.f32.mrf.mxu0
      %v1730 = vadd.f32 %v1641, %v1729
      %v1731 = vpop.f32.mrf.mxu0
      %v1732 = vadd.f32 %v1643, %v1731
      %1733 = vmatmul.bf16.gmra.mxu0 %v709
      %v1734 = vpop.f32.mrf.mxu0
      %v1735 = vadd.f32 %v1646, %v1734
      %v1736 = vpop.f32.mrf.mxu0
      %v1737 = vadd.f32 %v1648, %v1736
      %1738 = vmatmul.bf16.gmra.mxu0 %v721
      %v1739 = vpop.f32.mrf.mxu0
      %v1740 = vadd.f32 %v1651, %v1739
      %v1741 = vpop.f32.mrf.mxu0
      %v1742 = vadd.f32 %v1653, %v1741
      %1743 = vmatmul.bf16.gmra.mxu0 %v733
      %v1744 = vpop.f32.mrf.mxu0
      %v1745 = vadd.f32 %v1656, %v1744
      %v1746 = vpop.f32.mrf.mxu0
      %v1747 = vadd.f32 %v1658, %v1746
      %1748 = vmatmul.bf16.gmra.mxu0 %v745
      %v1749 = vpop.f32.mrf.mxu0
      %v1750 = vadd.f32 %v1661, %v1749
      %v1751 = vpop.f32.mrf.mxu0
      %v1752 = vadd.f32 %v1663, %v1751
      %1753 = vmatmul.bf16.gmra.mxu0 %v757
      %v1754 = vpop.f32.mrf.mxu0
      %v1755 = vadd.f32 %v1666, %v1754
      %v1756 = vpop.f32.mrf.mxu0
      %v1757 = vadd.f32 %v1668, %v1756
      %1758 = vmatmul.bf16.gmra.mxu0 %v769
      %v1759 = vpop.f32.mrf.mxu0
      %v1760 = vadd.f32 %v1671, %v1759
      %v1761 = vpop.f32.mrf.mxu0
      %v1762 = vadd.f32 %v1673, %v1761
      %1763 = vmatmul.bf16.gmra.mxu0 %v781
      %v1764 = vpop.f32.mrf.mxu0
      %v1765 = vadd.f32 %v1676, %v1764
      %v1766 = vpop.f32.mrf.mxu0
      %v1767 = vadd.f32 %v1678, %v1766
      %1768 = vmatmul.bf16.gmra.mxu0 %v793
      %v1769 = vpop.f32.mrf.mxu0
      %v1770 = vadd.f32 %v1681, %v1769
      %v1771 = vpop.f32.mrf.mxu0
      %v1772 = vadd.f32 %v1683, %v1771
      %1773 = vmatmul.bf16.gmra.mxu0 %v805
      %v1774 = vpop.f32.mrf.mxu0
      %v1775 = vadd.f32 %v1686, %v1774
      %v1776 = vpop.f32.mrf.mxu0
      %v1777 = vadd.f32 %v1688, %v1776
      %1778 = vmatmul.bf16.gmra.mxu0 %v817
      %v1779 = vpop.f32.mrf.mxu0
      %v1780 = vadd.f32 %v1691, %v1779
      %v1781 = vpop.f32.mrf.mxu0
      %v1782 = vadd.f32 %v1693, %v1781
      %1783 = vmatmul.bf16.gmra.mxu0 %v829
      %v1784 = vpop.f32.mrf.mxu0
      %v1785 = vadd.f32 %v1696, %v1784
      %v1786 = vpop.f32.mrf.mxu0
      %v1787 = vadd.f32 %v1698, %v1786
      %1788 = vmatmul.bf16.gmra.mxu0 %v841
      %v1789 = vpop.f32.mrf.mxu0
      %v1790 = vadd.f32 %v1701, %v1789
      %v1791 = vpop.f32.mrf.mxu0
      %v1792 = vadd.f32 %v1703, %v1791
      %1793 = vmatmul.bf16.gmra.mxu0 %v853
      %v1794 = vpop.f32.mrf.mxu0
      %v1795 = vadd.f32 %v1706, %v1794
      %v1796 = vpop.f32.mrf.mxu0
      %v1797 = vadd.f32 %v1708, %v1796
      %1798 = vdwg.mxu0
      %1799 = vmatpush.bf16.msra.mxu0 %v1596
      %1800 = vmatpush.bf16.msra.mxu0 %v1595
      %1801 = vmatpush.bf16.msra.mxu0 %v1594
      %1802 = vmatpush.bf16.msra.mxu0 %v1593
      %1803 = vmatpush.bf16.msra.mxu0 %v1592
      %1804 = vmatpush.bf16.msra.mxu0 %v1591
      %1805 = vmatpush.bf16.msra.mxu0 %v1590
      %1806 = vmatpush.bf16.msra.mxu0 %v1589
      %1807 = vmatmul.bf16.gmra.mxu0 %v899
      %v1808 = vpop.f32.mrf.mxu0
      %v1809 = vadd.f32 %v1720, %v1808
      %v1810 = vpop.f32.mrf.mxu0
      %v1811 = vadd.f32 %v1722, %v1810
      %1812 = vmatmul.bf16.gmra.mxu0 %v902
      %v1813 = vpop.f32.mrf.mxu0
      %v1814 = vadd.f32 %v1725, %v1813
      %v1815 = vpop.f32.mrf.mxu0
      %v1816 = vadd.f32 %v1727, %v1815
      %1817 = vmatmul.bf16.gmra.mxu0 %v905
      %v1818 = vpop.f32.mrf.mxu0
      %v1819 = vadd.f32 %v1730, %v1818
      %v1820 = vpop.f32.mrf.mxu0
      %v1821 = vadd.f32 %v1732, %v1820
      %1822 = vmatmul.bf16.gmra.mxu0 %v908
      %v1823 = vpop.f32.mrf.mxu0
      %v1824 = vadd.f32 %v1735, %v1823
      %v1825 = vpop.f32.mrf.mxu0
      %v1826 = vadd.f32 %v1737, %v1825
      %1827 = vmatmul.bf16.gmra.mxu0 %v911
      %v1828 = vpop.f32.mrf.mxu0
      %v1829 = vadd.f32 %v1740, %v1828
      %v1830 = vpop.f32.mrf.mxu0
      %v1831 = vadd.f32 %v1742, %v1830
      %1832 = vmatmul.bf16.gmra.mxu0 %v914
      %v1833 = vpop.f32.mrf.mxu0
      %v1834 = vadd.f32 %v1745, %v1833
      %v1835 = vpop.f32.mrf.mxu0
      %v1836 = vadd.f32 %v1747, %v1835
      %1837 = vmatmul.bf16.gmra.mxu0 %v917
      %v1838 = vpop.f32.mrf.mxu0
      %v1839 = vadd.f32 %v1750, %v1838
      %v1840 = vpop.f32.mrf.mxu0
      %v1841 = vadd.f32 %v1752, %v1840
      %1842 = vmatmul.bf16.gmra.mxu0 %v920
      %v1843 = vpop.f32.mrf.mxu0
      %v1844 = vadd.f32 %v1755, %v1843
      %v1845 = vpop.f32.mrf.mxu0
      %v1846 = vadd.f32 %v1757, %v1845
      %1847 = vmatmul.bf16.gmra.mxu0 %v923
      %v1848 = vpop.f32.mrf.mxu0
      %v1849 = vadd.f32 %v1760, %v1848
      %v1850 = vpop.f32.mrf.mxu0
      %v1851 = vadd.f32 %v1762, %v1850
      %1852 = vmatmul.bf16.gmra.mxu0 %v926
      %v1853 = vpop.f32.mrf.mxu0
      %v1854 = vadd.f32 %v1765, %v1853
      %v1855 = vpop.f32.mrf.mxu0
      %v1856 = vadd.f32 %v1767, %v1855
      %1857 = vmatmul.bf16.gmra.mxu0 %v929
      %v1858 = vpop.f32.mrf.mxu0
      %v1859 = vadd.f32 %v1770, %v1858
      %v1860 = vpop.f32.mrf.mxu0
      %v1861 = vadd.f32 %v1772, %v1860
      %1862 = vmatmul.bf16.gmra.mxu0 %v932
      %v1863 = vpop.f32.mrf.mxu0
      %v1864 = vadd.f32 %v1775, %v1863
      %v1865 = vpop.f32.mrf.mxu0
      %v1866 = vadd.f32 %v1777, %v1865
      %1867 = vmatmul.bf16.gmra.mxu0 %v935
      %v1868 = vpop.f32.mrf.mxu0
      %v1869 = vadd.f32 %v1780, %v1868
      %v1870 = vpop.f32.mrf.mxu0
      %v1871 = vadd.f32 %v1782, %v1870
      %1872 = vmatmul.bf16.gmra.mxu0 %v938
      %v1873 = vpop.f32.mrf.mxu0
      %v1874 = vadd.f32 %v1785, %v1873
      %v1875 = vpop.f32.mrf.mxu0
      %v1876 = vadd.f32 %v1787, %v1875
      %1877 = vmatmul.bf16.gmra.mxu0 %v941
      %v1878 = vpop.f32.mrf.mxu0
      %v1879 = vadd.f32 %v1790, %v1878
      %v1880 = vpop.f32.mrf.mxu0
      %v1881 = vadd.f32 %v1792, %v1880
      %1882 = vmatmul.bf16.gmra.mxu0 %v944
      %v1883 = vpop.f32.mrf.mxu0
      %v1884 = vadd.f32 %v1795, %v1883
      %v1885 = vpop.f32.mrf.mxu0
      %v1886 = vadd.f32 %v1797, %v1885
      %1887 = vdwg.mxu0
      %s1888 = scalar_lea.vmem %s3, 384
      %v1889 = vld [vmem:[%s1888] sm:$0xf]
      %v1890 = vld [vmem:[%s1888 + $0x4] sm:$0xf]
      %v1891 = vld [vmem:[%s1888 + $0x8] sm:$0xf]
      %v1892 = vld [vmem:[%s1888 + $0xc] sm:$0xf]
      %v1893 = vld [vmem:[%s1888 + $0x10] sm:$0xf]
      %v1894 = vld [vmem:[%s1888 + $0x14] sm:$0xf]
      %v1895 = vld [vmem:[%s1888 + $0x18] sm:$0xf]
      %v1896 = vld [vmem:[%s1888 + $0x1c] sm:$0xf]
      %v1897 = vld [vmem:[%s1888 + $0x20] sm:$0xf]
      %v1898 = vld [vmem:[%s1888 + $0x24] sm:$0xf]
      %v1899 = vld [vmem:[%s1888 + $0x28] sm:$0xf]
      %v1900 = vld [vmem:[%s1888 + $0x2c] sm:$0xf]
      %v1901 = vld [vmem:[%s1888 + $0x30] sm:$0xf]
      %v1902 = vld [vmem:[%s1888 + $0x34] sm:$0xf]
      %v1903 = vld [vmem:[%s1888 + $0x38] sm:$0xf]
      %v1904 = vld [vmem:[%s1888 + $0x3c] sm:$0xf]
      %v1905 = vld [vmem:[%s1888 + $0x40] sm:$0xf]
      %v1906 = vld [vmem:[%s1888 + $0x44] sm:$0xf]
      %v1907 = vld [vmem:[%s1888 + $0x48] sm:$0xf]
      %v1908 = vld [vmem:[%s1888 + $0x4c] sm:$0xf]
      %v1909 = vld [vmem:[%s1888 + $0x50] sm:$0xf]
      %v1910 = vld [vmem:[%s1888 + $0x54] sm:$0xf]
      %v1911 = vld [vmem:[%s1888 + $0x58] sm:$0xf]
      %v1912 = vld [vmem:[%s1888 + $0x5c] sm:$0xf]
      %v1913 = vld [vmem:[%s1888 + $0x60] sm:$0xf]
      %v1914 = vld [vmem:[%s1888 + $0x64] sm:$0xf]
      %v1915 = vld [vmem:[%s1888 + $0x68] sm:$0xf]
      %v1916 = vld [vmem:[%s1888 + $0x6c] sm:$0xf]
      %v1917 = vld [vmem:[%s1888 + $0x70] sm:$0xf]
      %v1918 = vld [vmem:[%s1888 + $0x74] sm:$0xf]
      %v1919 = vld [vmem:[%s1888 + $0x78] sm:$0xf]
      %v1920 = vld [vmem:[%s1888 + $0x7c] sm:$0xf]
      %v1921 = vld [vmem:[%s1888 + $0x80] sm:$0xf]
      %v1922 = vld [vmem:[%s1888 + $0x84] sm:$0xf]
      %v1923 = vld [vmem:[%s1888 + $0x88] sm:$0xf]
      %v1924 = vld [vmem:[%s1888 + $0x8c] sm:$0xf]
      %v1925 = vld [vmem:[%s1888 + $0x90] sm:$0xf]
      %v1926 = vld [vmem:[%s1888 + $0x94] sm:$0xf]
      %v1927 = vld [vmem:[%s1888 + $0x98] sm:$0xf]
      %v1928 = vld [vmem:[%s1888 + $0x9c] sm:$0xf]
      %v1929 = vld [vmem:[%s1888 + $0xa0] sm:$0xf]
      %v1930 = vld [vmem:[%s1888 + $0xa4] sm:$0xf]
      %v1931 = vld [vmem:[%s1888 + $0xa8] sm:$0xf]
      %v1932 = vld [vmem:[%s1888 + $0xac] sm:$0xf]
      %v1933 = vld [vmem:[%s1888 + $0xb0] sm:$0xf]
      %v1934 = vld [vmem:[%s1888 + $0xb4] sm:$0xf]
      %v1935 = vld [vmem:[%s1888 + $0xb8] sm:$0xf]
      %v1936 = vld [vmem:[%s1888 + $0xbc] sm:$0xf]
      %v1985 = vunpack.c.l.b16 %v1889
      %v1986 = vunpack.c.l.b16 %v1890
      %v1987 = vunpack.c.l.b16 %v1891
      %v1988 = vunpack.c.l.b16 %v1892
      %v1989 = vunpack.c.l.b16 %v1893
      %v1990 = vunpack.c.l.b16 %v1894
      %v1991 = vunpack.c.l.b16 %v1895
      %v1992 = vunpack.c.l.b16 %v1896
      %v1993 = vunpack.c.l.b16 %v1897
      %v1994 = vunpack.c.l.b16 %v1898
      %v1995 = vunpack.c.l.b16 %v1899
      %v1996 = vunpack.c.l.b16 %v1900
      %v1997 = vunpack.c.l.b16 %v1901
      %v1998 = vunpack.c.l.b16 %v1902
      %v1999 = vunpack.c.l.b16 %v1903
      %v2000 = vunpack.c.l.b16 %v1904
      %v2001 = vunpack.c.l.b16 %v1905
      %v2002 = vunpack.c.l.b16 %v1906
      %v2003 = vunpack.c.l.b16 %v1907
      %v2004 = vunpack.c.l.b16 %v1908
      %v2005 = vunpack.c.l.b16 %v1909
      %v2006 = vunpack.c.l.b16 %v1910
      %v2007 = vunpack.c.l.b16 %v1911
      %v2008 = vunpack.c.l.b16 %v1912
      %v2009 = vunpack.c.l.b16 %v1913
      %v2010 = vunpack.c.l.b16 %v1914
      %v2011 = vunpack.c.l.b16 %v1915
      %v2012 = vunpack.c.l.b16 %v1916
      %v2013 = vunpack.c.l.b16 %v1917
      %v2014 = vunpack.c.l.b16 %v1918
      %v2015 = vunpack.c.l.b16 %v1919
      %v2016 = vunpack.c.l.b16 %v1920
      %v2017 = vunpack.c.l.b16 %v1921
      %v2018 = vunpack.c.l.b16 %v1922
      %v2019 = vunpack.c.l.b16 %v1923
      %v2020 = vunpack.c.l.b16 %v1924
      %v2021 = vunpack.c.l.b16 %v1925
      %v2022 = vunpack.c.l.b16 %v1926
      %v2023 = vunpack.c.l.b16 %v1927
      %v2024 = vunpack.c.l.b16 %v1928
      %v2025 = vunpack.c.l.b16 %v1929
      %v2026 = vunpack.c.l.b16 %v1930
      %v2027 = vunpack.c.l.b16 %v1931
      %v2028 = vunpack.c.l.b16 %v1932
      %v2029 = vunpack.c.l.b16 %v1933
      %v2030 = vunpack.c.l.b16 %v1934
      %v2031 = vunpack.c.l.b16 %v1935
      %v2032 = vunpack.c.l.b16 %v1936
      %v2033 = vpack.c.b16 %v1986, %v1985
      %v2034 = vpack.c.b16 %v1988, %v1987
      %v2035 = vpack.c.b16 %v1990, %v1989
      %v2036 = vpack.c.b16 %v1992, %v1991
      %v2037 = vpack.c.b16 %v1994, %v1993
      %v2038 = vpack.c.b16 %v1996, %v1995
      %v2039 = vpack.c.b16 %v1998, %v1997
      %v2040 = vpack.c.b16 %v2000, %v1999
      %v2041 = vpack.c.b16 %v2002, %v2001
      %v2042 = vpack.c.b16 %v2004, %v2003
      %v2043 = vpack.c.b16 %v2006, %v2005
      %v2044 = vpack.c.b16 %v2008, %v2007
      %v2045 = vpack.c.b16 %v2010, %v2009
      %v2046 = vpack.c.b16 %v2012, %v2011
      %v2047 = vpack.c.b16 %v2014, %v2013
      %v2048 = vpack.c.b16 %v2016, %v2015
      %v2049 = vpack.c.b16 %v2018, %v2017
      %v2050 = vpack.c.b16 %v2020, %v2019
      %v2051 = vpack.c.b16 %v2022, %v2021
      %v2052 = vpack.c.b16 %v2024, %v2023
      %v2053 = vpack.c.b16 %v2026, %v2025
      %v2054 = vpack.c.b16 %v2028, %v2027
      %v2055 = vpack.c.b16 %v2030, %v2029
      %v2056 = vpack.c.b16 %v2032, %v2031
      %2081 = vmatpush.bf16.msra.mxu0 %v2040
      %2082 = vmatpush.bf16.msra.mxu0 %v2039
      %2083 = vmatpush.bf16.msra.mxu0 %v2038
      %2084 = vmatpush.bf16.msra.mxu0 %v2037
      %2085 = vmatpush.bf16.msra.mxu0 %v2036
      %2086 = vmatpush.bf16.msra.mxu0 %v2035
      %2087 = vmatpush.bf16.msra.mxu0 %v2034
      %2088 = vmatpush.bf16.msra.mxu0 %v2033
      %2089 = vmatmul.bf16.gmra.mxu0 %v573
      %v2090 = vpop.f32.mrf.mxu0
      %v2091 = vadd.f32 0.0, %v2090
      %v2092 = vpop.f32.mrf.mxu0
      %v2093 = vadd.f32 0.0, %v2092
      %2094 = vmatmul.bf16.gmra.mxu0 %v574
      %v2095 = vpop.f32.mrf.mxu0
      %v2096 = vadd.f32 0.0, %v2095
      %v2097 = vpop.f32.mrf.mxu0
      %v2098 = vadd.f32 0.0, %v2097
      %2099 = vmatmul.bf16.gmra.mxu0 %v575
      %v2100 = vpop.f32.mrf.mxu0
      %v2101 = vadd.f32 0.0, %v2100
      %v2102 = vpop.f32.mrf.mxu0
      %v2103 = vadd.f32 0.0, %v2102
      %2104 = vmatmul.bf16.gmra.mxu0 %v576
      %v2105 = vpop.f32.mrf.mxu0
      %v2106 = vadd.f32 0.0, %v2105
      %v2107 = vpop.f32.mrf.mxu0
      %v2108 = vadd.f32 0.0, %v2107
      %2109 = vmatmul.bf16.gmra.mxu0 %v577
      %v2110 = vpop.f32.mrf.mxu0
      %v2111 = vadd.f32 0.0, %v2110
      %v2112 = vpop.f32.mrf.mxu0
      %v2113 = vadd.f32 0.0, %v2112
      %2114 = vmatmul.bf16.gmra.mxu0 %v578
      %v2115 = vpop.f32.mrf.mxu0
      %v2116 = vadd.f32 0.0, %v2115
      %v2117 = vpop.f32.mrf.mxu0
      %v2118 = vadd.f32 0.0, %v2117
      %2119 = vmatmul.bf16.gmra.mxu0 %v579
      %v2120 = vpop.f32.mrf.mxu0
      %v2121 = vadd.f32 0.0, %v2120
      %v2122 = vpop.f32.mrf.mxu0
      %v2123 = vadd.f32 0.0, %v2122
      %2124 = vmatmul.bf16.gmra.mxu0 %v580
      %v2125 = vpop.f32.mrf.mxu0
      %v2126 = vadd.f32 0.0, %v2125
      %v2127 = vpop.f32.mrf.mxu0
      %v2128 = vadd.f32 0.0, %v2127
      %2129 = vmatmul.bf16.gmra.mxu0 %v581
      %v2130 = vpop.f32.mrf.mxu0
      %v2131 = vadd.f32 0.0, %v2130
      %v2132 = vpop.f32.mrf.mxu0
      %v2133 = vadd.f32 0.0, %v2132
      %2134 = vmatmul.bf16.gmra.mxu0 %v582
      %v2135 = vpop.f32.mrf.mxu0
      %v2136 = vadd.f32 0.0, %v2135
      %v2137 = vpop.f32.mrf.mxu0
      %v2138 = vadd.f32 0.0, %v2137
      %2139 = vmatmul.bf16.gmra.mxu0 %v583
      %v2140 = vpop.f32.mrf.mxu0
      %v2141 = vadd.f32 0.0, %v2140
      %v2142 = vpop.f32.mrf.mxu0
      %v2143 = vadd.f32 0.0, %v2142
      %2144 = vmatmul.bf16.gmra.mxu0 %v584
      %v2145 = vpop.f32.mrf.mxu0
      %v2146 = vadd.f32 0.0, %v2145
      %v2147 = vpop.f32.mrf.mxu0
      %v2148 = vadd.f32 0.0, %v2147
      %2149 = vmatmul.bf16.gmra.mxu0 %v585
      %v2150 = vpop.f32.mrf.mxu0
      %v2151 = vadd.f32 0.0, %v2150
      %v2152 = vpop.f32.mrf.mxu0
      %v2153 = vadd.f32 0.0, %v2152
      %2154 = vmatmul.bf16.gmra.mxu0 %v586
      %v2155 = vpop.f32.mrf.mxu0
      %v2156 = vadd.f32 0.0, %v2155
      %v2157 = vpop.f32.mrf.mxu0
      %v2158 = vadd.f32 0.0, %v2157
      %2159 = vmatmul.bf16.gmra.mxu0 %v587
      %v2160 = vpop.f32.mrf.mxu0
      %v2161 = vadd.f32 0.0, %v2160
      %v2162 = vpop.f32.mrf.mxu0
      %v2163 = vadd.f32 0.0, %v2162
      %2164 = vmatmul.bf16.gmra.mxu0 %v588
      %v2165 = vpop.f32.mrf.mxu0
      %v2166 = vadd.f32 0.0, %v2165
      %v2167 = vpop.f32.mrf.mxu0
      %v2168 = vadd.f32 0.0, %v2167
      %2169 = vdwg.mxu0
      %2170 = vmatpush.bf16.msra.mxu0 %v2048
      %2171 = vmatpush.bf16.msra.mxu0 %v2047
      %2172 = vmatpush.bf16.msra.mxu0 %v2046
      %2173 = vmatpush.bf16.msra.mxu0 %v2045
      %2174 = vmatpush.bf16.msra.mxu0 %v2044
      %2175 = vmatpush.bf16.msra.mxu0 %v2043
      %2176 = vmatpush.bf16.msra.mxu0 %v2042
      %2177 = vmatpush.bf16.msra.mxu0 %v2041
      %2178 = vmatmul.bf16.gmra.mxu0 %v697
      %v2179 = vpop.f32.mrf.mxu0
      %v2180 = vadd.f32 %v2091, %v2179
      %v2181 = vpop.f32.mrf.mxu0
      %v2182 = vadd.f32 %v2093, %v2181
      %2183 = vmatmul.bf16.gmra.mxu0 %v709
      %v2184 = vpop.f32.mrf.mxu0
      %v2185 = vadd.f32 %v2096, %v2184
      %v2186 = vpop.f32.mrf.mxu0
      %v2187 = vadd.f32 %v2098, %v2186
      %2188 = vmatmul.bf16.gmra.mxu0 %v721
      %v2189 = vpop.f32.mrf.mxu0
      %v2190 = vadd.f32 %v2101, %v2189
      %v2191 = vpop.f32.mrf.mxu0
      %v2192 = vadd.f32 %v2103, %v2191
      %2193 = vmatmul.bf16.gmra.mxu0 %v733
      %v2194 = vpop.f32.mrf.mxu0
      %v2195 = vadd.f32 %v2106, %v2194
      %v2196 = vpop.f32.mrf.mxu0
      %v2197 = vadd.f32 %v2108, %v2196
      %2198 = vmatmul.bf16.gmra.mxu0 %v745
      %v2199 = vpop.f32.mrf.mxu0
      %v2200 = vadd.f32 %v2111, %v2199
      %v2201 = vpop.f32.mrf.mxu0
      %v2202 = vadd.f32 %v2113, %v2201
      %2203 = vmatmul.bf16.gmra.mxu0 %v757
      %v2204 = vpop.f32.mrf.mxu0
      %v2205 = vadd.f32 %v2116, %v2204
      %v2206 = vpop.f32.mrf.mxu0
      %v2207 = vadd.f32 %v2118, %v2206
      %2208 = vmatmul.bf16.gmra.mxu0 %v769
      %v2209 = vpop.f32.mrf.mxu0
      %v2210 = vadd.f32 %v2121, %v2209
      %v2211 = vpop.f32.mrf.mxu0
      %v2212 = vadd.f32 %v2123, %v2211
      %2213 = vmatmul.bf16.gmra.mxu0 %v781
      %v2214 = vpop.f32.mrf.mxu0
      %v2215 = vadd.f32 %v2126, %v2214
      %v2216 = vpop.f32.mrf.mxu0
      %v2217 = vadd.f32 %v2128, %v2216
      %2218 = vmatmul.bf16.gmra.mxu0 %v793
      %v2219 = vpop.f32.mrf.mxu0
      %v2220 = vadd.f32 %v2131, %v2219
      %v2221 = vpop.f32.mrf.mxu0
      %v2222 = vadd.f32 %v2133, %v2221
      %2223 = vmatmul.bf16.gmra.mxu0 %v805
      %v2224 = vpop.f32.mrf.mxu0
      %v2225 = vadd.f32 %v2136, %v2224
      %v2226 = vpop.f32.mrf.mxu0
      %v2227 = vadd.f32 %v2138, %v2226
      %2228 = vmatmul.bf16.gmra.mxu0 %v817
      %v2229 = vpop.f32.mrf.mxu0
      %v2230 = vadd.f32 %v2141, %v2229
      %v2231 = vpop.f32.mrf.mxu0
      %v2232 = vadd.f32 %v2143, %v2231
      %2233 = vmatmul.bf16.gmra.mxu0 %v829
      %v2234 = vpop.f32.mrf.mxu0
      %v2235 = vadd.f32 %v2146, %v2234
      %v2236 = vpop.f32.mrf.mxu0
      %v2237 = vadd.f32 %v2148, %v2236
      %2238 = vmatmul.bf16.gmra.mxu0 %v841
      %v2239 = vpop.f32.mrf.mxu0
      %v2240 = vadd.f32 %v2151, %v2239
      %v2241 = vpop.f32.mrf.mxu0
      %v2242 = vadd.f32 %v2153, %v2241
      %2243 = vmatmul.bf16.gmra.mxu0 %v853
      %v2244 = vpop.f32.mrf.mxu0
      %v2245 = vadd.f32 %v2156, %v2244
      %v2246 = vpop.f32.mrf.mxu0
      %v2247 = vadd.f32 %v2158, %v2246
      %2248 = vmatmul.bf16.gmra.mxu0 %v865
      %v2249 = vpop.f32.mrf.mxu0
      %v2250 = vadd.f32 %v2161, %v2249
      %v2251 = vpop.f32.mrf.mxu0
      %v2252 = vadd.f32 %v2163, %v2251
      %2253 = vmatmul.bf16.gmra.mxu0 %v877
      %v2254 = vpop.f32.mrf.mxu0
      %v2255 = vadd.f32 %v2166, %v2254
      %v2256 = vpop.f32.mrf.mxu0
      %v2257 = vadd.f32 %v2168, %v2256
      %2258 = vdwg.mxu0
      %2259 = vmatpush.bf16.msra.mxu0 %v2056
      %2260 = vmatpush.bf16.msra.mxu0 %v2055
      %2261 = vmatpush.bf16.msra.mxu0 %v2054
      %2262 = vmatpush.bf16.msra.mxu0 %v2053
      %2263 = vmatpush.bf16.msra.mxu0 %v2052
      %2264 = vmatpush.bf16.msra.mxu0 %v2051
      %2265 = vmatpush.bf16.msra.mxu0 %v2050
      %2266 = vmatpush.bf16.msra.mxu0 %v2049
      %2267 = vmatmul.bf16.gmra.mxu0 %v905
      %v2268 = vpop.f32.mrf.mxu0
      %v2269 = vadd.f32 %v2180, %v2268
      %v2270 = vpop.f32.mrf.mxu0
      %v2271 = vadd.f32 %v2182, %v2270
      %2272 = vmatmul.bf16.gmra.mxu0 %v908
      %v2273 = vpop.f32.mrf.mxu0
      %v2274 = vadd.f32 %v2185, %v2273
      %v2275 = vpop.f32.mrf.mxu0
      %v2276 = vadd.f32 %v2187, %v2275
      %2277 = vmatmul.bf16.gmra.mxu0 %v911
      %v2278 = vpop.f32.mrf.mxu0
      %v2279 = vadd.f32 %v2190, %v2278
      %v2280 = vpop.f32.mrf.mxu0
      %v2281 = vadd.f32 %v2192, %v2280
      %2282 = vmatmul.bf16.gmra.mxu0 %v914
      %v2283 = vpop.f32.mrf.mxu0
      %v2284 = vadd.f32 %v2195, %v2283
      %v2285 = vpop.f32.mrf.mxu0
      %v2286 = vadd.f32 %v2197, %v2285
      %2287 = vmatmul.bf16.gmra.mxu0 %v917
      %v2288 = vpop.f32.mrf.mxu0
      %v2289 = vadd.f32 %v2200, %v2288
      %v2290 = vpop.f32.mrf.mxu0
      %v2291 = vadd.f32 %v2202, %v2290
      %2292 = vmatmul.bf16.gmra.mxu0 %v920
      %v2293 = vpop.f32.mrf.mxu0
      %v2294 = vadd.f32 %v2205, %v2293
      %v2295 = vpop.f32.mrf.mxu0
      %v2296 = vadd.f32 %v2207, %v2295
      %2297 = vmatmul.bf16.gmra.mxu0 %v923
      %v2298 = vpop.f32.mrf.mxu0
      %v2299 = vadd.f32 %v2210, %v2298
      %v2300 = vpop.f32.mrf.mxu0
      %v2301 = vadd.f32 %v2212, %v2300
      %2302 = vmatmul.bf16.gmra.mxu0 %v926
      %v2303 = vpop.f32.mrf.mxu0
      %v2304 = vadd.f32 %v2215, %v2303
      %v2305 = vpop.f32.mrf.mxu0
      %v2306 = vadd.f32 %v2217, %v2305
      %2307 = vmatmul.bf16.gmra.mxu0 %v929
      %v2308 = vpop.f32.mrf.mxu0
      %v2309 = vadd.f32 %v2220, %v2308
      %v2310 = vpop.f32.mrf.mxu0
      %v2311 = vadd.f32 %v2222, %v2310
      %2312 = vmatmul.bf16.gmra.mxu0 %v932
      %v2313 = vpop.f32.mrf.mxu0
      %v2314 = vadd.f32 %v2225, %v2313
      %v2315 = vpop.f32.mrf.mxu0
      %v2316 = vadd.f32 %v2227, %v2315
      %2317 = vmatmul.bf16.gmra.mxu0 %v935
      %v2318 = vpop.f32.mrf.mxu0
      %v2319 = vadd.f32 %v2230, %v2318
      %v2320 = vpop.f32.mrf.mxu0
      %v2321 = vadd.f32 %v2232, %v2320
      %2322 = vmatmul.bf16.gmra.mxu0 %v938
      %v2323 = vpop.f32.mrf.mxu0
      %v2324 = vadd.f32 %v2235, %v2323
      %v2325 = vpop.f32.mrf.mxu0
      %v2326 = vadd.f32 %v2237, %v2325
      %2327 = vmatmul.bf16.gmra.mxu0 %v941
      %v2328 = vpop.f32.mrf.mxu0
      %v2329 = vadd.f32 %v2240, %v2328
      %v2330 = vpop.f32.mrf.mxu0
      %v2331 = vadd.f32 %v2242, %v2330
      %2332 = vmatmul.bf16.gmra.mxu0 %v944
      %v2333 = vpop.f32.mrf.mxu0
      %v2334 = vadd.f32 %v2245, %v2333
      %v2335 = vpop.f32.mrf.mxu0
      %v2336 = vadd.f32 %v2247, %v2335
      %2337 = vmatmul.bf16.gmra.mxu0 %v947
      %v2338 = vpop.f32.mrf.mxu0
      %v2339 = vadd.f32 %v2250, %v2338
      %v2340 = vpop.f32.mrf.mxu0
      %v2341 = vadd.f32 %v2252, %v2340
      %2342 = vmatmul.bf16.gmra.mxu0 %v950
      %v2343 = vpop.f32.mrf.mxu0
      %v2344 = vadd.f32 %v2255, %v2343
      %v2345 = vpop.f32.mrf.mxu0
      %v2346 = vadd.f32 %v2257, %v2345
      %2347 = vdwg.mxu0
      %v2348 = vadd.f32 %v1809, %v2269
      %v2349 = vadd.f32 %v1811, %v2271
      %v2350 = vadd.f32 %v1814, %v2274
      %v2351 = vadd.f32 %v1816, %v2276
      %v2352 = vadd.f32 %v1819, %v2279
      %v2353 = vadd.f32 %v1821, %v2281
      %v2354 = vadd.f32 %v1824, %v2284
      %v2355 = vadd.f32 %v1826, %v2286
      %v2356 = vadd.f32 %v1829, %v2289
      %v2357 = vadd.f32 %v1831, %v2291
      %v2358 = vadd.f32 %v1834, %v2294
      %v2359 = vadd.f32 %v1836, %v2296
      %v2360 = vadd.f32 %v1839, %v2299
      %v2361 = vadd.f32 %v1841, %v2301
      %v2362 = vadd.f32 %v1844, %v2304
      %v2363 = vadd.f32 %v1846, %v2306
      %v2364 = vadd.f32 %v1849, %v2309
      %v2365 = vadd.f32 %v1851, %v2311
      %v2366 = vadd.f32 %v1854, %v2314
      %v2367 = vadd.f32 %v1856, %v2316
      %v2368 = vadd.f32 %v1859, %v2319
      %v2369 = vadd.f32 %v1861, %v2321
      %v2370 = vadd.f32 %v1864, %v2324
      %v2371 = vadd.f32 %v1866, %v2326
      %v2372 = vadd.f32 %v1869, %v2329
      %v2373 = vadd.f32 %v1871, %v2331
      %v2374 = vadd.f32 %v1874, %v2334
      %v2375 = vadd.f32 %v1876, %v2336
      %v2376 = vadd.f32 %v1879, %v2339
      %v2377 = vadd.f32 %v1881, %v2341
      %v2378 = vadd.f32 %v1884, %v2344
      %v2379 = vadd.f32 %v1886, %v2346
      %v2380 = vld [vmem:[%s4] sm:$0x1]
      %v2382 = vperm.slane %v2380, 0
      %v2384 = vadd.f32 %v2348, %v2382
      %v2385 = vadd.f32 %v2349, %v2382
      %v2386 = vadd.f32 %v2350, %v2382
      %v2387 = vadd.f32 %v2351, %v2382
      %v2388 = vadd.f32 %v2352, %v2382
      %v2389 = vadd.f32 %v2353, %v2382
      %v2390 = vadd.f32 %v2354, %v2382
      %v2391 = vadd.f32 %v2355, %v2382
      %v2392 = vadd.f32 %v2356, %v2382
      %v2393 = vadd.f32 %v2357, %v2382
      %v2394 = vadd.f32 %v2358, %v2382
      %v2395 = vadd.f32 %v2359, %v2382
      %v2396 = vadd.f32 %v2360, %v2382
      %v2397 = vadd.f32 %v2361, %v2382
      %v2398 = vadd.f32 %v2362, %v2382
      %v2399 = vadd.f32 %v2363, %v2382
      %v2400 = vadd.f32 %v2364, %v2382
      %v2401 = vadd.f32 %v2365, %v2382
      %v2402 = vadd.f32 %v2366, %v2382
      %v2403 = vadd.f32 %v2367, %v2382
      %v2404 = vadd.f32 %v2368, %v2382
      %v2405 = vadd.f32 %v2369, %v2382
      %v2406 = vadd.f32 %v2370, %v2382
      %v2407 = vadd.f32 %v2371, %v2382
      %v2408 = vadd.f32 %v2372, %v2382
      %v2409 = vadd.f32 %v2373, %v2382
      %v2410 = vadd.f32 %v2374, %v2382
      %v2411 = vadd.f32 %v2375, %v2382
      %v2412 = vadd.f32 %v2376, %v2382
      %v2413 = vadd.f32 %v2377, %v2382
      %v2414 = vadd.f32 %v2378, %v2382
      %v2415 = vadd.f32 %v2379, %v2382
      %v2416 = vmax.f32 %v2384, 0.0
      %v2417 = vmax.f32 %v2385, 0.0
      %v2418 = vmax.f32 %v2386, 0.0
      %v2419 = vmax.f32 %v2387, 0.0
      %v2420 = vmax.f32 %v2388, 0.0
      %v2421 = vmax.f32 %v2389, 0.0
      %v2422 = vmax.f32 %v2390, 0.0
      %v2423 = vmax.f32 %v2391, 0.0
      %v2424 = vmax.f32 %v2392, 0.0
      %v2425 = vmax.f32 %v2393, 0.0
      %v2426 = vmax.f32 %v2394, 0.0
      %v2427 = vmax.f32 %v2395, 0.0
      %v2428 = vmax.f32 %v2396, 0.0
      %v2429 = vmax.f32 %v2397, 0.0
      %v2430 = vmax.f32 %v2398, 0.0
      %v2431 = vmax.f32 %v2399, 0.0
      %v2432 = vmax.f32 %v2400, 0.0
      %v2433 = vmax.f32 %v2401, 0.0
      %v2434 = vmax.f32 %v2402, 0.0
      %v2435 = vmax.f32 %v2403, 0.0
      %v2436 = vmax.f32 %v2404, 0.0
      %v2437 = vmax.f32 %v2405, 0.0
      %v2438 = vmax.f32 %v2406, 0.0
      %v2439 = vmax.f32 %v2407, 0.0
      %v2440 = vmax.f32 %v2408, 0.0
      %v2441 = vmax.f32 %v2409, 0.0
      %v2442 = vmax.f32 %v2410, 0.0
      %v2443 = vmax.f32 %v2411, 0.0
      %v2444 = vmax.f32 %v2412, 0.0
      %v2445 = vmax.f32 %v2413, 0.0
      %v2446 = vmax.f32 %v2414, 0.0
      %v2447 = vmax.f32 %v2415, 0.0
      %v2480 = vrot.slane %v2416, 2
      %v2481 = vrot.slane %v2416, 4
      %v2482 = vrot.slane %v2416, 6
      %v2483 = vrot.slane %v2417, 2
      %v2484 = vrot.slane %v2417, 4
      %v2485 = vrot.slane %v2417, 6
      %v2486 = vrot.slane %v2418, 2
      %v2487 = vrot.slane %v2418, 4
      %v2488 = vrot.slane %v2418, 6
      %v2489 = vrot.slane %v2419, 2
      %v2490 = vrot.slane %v2419, 4
      %v2491 = vrot.slane %v2419, 6
      %v2492 = vrot.slane %v2420, 2
      %v2493 = vrot.slane %v2420, 4
      %v2494 = vrot.slane %v2420, 6
      %v2495 = vrot.slane %v2421, 2
      %v2496 = vrot.slane %v2421, 4
      %v2497 = vrot.slane %v2421, 6
      %v2498 = vrot.slane %v2422, 2
      %v2499 = vrot.slane %v2422, 4
      %v2500 = vrot.slane %v2422, 6
      %v2501 = vrot.slane %v2423, 2
      %v2502 = vrot.slane %v2423, 4
      %v2503 = vrot.slane %v2423, 6
      %v2504 = vrot.slane %v2424, 2
      %v2505 = vrot.slane %v2424, 4
      %v2506 = vrot.slane %v2424, 6
      %v2507 = vrot.slane %v2425, 2
      %v2508 = vrot.slane %v2425, 4
      %v2509 = vrot.slane %v2425, 6
      %v2510 = vrot.slane %v2426, 2
      %v2511 = vrot.slane %v2426, 4
      %v2512 = vrot.slane %v2426, 6
      %v2513 = vrot.slane %v2427, 2
      %v2514 = vrot.slane %v2427, 4
      %v2515 = vrot.slane %v2427, 6
      %v2516 = vrot.slane %v2428, 2
      %v2517 = vrot.slane %v2428, 4
      %v2518 = vrot.slane %v2428, 6
      %v2519 = vrot.slane %v2429, 2
      %v2520 = vrot.slane %v2429, 4
      %v2521 = vrot.slane %v2429, 6
      %v2522 = vrot.slane %v2430, 2
      %v2523 = vrot.slane %v2430, 4
      %v2524 = vrot.slane %v2430, 6
      %v2525 = vrot.slane %v2431, 2
      %v2526 = vrot.slane %v2431, 4
      %v2527 = vrot.slane %v2431, 6
      %v2528 = vrot.slane %v2432, 2
      %v2529 = vrot.slane %v2432, 4
      %v2530 = vrot.slane %v2432, 6
      %v2531 = vrot.slane %v2433, 2
      %v2532 = vrot.slane %v2433, 4
      %v2533 = vrot.slane %v2433, 6
      %v2534 = vrot.slane %v2434, 2
      %v2535 = vrot.slane %v2434, 4
      %v2536 = vrot.slane %v2434, 6
      %v2537 = vrot.slane %v2435, 2
      %v2538 = vrot.slane %v2435, 4
      %v2539 = vrot.slane %v2435, 6
      %v2540 = vrot.slane %v2436, 2
      %v2541 = vrot.slane %v2436, 4
      %v2542 = vrot.slane %v2436, 6
      %v2543 = vrot.slane %v2437, 2
      %v2544 = vrot.slane %v2437, 4
      %v2545 = vrot.slane %v2437, 6
      %v2546 = vrot.slane %v2438, 2
      %v2547 = vrot.slane %v2438, 4
      %v2548 = vrot.slane %v2438, 6
      %v2549 = vrot.slane %v2439, 2
      %v2550 = vrot.slane %v2439, 4
      %v2551 = vrot.slane %v2439, 6
      %v2552 = vrot.slane %v2440, 2
      %v2553 = vrot.slane %v2440, 4
      %v2554 = vrot.slane %v2440, 6
      %v2555 = vrot.slane %v2441, 2
      %v2556 = vrot.slane %v2441, 4
      %v2557 = vrot.slane %v2441, 6
      %v2558 = vrot.slane %v2442, 2
      %v2559 = vrot.slane %v2442, 4
      %v2560 = vrot.slane %v2442, 6
      %v2561 = vrot.slane %v2443, 2
      %v2562 = vrot.slane %v2443, 4
      %v2563 = vrot.slane %v2443, 6
      %v2564 = vrot.slane %v2444, 2
      %v2565 = vrot.slane %v2444, 4
      %v2566 = vrot.slane %v2444, 6
      %v2567 = vrot.slane %v2445, 2
      %v2568 = vrot.slane %v2445, 4
      %v2569 = vrot.slane %v2445, 6
      %v2570 = vrot.slane %v2446, 2
      %v2571 = vrot.slane %v2446, 4
      %v2572 = vrot.slane %v2446, 6
      %v2573 = vrot.slane %v2447, 2
      %v2574 = vrot.slane %v2447, 4
      %v2575 = vrot.slane %v2447, 6
      %v2672 = vrot.slane %v2416, 7
      %v2673 = vrot.slane %v2672, 2
      %v2674 = vrot.slane %v2480, 7
      %v2675 = vrot.slane %v2674, 2
      %v2676 = vrot.slane %v2481, 7
      %v2677 = vrot.slane %v2676, 2
      %v2678 = vrot.slane %v2482, 7
      %v2679 = vrot.slane %v2678, 2
      %v2680 = vrot.slane %v2417, 7
      %v2681 = vrot.slane %v2680, 2
      %v2682 = vrot.slane %v2483, 7
      %v2683 = vrot.slane %v2682, 2
      %v2684 = vrot.slane %v2484, 7
      %v2685 = vrot.slane %v2684, 2
      %v2686 = vrot.slane %v2485, 7
      %v2687 = vrot.slane %v2686, 2
      %v2688 = vrot.slane %v2418, 7
      %v2689 = vrot.slane %v2688, 2
      %v2690 = vrot.slane %v2486, 7
      %v2691 = vrot.slane %v2690, 2
      %v2692 = vrot.slane %v2487, 7
      %v2693 = vrot.slane %v2692, 2
      %v2694 = vrot.slane %v2488, 7
      %v2695 = vrot.slane %v2694, 2
      %v2696 = vrot.slane %v2419, 7
      %v2697 = vrot.slane %v2696, 2
      %v2698 = vrot.slane %v2489, 7
      %v2699 = vrot.slane %v2698, 2
      %v2700 = vrot.slane %v2490, 7
      %v2701 = vrot.slane %v2700, 2
      %v2702 = vrot.slane %v2491, 7
      %v2703 = vrot.slane %v2702, 2
      %v2704 = vrot.slane %v2420, 7
      %v2705 = vrot.slane %v2704, 2
      %v2706 = vrot.slane %v2492, 7
      %v2707 = vrot.slane %v2706, 2
      %v2708 = vrot.slane %v2493, 7
      %v2709 = vrot.slane %v2708, 2
      %v2710 = vrot.slane %v2494, 7
      %v2711 = vrot.slane %v2710, 2
      %v2712 = vrot.slane %v2421, 7
      %v2713 = vrot.slane %v2712, 2
      %v2714 = vrot.slane %v2495, 7
      %v2715 = vrot.slane %v2714, 2
      %v2716 = vrot.slane %v2496, 7
      %v2717 = vrot.slane %v2716, 2
      %v2718 = vrot.slane %v2497, 7
      %v2719 = vrot.slane %v2718, 2
      %v2720 = vrot.slane %v2422, 7
      %v2721 = vrot.slane %v2720, 2
      %v2722 = vrot.slane %v2498, 7
      %v2723 = vrot.slane %v2722, 2
      %v2724 = vrot.slane %v2499, 7
      %v2725 = vrot.slane %v2724, 2
      %v2726 = vrot.slane %v2500, 7
      %v2727 = vrot.slane %v2726, 2
      %v2728 = vrot.slane %v2423, 7
      %v2729 = vrot.slane %v2728, 2
      %v2730 = vrot.slane %v2501, 7
      %v2731 = vrot.slane %v2730, 2
      %v2732 = vrot.slane %v2502, 7
      %v2733 = vrot.slane %v2732, 2
      %v2734 = vrot.slane %v2503, 7
      %v2735 = vrot.slane %v2734, 2
      %v2736 = vrot.slane %v2424, 7
      %v2737 = vrot.slane %v2736, 2
      %v2738 = vrot.slane %v2504, 7
      %v2739 = vrot.slane %v2738, 2
      %v2740 = vrot.slane %v2505, 7
      %v2741 = vrot.slane %v2740, 2
      %v2742 = vrot.slane %v2506, 7
      %v2743 = vrot.slane %v2742, 2
      %v2744 = vrot.slane %v2425, 7
      %v2745 = vrot.slane %v2744, 2
      %v2746 = vrot.slane %v2507, 7
      %v2747 = vrot.slane %v2746, 2
      %v2748 = vrot.slane %v2508, 7
      %v2749 = vrot.slane %v2748, 2
      %v2750 = vrot.slane %v2509, 7
      %v2751 = vrot.slane %v2750, 2
      %v2752 = vrot.slane %v2426, 7
      %v2753 = vrot.slane %v2752, 2
      %v2754 = vrot.slane %v2510, 7
      %v2755 = vrot.slane %v2754, 2
      %v2756 = vrot.slane %v2511, 7
      %v2757 = vrot.slane %v2756, 2
      %v2758 = vrot.slane %v2512, 7
      %v2759 = vrot.slane %v2758, 2
      %v2760 = vrot.slane %v2427, 7
      %v2761 = vrot.slane %v2760, 2
      %v2762 = vrot.slane %v2513, 7
      %v2763 = vrot.slane %v2762, 2
      %v2764 = vrot.slane %v2514, 7
      %v2765 = vrot.slane %v2764, 2
      %v2766 = vrot.slane %v2515, 7
      %v2767 = vrot.slane %v2766, 2
      %v2768 = vrot.slane %v2428, 7
      %v2769 = vrot.slane %v2768, 2
      %v2770 = vrot.slane %v2516, 7
      %v2771 = vrot.slane %v2770, 2
      %v2772 = vrot.slane %v2517, 7
      %v2773 = vrot.slane %v2772, 2
      %v2774 = vrot.slane %v2518, 7
      %v2775 = vrot.slane %v2774, 2
      %v2776 = vrot.slane %v2429, 7
      %v2777 = vrot.slane %v2776, 2
      %v2778 = vrot.slane %v2519, 7
      %v2779 = vrot.slane %v2778, 2
      %v2780 = vrot.slane %v2520, 7
      %v2781 = vrot.slane %v2780, 2
      %v2782 = vrot.slane %v2521, 7
      %v2783 = vrot.slane %v2782, 2
      %v2784 = vrot.slane %v2430, 7
      %v2785 = vrot.slane %v2784, 2
      %v2786 = vrot.slane %v2522, 7
      %v2787 = vrot.slane %v2786, 2
      %v2788 = vrot.slane %v2523, 7
      %v2789 = vrot.slane %v2788, 2
      %v2790 = vrot.slane %v2524, 7
      %v2791 = vrot.slane %v2790, 2
      %v2792 = vrot.slane %v2431, 7
      %v2793 = vrot.slane %v2792, 2
      %v2794 = vrot.slane %v2525, 7
      %v2795 = vrot.slane %v2794, 2
      %v2796 = vrot.slane %v2526, 7
      %v2797 = vrot.slane %v2796, 2
      %v2798 = vrot.slane %v2527, 7
      %v2799 = vrot.slane %v2798, 2
      %v2800 = vrot.slane %v2432, 7
      %v2801 = vrot.slane %v2800, 2
      %v2802 = vrot.slane %v2528, 7
      %v2803 = vrot.slane %v2802, 2
      %v2804 = vrot.slane %v2529, 7
      %v2805 = vrot.slane %v2804, 2
      %v2806 = vrot.slane %v2530, 7
      %v2807 = vrot.slane %v2806, 2
      %v2808 = vrot.slane %v2433, 7
      %v2809 = vrot.slane %v2808, 2
      %v2810 = vrot.slane %v2531, 7
      %v2811 = vrot.slane %v2810, 2
      %v2812 = vrot.slane %v2532, 7
      %v2813 = vrot.slane %v2812, 2
      %v2814 = vrot.slane %v2533, 7
      %v2815 = vrot.slane %v2814, 2
      %v2816 = vrot.slane %v2434, 7
      %v2817 = vrot.slane %v2816, 2
      %v2818 = vrot.slane %v2534, 7
      %v2819 = vrot.slane %v2818, 2
      %v2820 = vrot.slane %v2535, 7
      %v2821 = vrot.slane %v2820, 2
      %v2822 = vrot.slane %v2536, 7
      %v2823 = vrot.slane %v2822, 2
      %v2824 = vrot.slane %v2435, 7
      %v2825 = vrot.slane %v2824, 2
      %v2826 = vrot.slane %v2537, 7
      %v2827 = vrot.slane %v2826, 2
      %v2828 = vrot.slane %v2538, 7
      %v2829 = vrot.slane %v2828, 2
      %v2830 = vrot.slane %v2539, 7
      %v2831 = vrot.slane %v2830, 2
      %v2832 = vrot.slane %v2436, 7
      %v2833 = vrot.slane %v2832, 2
      %v2834 = vrot.slane %v2540, 7
      %v2835 = vrot.slane %v2834, 2
      %v2836 = vrot.slane %v2541, 7
      %v2837 = vrot.slane %v2836, 2
      %v2838 = vrot.slane %v2542, 7
      %v2839 = vrot.slane %v2838, 2
      %v2840 = vrot.slane %v2437, 7
      %v2841 = vrot.slane %v2840, 2
      %v2842 = vrot.slane %v2543, 7
      %v2843 = vrot.slane %v2842, 2
      %v2844 = vrot.slane %v2544, 7
      %v2845 = vrot.slane %v2844, 2
      %v2846 = vrot.slane %v2545, 7
      %v2847 = vrot.slane %v2846, 2
      %v2848 = vrot.slane %v2438, 7
      %v2849 = vrot.slane %v2848, 2
      %v2850 = vrot.slane %v2546, 7
      %v2851 = vrot.slane %v2850, 2
      %v2852 = vrot.slane %v2547, 7
      %v2853 = vrot.slane %v2852, 2
      %v2854 = vrot.slane %v2548, 7
      %v2855 = vrot.slane %v2854, 2
      %v2856 = vrot.slane %v2439, 7
      %v2857 = vrot.slane %v2856, 2
      %v2858 = vrot.slane %v2549, 7
      %v2859 = vrot.slane %v2858, 2
      %v2860 = vrot.slane %v2550, 7
      %v2861 = vrot.slane %v2860, 2
      %v2862 = vrot.slane %v2551, 7
      %v2863 = vrot.slane %v2862, 2
      %v2864 = vrot.slane %v2440, 7
      %v2865 = vrot.slane %v2864, 2
      %v2866 = vrot.slane %v2552, 7
      %v2867 = vrot.slane %v2866, 2
      %v2868 = vrot.slane %v2553, 7
      %v2869 = vrot.slane %v2868, 2
      %v2870 = vrot.slane %v2554, 7
      %v2871 = vrot.slane %v2870, 2
      %v2872 = vrot.slane %v2441, 7
      %v2873 = vrot.slane %v2872, 2
      %v2874 = vrot.slane %v2555, 7
      %v2875 = vrot.slane %v2874, 2
      %v2876 = vrot.slane %v2556, 7
      %v2877 = vrot.slane %v2876, 2
      %v2878 = vrot.slane %v2557, 7
      %v2879 = vrot.slane %v2878, 2
      %v2880 = vrot.slane %v2442, 7
      %v2881 = vrot.slane %v2880, 2
      %v2882 = vrot.slane %v2558, 7
      %v2883 = vrot.slane %v2882, 2
      %v2884 = vrot.slane %v2559, 7
      %v2885 = vrot.slane %v2884, 2
      %v2886 = vrot.slane %v2560, 7
      %v2887 = vrot.slane %v2886, 2
      %v2888 = vrot.slane %v2443, 7
      %v2889 = vrot.slane %v2888, 2
      %v2890 = vrot.slane %v2561, 7
      %v2891 = vrot.slane %v2890, 2
      %v2892 = vrot.slane %v2562, 7
      %v2893 = vrot.slane %v2892, 2
      %v2894 = vrot.slane %v2563, 7
      %v2895 = vrot.slane %v2894, 2
      %v2896 = vrot.slane %v2444, 7
      %v2897 = vrot.slane %v2896, 2
      %v2898 = vrot.slane %v2564, 7
      %v2899 = vrot.slane %v2898, 2
      %v2900 = vrot.slane %v2565, 7
      %v2901 = vrot.slane %v2900, 2
      %v2902 = vrot.slane %v2566, 7
      %v2903 = vrot.slane %v2902, 2
      %v2904 = vrot.slane %v2445, 7
      %v2905 = vrot.slane %v2904, 2
      %v2906 = vrot.slane %v2567, 7
      %v2907 = vrot.slane %v2906, 2
      %v2908 = vrot.slane %v2568, 7
      %v2909 = vrot.slane %v2908, 2
      %v2910 = vrot.slane %v2569, 7
      %v2911 = vrot.slane %v2910, 2
      %v2912 = vrot.slane %v2446, 7
      %v2913 = vrot.slane %v2912, 2
      %v2914 = vrot.slane %v2570, 7
      %v2915 = vrot.slane %v2914, 2
      %v2916 = vrot.slane %v2571, 7
      %v2917 = vrot.slane %v2916, 2
      %v2918 = vrot.slane %v2572, 7
      %v2919 = vrot.slane %v2918, 2
      %v2920 = vrot.slane %v2447, 7
      %v2921 = vrot.slane %v2920, 2
      %v2922 = vrot.slane %v2573, 7
      %v2923 = vrot.slane %v2922, 2
      %v2924 = vrot.slane %v2574, 7
      %v2925 = vrot.slane %v2924, 2
      %v2926 = vrot.slane %v2575, 7
      %v2927 = vrot.slane %v2926, 2
      %v3056 = vadd.f32 %v2416, %v2673
      %v3057 = vadd.f32 %v2480, %v2675
      %v3058 = vadd.f32 %v2481, %v2677
      %v3059 = vadd.f32 %v2482, %v2679
      %v3060 = vadd.f32 %v2417, %v2681
      %v3061 = vadd.f32 %v2483, %v2683
      %v3062 = vadd.f32 %v2484, %v2685
      %v3063 = vadd.f32 %v2485, %v2687
      %v3064 = vadd.f32 %v2418, %v2689
      %v3065 = vadd.f32 %v2486, %v2691
      %v3066 = vadd.f32 %v2487, %v2693
      %v3067 = vadd.f32 %v2488, %v2695
      %v3068 = vadd.f32 %v2419, %v2697
      %v3069 = vadd.f32 %v2489, %v2699
      %v3070 = vadd.f32 %v2490, %v2701
      %v3071 = vadd.f32 %v2491, %v2703
      %v3072 = vadd.f32 %v2420, %v2705
      %v3073 = vadd.f32 %v2492, %v2707
      %v3074 = vadd.f32 %v2493, %v2709
      %v3075 = vadd.f32 %v2494, %v2711
      %v3076 = vadd.f32 %v2421, %v2713
      %v3077 = vadd.f32 %v2495, %v2715
      %v3078 = vadd.f32 %v2496, %v2717
      %v3079 = vadd.f32 %v2497, %v2719
      %v3080 = vadd.f32 %v2422, %v2721
      %v3081 = vadd.f32 %v2498, %v2723
      %v3082 = vadd.f32 %v2499, %v2725
      %v3083 = vadd.f32 %v2500, %v2727
      %v3084 = vadd.f32 %v2423, %v2729
      %v3085 = vadd.f32 %v2501, %v2731
      %v3086 = vadd.f32 %v2502, %v2733
      %v3087 = vadd.f32 %v2503, %v2735
      %v3088 = vadd.f32 %v2424, %v2737
      %v3089 = vadd.f32 %v2504, %v2739
      %v3090 = vadd.f32 %v2505, %v2741
      %v3091 = vadd.f32 %v2506, %v2743
      %v3092 = vadd.f32 %v2425, %v2745
      %v3093 = vadd.f32 %v2507, %v2747
      %v3094 = vadd.f32 %v2508, %v2749
      %v3095 = vadd.f32 %v2509, %v2751
      %v3096 = vadd.f32 %v2426, %v2753
      %v3097 = vadd.f32 %v2510, %v2755
      %v3098 = vadd.f32 %v2511, %v2757
      %v3099 = vadd.f32 %v2512, %v2759
      %v3100 = vadd.f32 %v2427, %v2761
      %v3101 = vadd.f32 %v2513, %v2763
      %v3102 = vadd.f32 %v2514, %v2765
      %v3103 = vadd.f32 %v2515, %v2767
      %v3104 = vadd.f32 %v2428, %v2769
      %v3105 = vadd.f32 %v2516, %v2771
      %v3106 = vadd.f32 %v2517, %v2773
      %v3107 = vadd.f32 %v2518, %v2775
      %v3108 = vadd.f32 %v2429, %v2777
      %v3109 = vadd.f32 %v2519, %v2779
      %v3110 = vadd.f32 %v2520, %v2781
      %v3111 = vadd.f32 %v2521, %v2783
      %v3112 = vadd.f32 %v2430, %v2785
      %v3113 = vadd.f32 %v2522, %v2787
      %v3114 = vadd.f32 %v2523, %v2789
      %v3115 = vadd.f32 %v2524, %v2791
      %v3116 = vadd.f32 %v2431, %v2793
      %v3117 = vadd.f32 %v2525, %v2795
      %v3118 = vadd.f32 %v2526, %v2797
      %v3119 = vadd.f32 %v2527, %v2799
      %v3120 = vadd.f32 %v2432, %v2801
      %v3121 = vadd.f32 %v2528, %v2803
      %v3122 = vadd.f32 %v2529, %v2805
      %v3123 = vadd.f32 %v2530, %v2807
      %v3124 = vadd.f32 %v2433, %v2809
      %v3125 = vadd.f32 %v2531, %v2811
      %v3126 = vadd.f32 %v2532, %v2813
      %v3127 = vadd.f32 %v2533, %v2815
      %v3128 = vadd.f32 %v2434, %v2817
      %v3129 = vadd.f32 %v2534, %v2819
      %v3130 = vadd.f32 %v2535, %v2821
      %v3131 = vadd.f32 %v2536, %v2823
      %v3132 = vadd.f32 %v2435, %v2825
      %v3133 = vadd.f32 %v2537, %v2827
      %v3134 = vadd.f32 %v2538, %v2829
      %v3135 = vadd.f32 %v2539, %v2831
      %v3136 = vadd.f32 %v2436, %v2833
      %v3137 = vadd.f32 %v2540, %v2835
      %v3138 = vadd.f32 %v2541, %v2837
      %v3139 = vadd.f32 %v2542, %v2839
      %v3140 = vadd.f32 %v2437, %v2841
      %v3141 = vadd.f32 %v2543, %v2843
      %v3142 = vadd.f32 %v2544, %v2845
      %v3143 = vadd.f32 %v2545, %v2847
      %v3144 = vadd.f32 %v2438, %v2849
      %v3145 = vadd.f32 %v2546, %v2851
      %v3146 = vadd.f32 %v2547, %v2853
      %v3147 = vadd.f32 %v2548, %v2855
      %v3148 = vadd.f32 %v2439, %v2857
      %v3149 = vadd.f32 %v2549, %v2859
      %v3150 = vadd.f32 %v2550, %v2861
      %v3151 = vadd.f32 %v2551, %v2863
      %v3152 = vadd.f32 %v2440, %v2865
      %v3153 = vadd.f32 %v2552, %v2867
      %v3154 = vadd.f32 %v2553, %v2869
      %v3155 = vadd.f32 %v2554, %v2871
      %v3156 = vadd.f32 %v2441, %v2873
      %v3157 = vadd.f32 %v2555, %v2875
      %v3158 = vadd.f32 %v2556, %v2877
      %v3159 = vadd.f32 %v2557, %v2879
      %v3160 = vadd.f32 %v2442, %v2881
      %v3161 = vadd.f32 %v2558, %v2883
      %v3162 = vadd.f32 %v2559, %v2885
      %v3163 = vadd.f32 %v2560, %v2887
      %v3164 = vadd.f32 %v2443, %v2889
      %v3165 = vadd.f32 %v2561, %v2891
      %v3166 = vadd.f32 %v2562, %v2893
      %v3167 = vadd.f32 %v2563, %v2895
      %v3168 = vadd.f32 %v2444, %v2897
      %v3169 = vadd.f32 %v2564, %v2899
      %v3170 = vadd.f32 %v2565, %v2901
      %v3171 = vadd.f32 %v2566, %v2903
      %v3172 = vadd.f32 %v2445, %v2905
      %v3173 = vadd.f32 %v2567, %v2907
      %v3174 = vadd.f32 %v2568, %v2909
      %v3175 = vadd.f32 %v2569, %v2911
      %v3176 = vadd.f32 %v2446, %v2913
      %v3177 = vadd.f32 %v2570, %v2915
      %v3178 = vadd.f32 %v2571, %v2917
      %v3179 = vadd.f32 %v2572, %v2919
      %v3180 = vadd.f32 %v2447, %v2921
      %v3181 = vadd.f32 %v2573, %v2923
      %v3182 = vadd.f32 %v2574, %v2925
      %v3183 = vadd.f32 %v2575, %v2927
      %v3184 = vadd.f32 %v3056, %v3064
      %v3185 = vadd.f32 %v3057, %v3065
      %v3186 = vadd.f32 %v3058, %v3066
      %v3187 = vadd.f32 %v3059, %v3067
      %v3188 = vadd.f32 %v3060, %v3068
      %v3189 = vadd.f32 %v3061, %v3069
      %v3190 = vadd.f32 %v3062, %v3070
      %v3191 = vadd.f32 %v3063, %v3071
      %v3192 = vadd.f32 %v3072, %v3080
      %v3193 = vadd.f32 %v3073, %v3081
      %v3194 = vadd.f32 %v3074, %v3082
      %v3195 = vadd.f32 %v3075, %v3083
      %v3196 = vadd.f32 %v3076, %v3084
      %v3197 = vadd.f32 %v3077, %v3085
      %v3198 = vadd.f32 %v3078, %v3086
      %v3199 = vadd.f32 %v3079, %v3087
      %v3200 = vadd.f32 %v3088, %v3096
      %v3201 = vadd.f32 %v3089, %v3097
      %v3202 = vadd.f32 %v3090, %v3098
      %v3203 = vadd.f32 %v3091, %v3099
      %v3204 = vadd.f32 %v3092, %v3100
      %v3205 = vadd.f32 %v3093, %v3101
      %v3206 = vadd.f32 %v3094, %v3102
      %v3207 = vadd.f32 %v3095, %v3103
      %v3208 = vadd.f32 %v3104, %v3112
      %v3209 = vadd.f32 %v3105, %v3113
      %v3210 = vadd.f32 %v3106, %v3114
      %v3211 = vadd.f32 %v3107, %v3115
      %v3212 = vadd.f32 %v3108, %v3116
      %v3213 = vadd.f32 %v3109, %v3117
      %v3214 = vadd.f32 %v3110, %v3118
      %v3215 = vadd.f32 %v3111, %v3119
      %v3216 = vadd.f32 %v3120, %v3128
      %v3217 = vadd.f32 %v3121, %v3129
      %v3218 = vadd.f32 %v3122, %v3130
      %v3219 = vadd.f32 %v3123, %v3131
      %v3220 = vadd.f32 %v3124, %v3132
      %v3221 = vadd.f32 %v3125, %v3133
      %v3222 = vadd.f32 %v3126, %v3134
      %v3223 = vadd.f32 %v3127, %v3135
      %v3224 = vadd.f32 %v3136, %v3144
      %v3225 = vadd.f32 %v3137, %v3145
      %v3226 = vadd.f32 %v3138, %v3146
      %v3227 = vadd.f32 %v3139, %v3147
      %v3228 = vadd.f32 %v3140, %v3148
      %v3229 = vadd.f32 %v3141, %v3149
      %v3230 = vadd.f32 %v3142, %v3150
      %v3231 = vadd.f32 %v3143, %v3151
      %v3232 = vadd.f32 %v3152, %v3160
      %v3233 = vadd.f32 %v3153, %v3161
      %v3234 = vadd.f32 %v3154, %v3162
      %v3235 = vadd.f32 %v3155, %v3163
      %v3236 = vadd.f32 %v3156, %v3164
      %v3237 = vadd.f32 %v3157, %v3165
      %v3238 = vadd.f32 %v3158, %v3166
      %v3239 = vadd.f32 %v3159, %v3167
      %v3240 = vadd.f32 %v3168, %v3176
      %v3241 = vadd.f32 %v3169, %v3177
      %v3242 = vadd.f32 %v3170, %v3178
      %v3243 = vadd.f32 %v3171, %v3179
      %v3244 = vadd.f32 %v3172, %v3180
      %v3245 = vadd.f32 %v3173, %v3181
      %v3246 = vadd.f32 %v3174, %v3182
      %v3247 = vadd.f32 %v3175, %v3183
      %v3248 = vpack.c.bf16 %v3184, %v3184
      %v3249 = vpack.c.bf16 %v3185, %v3185
      %v3250 = vpack.c.bf16 %v3186, %v3186
      %v3251 = vpack.c.bf16 %v3187, %v3187
      %v3252 = vpack.c.bf16 %v3188, %v3188
      %v3253 = vpack.c.bf16 %v3189, %v3189
      %v3254 = vpack.c.bf16 %v3190, %v3190
      %v3255 = vpack.c.bf16 %v3191, %v3191
      %v3256 = vpack.c.bf16 %v3192, %v3192
      %v3257 = vpack.c.bf16 %v3193, %v3193
      %v3258 = vpack.c.bf16 %v3194, %v3194
      %v3259 = vpack.c.bf16 %v3195, %v3195
      %v3260 = vpack.c.bf16 %v3196, %v3196
      %v3261 = vpack.c.bf16 %v3197, %v3197
      %v3262 = vpack.c.bf16 %v3198, %v3198
      %v3263 = vpack.c.bf16 %v3199, %v3199
      %v3264 = vpack.c.bf16 %v3200, %v3200
      %v3265 = vpack.c.bf16 %v3201, %v3201
      %v3266 = vpack.c.bf16 %v3202, %v3202
      %v3267 = vpack.c.bf16 %v3203, %v3203
      %v3268 = vpack.c.bf16 %v3204, %v3204
      %v3269 = vpack.c.bf16 %v3205, %v3205
      %v3270 = vpack.c.bf16 %v3206, %v3206
      %v3271 = vpack.c.bf16 %v3207, %v3207
      %v3272 = vpack.c.bf16 %v3208, %v3208
      %v3273 = vpack.c.bf16 %v3209, %v3209
      %v3274 = vpack.c.bf16 %v3210, %v3210
      %v3275 = vpack.c.bf16 %v3211, %v3211
      %v3276 = vpack.c.bf16 %v3212, %v3212
      %v3277 = vpack.c.bf16 %v3213, %v3213
      %v3278 = vpack.c.bf16 %v3214, %v3214
      %v3279 = vpack.c.bf16 %v3215, %v3215
      %v3280 = vpack.c.bf16 %v3216, %v3216
      %v3281 = vpack.c.bf16 %v3217, %v3217
      %v3282 = vpack.c.bf16 %v3218, %v3218
      %v3283 = vpack.c.bf16 %v3219, %v3219
      %v3284 = vpack.c.bf16 %v3220, %v3220
      %v3285 = vpack.c.bf16 %v3221, %v3221
      %v3286 = vpack.c.bf16 %v3222, %v3222
      %v3287 = vpack.c.bf16 %v3223, %v3223
      %v3288 = vpack.c.bf16 %v3224, %v3224
      %v3289 = vpack.c.bf16 %v3225, %v3225
      %v3290 = vpack.c.bf16 %v3226, %v3226
      %v3291 = vpack.c.bf16 %v3227, %v3227
      %v3292 = vpack.c.bf16 %v3228, %v3228
      %v3293 = vpack.c.bf16 %v3229, %v3229
      %v3294 = vpack.c.bf16 %v3230, %v3230
      %v3295 = vpack.c.bf16 %v3231, %v3231
      %v3296 = vpack.c.bf16 %v3232, %v3232
      %v3297 = vpack.c.bf16 %v3233, %v3233
      %v3298 = vpack.c.bf16 %v3234, %v3234
      %v3299 = vpack.c.bf16 %v3235, %v3235
      %v3300 = vpack.c.bf16 %v3236, %v3236
      %v3301 = vpack.c.bf16 %v3237, %v3237
      %v3302 = vpack.c.bf16 %v3238, %v3238
      %v3303 = vpack.c.bf16 %v3239, %v3239
      %v3304 = vpack.c.bf16 %v3240, %v3240
      %v3305 = vpack.c.bf16 %v3241, %v3241
      %v3306 = vpack.c.bf16 %v3242, %v3242
      %v3307 = vpack.c.bf16 %v3243, %v3243
      %v3308 = vpack.c.bf16 %v3244, %v3244
      %v3309 = vpack.c.bf16 %v3245, %v3245
      %v3310 = vpack.c.bf16 %v3246, %v3246
      %v3311 = vpack.c.bf16 %v3247, %v3247
      %v3376 = vunpack.c.l.b16 %v3248
      %v3377 = vunpack.c.l.b16 %v3249
      %v3378 = vunpack.c.l.b16 %v3250
      %v3379 = vunpack.c.l.b16 %v3251
      %v3380 = vunpack.c.l.b16 %v3252
      %v3381 = vunpack.c.l.b16 %v3253
      %v3382 = vunpack.c.l.b16 %v3254
      %v3383 = vunpack.c.l.b16 %v3255
      %v3384 = vunpack.c.l.b16 %v3256
      %v3385 = vunpack.c.l.b16 %v3257
      %v3386 = vunpack.c.l.b16 %v3258
      %v3387 = vunpack.c.l.b16 %v3259
      %v3388 = vunpack.c.l.b16 %v3260
      %v3389 = vunpack.c.l.b16 %v3261
      %v3390 = vunpack.c.l.b16 %v3262
      %v3391 = vunpack.c.l.b16 %v3263
      %v3392 = vunpack.c.l.b16 %v3264
      %v3393 = vunpack.c.l.b16 %v3265
      %v3394 = vunpack.c.l.b16 %v3266
      %v3395 = vunpack.c.l.b16 %v3267
      %v3396 = vunpack.c.l.b16 %v3268
      %v3397 = vunpack.c.l.b16 %v3269
      %v3398 = vunpack.c.l.b16 %v3270
      %v3399 = vunpack.c.l.b16 %v3271
      %v3400 = vunpack.c.l.b16 %v3272
      %v3401 = vunpack.c.l.b16 %v3273
      %v3402 = vunpack.c.l.b16 %v3274
      %v3403 = vunpack.c.l.b16 %v3275
      %v3404 = vunpack.c.l.b16 %v3276
      %v3405 = vunpack.c.l.b16 %v3277
      %v3406 = vunpack.c.l.b16 %v3278
      %v3407 = vunpack.c.l.b16 %v3279
      %v3408 = vunpack.c.l.b16 %v3280
      %v3409 = vunpack.c.l.b16 %v3281
      %v3410 = vunpack.c.l.b16 %v3282
      %v3411 = vunpack.c.l.b16 %v3283
      %v3412 = vunpack.c.l.b16 %v3284
      %v3413 = vunpack.c.l.b16 %v3285
      %v3414 = vunpack.c.l.b16 %v3286
      %v3415 = vunpack.c.l.b16 %v3287
      %v3416 = vunpack.c.l.b16 %v3288
      %v3417 = vunpack.c.l.b16 %v3289
      %v3418 = vunpack.c.l.b16 %v3290
      %v3419 = vunpack.c.l.b16 %v3291
      %v3420 = vunpack.c.l.b16 %v3292
      %v3421 = vunpack.c.l.b16 %v3293
      %v3422 = vunpack.c.l.b16 %v3294
      %v3423 = vunpack.c.l.b16 %v3295
      %v3424 = vunpack.c.l.b16 %v3296
      %v3425 = vunpack.c.l.b16 %v3297
      %v3426 = vunpack.c.l.b16 %v3298
      %v3427 = vunpack.c.l.b16 %v3299
      %v3428 = vunpack.c.l.b16 %v3300
      %v3429 = vunpack.c.l.b16 %v3301
      %v3430 = vunpack.c.l.b16 %v3302
      %v3431 = vunpack.c.l.b16 %v3303
      %v3432 = vunpack.c.l.b16 %v3304
      %v3433 = vunpack.c.l.b16 %v3305
      %v3434 = vunpack.c.l.b16 %v3306
      %v3435 = vunpack.c.l.b16 %v3307
      %v3436 = vunpack.c.l.b16 %v3308
      %v3437 = vunpack.c.l.b16 %v3309
      %v3438 = vunpack.c.l.b16 %v3310
      %v3439 = vunpack.c.l.b16 %v3311
      %v3440 = vrot.slane %v3377, 7
      %vm3441 = vcmask 1041409
      %v3442 = vsel %vm3441, %v3440, %v3376
      %v3443 = vrot.slane %v3378, 6
      %vm3444 = vcmask 1042434
      %v3445 = vsel %vm3444, %v3443, %v3442
      %v3446 = vrot.slane %v3379, 5
      %vm3447 = vcmask 1043459
      %v3448 = vsel %vm3447, %v3446, %v3445
      %v3449 = vrot.slane %v3380, 4
      %vm3450 = vcmask 1044484
      %v3451 = vsel %vm3450, %v3449, %v3448
      %v3452 = vrot.slane %v3381, 3
      %vm3453 = vcmask 1045509
      %v3454 = vsel %vm3453, %v3452, %v3451
      %v3455 = vrot.slane %v3382, 2
      %vm3456 = vcmask 1046534
      %v3457 = vsel %vm3456, %v3455, %v3454
      %v3458 = vrot.slane %v3383, 1
      %vm3459 = vcmask 1047559
      %v3460 = vsel %vm3459, %v3458, %v3457
      %v3461 = vrot.slane %v3385, 7
      %v3462 = vsel %vm3441, %v3461, %v3384
      %v3463 = vrot.slane %v3386, 6
      %v3464 = vsel %vm3444, %v3463, %v3462
      %v3465 = vrot.slane %v3387, 5
      %v3466 = vsel %vm3447, %v3465, %v3464
      %v3467 = vrot.slane %v3388, 4
      %v3468 = vsel %vm3450, %v3467, %v3466
      %v3469 = vrot.slane %v3389, 3
      %v3470 = vsel %vm3453, %v3469, %v3468
      %v3471 = vrot.slane %v3390, 2
      %v3472 = vsel %vm3456, %v3471, %v3470
      %v3473 = vrot.slane %v3391, 1
      %v3474 = vsel %vm3459, %v3473, %v3472
      %v3475 = vrot.slane %v3393, 7
      %v3476 = vsel %vm3441, %v3475, %v3392
      %v3477 = vrot.slane %v3394, 6
      %v3478 = vsel %vm3444, %v3477, %v3476
      %v3479 = vrot.slane %v3395, 5
      %v3480 = vsel %vm3447, %v3479, %v3478
      %v3481 = vrot.slane %v3396, 4
      %v3482 = vsel %vm3450, %v3481, %v3480
      %v3483 = vrot.slane %v3397, 3
      %v3484 = vsel %vm3453, %v3483, %v3482
      %v3485 = vrot.slane %v3398, 2
      %v3486 = vsel %vm3456, %v3485, %v3484
      %v3487 = vrot.slane %v3399, 1
      %v3488 = vsel %vm3459, %v3487, %v3486
      %v3489 = vrot.slane %v3401, 7
      %v3490 = vsel %vm3441, %v3489, %v3400
      %v3491 = vrot.slane %v3402, 6
      %v3492 = vsel %vm3444, %v3491, %v3490
      %v3493 = vrot.slane %v3403, 5
      %v3494 = vsel %vm3447, %v3493, %v3492
      %v3495 = vrot.slane %v3404, 4
      %v3496 = vsel %vm3450, %v3495, %v3494
      %v3497 = vrot.slane %v3405, 3
      %v3498 = vsel %vm3453, %v3497, %v3496
      %v3499 = vrot.slane %v3406, 2
      %v3500 = vsel %vm3456, %v3499, %v3498
      %v3501 = vrot.slane %v3407, 1
      %v3502 = vsel %vm3459, %v3501, %v3500
      %v3503 = vrot.slane %v3409, 7
      %v3504 = vsel %vm3441, %v3503, %v3408
      %v3505 = vrot.slane %v3410, 6
      %v3506 = vsel %vm3444, %v3505, %v3504
      %v3507 = vrot.slane %v3411, 5
      %v3508 = vsel %vm3447, %v3507, %v3506
      %v3509 = vrot.slane %v3412, 4
      %v3510 = vsel %vm3450, %v3509, %v3508
      %v3511 = vrot.slane %v3413, 3
      %v3512 = vsel %vm3453, %v3511, %v3510
      %v3513 = vrot.slane %v3414, 2
      %v3514 = vsel %vm3456, %v3513, %v3512
      %v3515 = vrot.slane %v3415, 1
      %v3516 = vsel %vm3459, %v3515, %v3514
      %v3517 = vrot.slane %v3417, 7
      %v3518 = vsel %vm3441, %v3517, %v3416
      %v3519 = vrot.slane %v3418, 6
      %v3520 = vsel %vm3444, %v3519, %v3518
      %v3521 = vrot.slane %v3419, 5
      %v3522 = vsel %vm3447, %v3521, %v3520
      %v3523 = vrot.slane %v3420, 4
      %v3524 = vsel %vm3450, %v3523, %v3522
      %v3525 = vrot.slane %v3421, 3
      %v3526 = vsel %vm3453, %v3525, %v3524
      %v3527 = vrot.slane %v3422, 2
      %v3528 = vsel %vm3456, %v3527, %v3526
      %v3529 = vrot.slane %v3423, 1
      %v3530 = vsel %vm3459, %v3529, %v3528
      %v3531 = vrot.slane %v3425, 7
      %v3532 = vsel %vm3441, %v3531, %v3424
      %v3533 = vrot.slane %v3426, 6
      %v3534 = vsel %vm3444, %v3533, %v3532
      %v3535 = vrot.slane %v3427, 5
      %v3536 = vsel %vm3447, %v3535, %v3534
      %v3537 = vrot.slane %v3428, 4
      %v3538 = vsel %vm3450, %v3537, %v3536
      %v3539 = vrot.slane %v3429, 3
      %v3540 = vsel %vm3453, %v3539, %v3538
      %v3541 = vrot.slane %v3430, 2
      %v3542 = vsel %vm3456, %v3541, %v3540
      %v3543 = vrot.slane %v3431, 1
      %v3544 = vsel %vm3459, %v3543, %v3542
      %v3545 = vrot.slane %v3433, 7
      %v3546 = vsel %vm3441, %v3545, %v3432
      %v3547 = vrot.slane %v3434, 6
      %v3548 = vsel %vm3444, %v3547, %v3546
      %v3549 = vrot.slane %v3435, 5
      %v3550 = vsel %vm3447, %v3549, %v3548
      %v3551 = vrot.slane %v3436, 4
      %v3552 = vsel %vm3450, %v3551, %v3550
      %v3553 = vrot.slane %v3437, 3
      %v3554 = vsel %vm3453, %v3553, %v3552
      %v3555 = vrot.slane %v3438, 2
      %v3556 = vsel %vm3456, %v3555, %v3554
      %v3557 = vrot.slane %v3439, 1
      %v3558 = vsel %vm3459, %v3557, %v3556
      %v3559 = vpack.c.b16 %v3460, %v3460
      %v3560 = vpack.c.b16 %v3474, %v3474
      %v3561 = vpack.c.b16 %v3488, %v3488
      %v3562 = vpack.c.b16 %v3502, %v3502
      %v3563 = vpack.c.b16 %v3516, %v3516
      %v3564 = vpack.c.b16 %v3530, %v3530
      %v3565 = vpack.c.b16 %v3544, %v3544
      %v3566 = vpack.c.b16 %v3558, %v3558
      %3575 = vst [vmem:[%s389] sm:$0xf] %v3559
      %3576 = vst [vmem:[%s389 + $0x4] sm:$0xf] %v3560
      %3577 = vst [vmem:[%s389 + $0x8] sm:$0xf] %v3561
      %3578 = vst [vmem:[%s389 + $0xc] sm:$0xf] %v3562
      %3579 = vst [vmem:[%s389 + $0x10] sm:$0xf] %v3563
      %3580 = vst [vmem:[%s389 + $0x14] sm:$0xf] %v3564
      %3581 = vst [vmem:[%s389 + $0x18] sm:$0xf] %v3565
      %3582 = vst [vmem:[%s389 + $0x1c] sm:$0xf] %v3566
      %s3583 = smul.u32 8, %s21
      %p3584 = scmp.lt.s32.totalorder %s20, 1
      %s3585 = scalar_select %p3584, %s20, 1
      %p3586 = scmp.lt.s32.totalorder %s3583, 7
      %s3587 = scalar_select %p3586, %s3583, 7
      %s3588 = smul.addr %s3585, 8
      %s3589 = sadd.s32 %s3587, %s3588
      %s3590 = smul.addr %s3589, 4
      %s3591 = scalar_lea.vmem %s5, %s3590
      // Predicated region
      $region41: #{bottleneck_forward.4} parent=39 // pred_check
        %p3592 = pneg %p190
      $region42: #{bottleneck_forward.4} parent=39 // pred_check_branch
        %3594 = sbr.rel (%p3592) target = $region44
      $region43: #{bottleneck_forward.4} parent=39 // pred_region
        %s3595 = smul.u32 8, %s21
      $region44: #{bottleneck_forward.4} parent=39 // pred_fallthru
        _
    $region40: #{bottleneck_forward.4} parent=5 // pred_fallthru
      _
    %p3596 = scmp.le.s32.totalorder 2, %s11
    // Predicated region
    $region45: #{bottleneck_forward.4} parent=5 // pred_check
      %p3597 = pneg %p3596
    $region46: #{bottleneck_forward.4} parent=5 // pred_check_branch
      %3599 = sbr.rel (%p3597) target = $region48
    $region47: #{bottleneck_forward.4} parent=5 // pred_region
      %s3600 = ssub.s32 %s11, 2
      // Predicated region
      $region49: #{bottleneck_forward.4} parent=47 // pred_check
        %p3601 = pneg %p196
      $region50: #{bottleneck_forward.4} parent=47 // pred_check_branch
        %3603 = sbr.rel (%p3601) target = $region52
      $region51: #{bottleneck_forward.4} parent=47 // pred_region
        %s3604 = smul.u32 8, %s23
        %p3605 = scmp.lt.s32.totalorder %s22, 1
        %s3606 = scalar_select %p3605, %s22, 1
        %p3607 = scmp.lt.s32.totalorder %s3604, 7
        %s3608 = scalar_select %p3607, %s3604, 7
        %s3609 = smul.addr %s3606, 8
        %s3610 = sadd.s32 %s3608, %s3609
        %s3611 = smul.addr %s3610, 4
        %s3612 = scalar_lea.vmem %s5, %s3611
      $region52: #{bottleneck_forward.4} parent=47 // pred_fallthru
        _
    $region48: #{bottleneck_forward.4} parent=5 // pred_fallthru
      _
  $region6: #{bottleneck_forward.4} parent=0 // loop_footer
    %s15 = sadd.s32 1, %s11
  $region7: #{bottleneck_forward.4} parent=0 // loop_footer_branch
    %10 = sbr.rel target = $region3
  $region8: #{bottleneck_forward.4} parent=0 // loop_exit
    _

// kernel: bottleneck_forward.5
$region0: #{bottleneck_forward.5}
  #allocation0 [shape = 'u32[]', space=smem, size = 0x4, offset = 0x4, fixed_abs, tag = 'smem constant byte address 0x4 - core index']
  #allocation1 [shape = 'u32[72,128]{1,0:T(1,128)}', space=vmem, size = 0x9000, scoped, tag = 'internal scratch']
  %s0 = inlined_call_operand.vmem [shape: bf16[128,128], index: 0, kind: input, shape index: {}]
  %s1 = inlined_call_operand.vmem [shape: bf16[128,128], index: 1, kind: input, shape index: {}]
  %s2 = inlined_call_operand.vmem [shape: bf16[128,128], index: 2, kind: input, shape index: {}]
  %s3 = inlined_call_operand.vmem [shape: bf16[128,128], index: 3, kind: input, shape index: {}]
  %s4 = inlined_call_operand.vmem [shape: f32[1,128], index: 4, kind: input, shape index: {}]
  %s5 = inlined_call_operand.vmem [shape: bf16[128,128], index: 5, kind: output, shape index: {}]
  %s6 = sld [smem:[#allocation0]]
  $region30: #{bottleneck_forward.5} parent=0
    _
  %s8 = ssub.s32 1, %s6
  %s9 = scalar_select 0, %s8, %s6
  // Predicated region
  $region2: #{bottleneck_forward.5} parent=0 // pred_check
    _
  $region3: #{bottleneck_forward.5} parent=0 // pred_check_branch
    %11 = sbr.rel (0) target = $region5
  $region4: #{bottleneck_forward.5} parent=0 // pred_region
    _
  $region5: #{bottleneck_forward.5} parent=0 // pred_fallthru
    _
  // Predicated region
  $region6: #{bottleneck_forward.5} parent=0 // pred_check
    _
  $region7: #{bottleneck_forward.5} parent=0 // pred_check_branch
    %13 = sbr.rel (0) target = $region9
  $region8: #{bottleneck_forward.5} parent=0 // pred_region
    _
  $region9: #{bottleneck_forward.5} parent=0 // pred_fallthru
    _
  // Predicated region
  $region10: #{bottleneck_forward.5} parent=0 // pred_check
    _
  $region11: #{bottleneck_forward.5} parent=0 // pred_check_branch
    %15 = sbr.rel (0) target = $region13
  $region12: #{bottleneck_forward.5} parent=0 // pred_region
    _
  $region13: #{bottleneck_forward.5} parent=0 // pred_fallthru
    _
  // Predicated region
  $region14: #{bottleneck_forward.5} parent=0 // pred_check
    _
  $region15: #{bottleneck_forward.5} parent=0 // pred_check_branch
    %17 = sbr.rel (0) target = $region17
  $region16: #{bottleneck_forward.5} parent=0 // pred_region
    _
  $region17: #{bottleneck_forward.5} parent=0 // pred_fallthru
    _
  // Predicated region
  $region18: #{bottleneck_forward.5} parent=0 // pred_check
    _
  $region19: #{bottleneck_forward.5} parent=0 // pred_check_branch
    %19 = sbr.rel (0) target = $region21
  $region20: #{bottleneck_forward.5} parent=0 // pred_region
    _
  $region21: #{bottleneck_forward.5} parent=0 // pred_fallthru
    _
  %v20 = vld [vmem:[%s0] sm:$0xf]
  %v21 = vld [vmem:[%s0 + $0x4] sm:$0xf]
  %v22 = vld [vmem:[%s0 + $0x8] sm:$0xf]
  %v23 = vld [vmem:[%s0 + $0xc] sm:$0xf]
  %v24 = vld [vmem:[%s0 + $0x10] sm:$0xf]
  %v25 = vld [vmem:[%s0 + $0x14] sm:$0xf]
  %v26 = vld [vmem:[%s0 + $0x18] sm:$0xf]
  %v27 = vld [vmem:[%s0 + $0x1c] sm:$0xf]
  %v28 = vld [vmem:[%s0 + $0x20] sm:$0xf]
  %v29 = vld [vmem:[%s0 + $0x24] sm:$0xf]
  %v30 = vld [vmem:[%s0 + $0x28] sm:$0xf]
  %v31 = vld [vmem:[%s0 + $0x2c] sm:$0xf]
  %v32 = vld [vmem:[%s0 + $0x30] sm:$0xf]
  %v33 = vld [vmem:[%s0 + $0x34] sm:$0xf]
  %v34 = vld [vmem:[%s0 + $0x38] sm:$0xf]
  %v35 = vld [vmem:[%s0 + $0x3c] sm:$0xf]
  %v36 = vld [vmem:[%s2] sm:$0xf]
  %v37 = vld [vmem:[%s2 + $0x4] sm:$0xf]
  %v38 = vld [vmem:[%s2 + $0x8] sm:$0xf]
  %v39 = vld [vmem:[%s2 + $0xc] sm:$0xf]
  %v40 = vld [vmem:[%s2 + $0x10] sm:$0xf]
  %v41 = vld [vmem:[%s2 + $0x14] sm:$0xf]
  %v42 = vld [vmem:[%s2 + $0x18] sm:$0xf]
  %v43 = vld [vmem:[%s2 + $0x1c] sm:$0xf]
  %v44 = vld [vmem:[%s2 + $0x20] sm:$0xf]
  %v45 = vld [vmem:[%s2 + $0x24] sm:$0xf]
  %v46 = vld [vmem:[%s2 + $0x28] sm:$0xf]
  %v47 = vld [vmem:[%s2 + $0x2c] sm:$0xf]
  %v48 = vld [vmem:[%s2 + $0x30] sm:$0xf]
  %v49 = vld [vmem:[%s2 + $0x34] sm:$0xf]
  %v50 = vld [vmem:[%s2 + $0x38] sm:$0xf]
  %v51 = vld [vmem:[%s2 + $0x3c] sm:$0xf]
  %v52 = vld [vmem:[%s1] sm:$0xf]
  %v53 = vld [vmem:[%s1 + $0x4] sm:$0xf]
  %v54 = vld [vmem:[%s1 + $0x8] sm:$0xf]
  %v55 = vld [vmem:[%s1 + $0xc] sm:$0xf]
  %v56 = vld [vmem:[%s1 + $0x10] sm:$0xf]
  %v57 = vld [vmem:[%s1 + $0x14] sm:$0xf]
  %v58 = vld [vmem:[%s1 + $0x18] sm:$0xf]
  %v59 = vld [vmem:[%s1 + $0x1c] sm:$0xf]
  %v60 = vld [vmem:[%s1 + $0x20] sm:$0xf]
  %v61 = vld [vmem:[%s1 + $0x24] sm:$0xf]
  %v62 = vld [vmem:[%s1 + $0x28] sm:$0xf]
  %v63 = vld [vmem:[%s1 + $0x2c] sm:$0xf]
  %v64 = vld [vmem:[%s1 + $0x30] sm:$0xf]
  %v65 = vld [vmem:[%s1 + $0x34] sm:$0xf]
  %v66 = vld [vmem:[%s1 + $0x38] sm:$0xf]
  %v67 = vld [vmem:[%s1 + $0x3c] sm:$0xf]
  %v68 = vld [vmem:[%s3] sm:$0xf]
  %v69 = vld [vmem:[%s3 + $0x4] sm:$0xf]
  %v70 = vld [vmem:[%s3 + $0x8] sm:$0xf]
  %v71 = vld [vmem:[%s3 + $0xc] sm:$0xf]
  %v72 = vld [vmem:[%s3 + $0x10] sm:$0xf]
  %v73 = vld [vmem:[%s3 + $0x14] sm:$0xf]
  %v74 = vld [vmem:[%s3 + $0x18] sm:$0xf]
  %v75 = vld [vmem:[%s3 + $0x1c] sm:$0xf]
  %v76 = vld [vmem:[%s3 + $0x20] sm:$0xf]
  %v77 = vld [vmem:[%s3 + $0x24] sm:$0xf]
  %v78 = vld [vmem:[%s3 + $0x28] sm:$0xf]
  %v79 = vld [vmem:[%s3 + $0x2c] sm:$0xf]
  %v80 = vld [vmem:[%s3 + $0x30] sm:$0xf]
  %v81 = vld [vmem:[%s3 + $0x34] sm:$0xf]
  %v82 = vld [vmem:[%s3 + $0x38] sm:$0xf]
  %v83 = vld [vmem:[%s3 + $0x3c] sm:$0xf]
  %v100 = vunpack.c.l.b16 %v52
  %v101 = vunpack.c.l.b16 %v53
  %v102 = vunpack.c.l.b16 %v54
  %v103 = vunpack.c.l.b16 %v55
  %v104 = vunpack.c.l.b16 %v56
  %v105 = vunpack.c.l.b16 %v57
  %v106 = vunpack.c.l.b16 %v58
  %v107 = vunpack.c.l.b16 %v59
  %v108 = vunpack.c.l.b16 %v60
  %v109 = vunpack.c.l.b16 %v61
  %v110 = vunpack.c.l.b16 %v62
  %v111 = vunpack.c.l.b16 %v63
  %v112 = vunpack.c.l.b16 %v64
  %v113 = vunpack.c.l.b16 %v65
  %v114 = vunpack.c.l.b16 %v66
  %v115 = vunpack.c.l.b16 %v67
  %v116 = vpack.c.b16 %v101, %v100
  %v117 = vpack.c.b16 %v103, %v102
  %v118 = vpack.c.b16 %v105, %v104
  %v119 = vpack.c.b16 %v107, %v106
  %v120 = vpack.c.b16 %v109, %v108
  %v121 = vpack.c.b16 %v111, %v110
  %v122 = vpack.c.b16 %v113, %v112
  %v123 = vpack.c.b16 %v115, %v114
  %v148 = vunpack.c.l.b16 %v68
  %v149 = vunpack.c.l.b16 %v69
  %v150 = vunpack.c.l.b16 %v70
  %v151 = vunpack.c.l.b16 %v71
  %v152 = vunpack.c.l.b16 %v72
  %v153 = vunpack.c.l.b16 %v73
  %v154 = vunpack.c.l.b16 %v74
  %v155 = vunpack.c.l.b16 %v75
  %v156 = vunpack.c.l.b16 %v76
  %v157 = vunpack.c.l.b16 %v77
  %v158 = vunpack.c.l.b16 %v78
  %v159 = vunpack.c.l.b16 %v79
  %v160 = vunpack.c.l.b16 %v80
  %v161 = vunpack.c.l.b16 %v81
  %v162 = vunpack.c.l.b16 %v82
  %v163 = vunpack.c.l.b16 %v83
  %v164 = vpack.c.b16 %v149, %v148
  %v165 = vpack.c.b16 %v151, %v150
  %v166 = vpack.c.b16 %v153, %v152
  %v167 = vpack.c.b16 %v155, %v154
  %v168 = vpack.c.b16 %v157, %v156
  %v169 = vpack.c.b16 %v159, %v158
  %v170 = vpack.c.b16 %v161, %v160
  %v171 = vpack.c.b16 %v163, %v162
  %180 = vmatpush.bf16.msra.mxu0 %v171
  %181 = vmatpush.bf16.msra.mxu0 %v170
  %182 = vmatpush.bf16.msra.mxu0 %v169
  %183 = vmatpush.bf16.msra.mxu0 %v168
  %184 = vmatpush.bf16.msra.mxu0 %v167
  %185 = vmatpush.bf16.msra.mxu0 %v166
  %186 = vmatpush.bf16.msra.mxu0 %v165
  %187 = vmatpush.bf16.msra.mxu0 %v164
  %188 = vmatmul.bf16.gmra.mxu0 %v116
  %v189 = vpop.f32.mrf.mxu0
  %v190 = vadd.f32 0.0, %v189
  %v191 = vpop.f32.mrf.mxu0
  %v192 = vadd.f32 0.0, %v191
  %193 = vmatmul.bf16.gmra.mxu0 %v117
  %v194 = vpop.f32.mrf.mxu0
  %v195 = vadd.f32 0.0, %v194
  %v196 = vpop.f32.mrf.mxu0
  %v197 = vadd.f32 0.0, %v196
  %198 = vmatmul.bf16.gmra.mxu0 %v118
  %v199 = vpop.f32.mrf.mxu0
  %v200 = vadd.f32 0.0, %v199
  %v201 = vpop.f32.mrf.mxu0
  %v202 = vadd.f32 0.0, %v201
  %203 = vmatmul.bf16.gmra.mxu0 %v119
  %v204 = vpop.f32.mrf.mxu0
  %v205 = vadd.f32 0.0, %v204
  %v206 = vpop.f32.mrf.mxu0
  %v207 = vadd.f32 0.0, %v206
  %208 = vmatmul.bf16.gmra.mxu0 %v120
  %v209 = vpop.f32.mrf.mxu0
  %v210 = vadd.f32 0.0, %v209
  %v211 = vpop.f32.mrf.mxu0
  %v212 = vadd.f32 0.0, %v211
  %213 = vmatmul.bf16.gmra.mxu0 %v121
  %v214 = vpop.f32.mrf.mxu0
  %v215 = vadd.f32 0.0, %v214
  %v216 = vpop.f32.mrf.mxu0
  %v217 = vadd.f32 0.0, %v216
  %218 = vmatmul.bf16.gmra.mxu0 %v122
  %v219 = vpop.f32.mrf.mxu0
  %v220 = vadd.f32 0.0, %v219
  %v221 = vpop.f32.mrf.mxu0
  %v222 = vadd.f32 0.0, %v221
  %223 = vmatmul.bf16.gmra.mxu0 %v123
  %v224 = vpop.f32.mrf.mxu0
  %v225 = vadd.f32 0.0, %v224
  %v226 = vpop.f32.mrf.mxu0
  %v227 = vadd.f32 0.0, %v226
  %228 = vdwg.mxu0
  %v245 = vunpack.c.l.b16 %v20
  %v246 = vunpack.c.l.b16 %v21
  %v247 = vunpack.c.l.b16 %v22
  %v248 = vunpack.c.l.b16 %v23
  %v249 = vunpack.c.l.b16 %v24
  %v250 = vunpack.c.l.b16 %v25
  %v251 = vunpack.c.l.b16 %v26
  %v252 = vunpack.c.l.b16 %v27
  %v253 = vunpack.c.l.b16 %v28
  %v254 = vunpack.c.l.b16 %v29
  %v255 = vunpack.c.l.b16 %v30
  %v256 = vunpack.c.l.b16 %v31
  %v257 = vunpack.c.l.b16 %v32
  %v258 = vunpack.c.l.b16 %v33
  %v259 = vunpack.c.l.b16 %v34
  %v260 = vunpack.c.l.b16 %v35
  %v261 = vpack.c.b16 %v246, %v245
  %v262 = vpack.c.b16 %v248, %v247
  %v263 = vpack.c.b16 %v250, %v249
  %v264 = vpack.c.b16 %v252, %v251
  %v265 = vpack.c.b16 %v254, %v253
  %v266 = vpack.c.b16 %v256, %v255
  %v267 = vpack.c.b16 %v258, %v257
  %v268 = vpack.c.b16 %v260, %v259
  %v293 = vunpack.c.l.b16 %v36
  %v294 = vunpack.c.l.b16 %v37
  %v295 = vunpack.c.l.b16 %v38
  %v296 = vunpack.c.l.b16 %v39
  %v297 = vunpack.c.l.b16 %v40
  %v298 = vunpack.c.l.b16 %v41
  %v299 = vunpack.c.l.b16 %v42
  %v300 = vunpack.c.l.b16 %v43
  %v301 = vunpack.c.l.b16 %v44
  %v302 = vunpack.c.l.b16 %v45
  %v303 = vunpack.c.l.b16 %v46
  %v304 = vunpack.c.l.b16 %v47
  %v305 = vunpack.c.l.b16 %v48
  %v306 = vunpack.c.l.b16 %v49
  %v307 = vunpack.c.l.b16 %v50
  %v308 = vunpack.c.l.b16 %v51
  %v309 = vpack.c.b16 %v294, %v293
  %v310 = vpack.c.b16 %v296, %v295
  %v311 = vpack.c.b16 %v298, %v297
  %v312 = vpack.c.b16 %v300, %v299
  %v313 = vpack.c.b16 %v302, %v301
  %v314 = vpack.c.b16 %v304, %v303
  %v315 = vpack.c.b16 %v306, %v305
  %v316 = vpack.c.b16 %v308, %v307
  %325 = vmatpush.bf16.msra.mxu0 %v316
  %326 = vmatpush.bf16.msra.mxu0 %v315
  %327 = vmatpush.bf16.msra.mxu0 %v314
  %328 = vmatpush.bf16.msra.mxu0 %v313
  %329 = vmatpush.bf16.msra.mxu0 %v312
  %330 = vmatpush.bf16.msra.mxu0 %v311
  %331 = vmatpush.bf16.msra.mxu0 %v310
  %332 = vmatpush.bf16.msra.mxu0 %v309
  %333 = vmatmul.bf16.gmra.mxu0 %v261
  %v334 = vpop.f32.mrf.mxu0
  %v335 = vadd.f32 %v190, %v334
  %v336 = vpop.f32.mrf.mxu0
  %v337 = vadd.f32 %v192, %v336
  %338 = vmatmul.bf16.gmra.mxu0 %v262
  %v339 = vpop.f32.mrf.mxu0
  %v340 = vadd.f32 %v195, %v339
  %v341 = vpop.f32.mrf.mxu0
  %v342 = vadd.f32 %v197, %v341
  %343 = vmatmul.bf16.gmra.mxu0 %v263
  %v344 = vpop.f32.mrf.mxu0
  %v345 = vadd.f32 %v200, %v344
  %v346 = vpop.f32.mrf.mxu0
  %v347 = vadd.f32 %v202, %v346
  %348 = vmatmul.bf16.gmra.mxu0 %v264
  %v349 = vpop.f32.mrf.mxu0
  %v350 = vadd.f32 %v205, %v349
  %v351 = vpop.f32.mrf.mxu0
  %v352 = vadd.f32 %v207, %v351
  %353 = vmatmul.bf16.gmra.mxu0 %v265
  %v354 = vpop.f32.mrf.mxu0
  %v355 = vadd.f32 %v210, %v354
  %v356 = vpop.f32.mrf.mxu0
  %v357 = vadd.f32 %v212, %v356
  %358 = vmatmul.bf16.gmra.mxu0 %v266
  %v359 = vpop.f32.mrf.mxu0
  %v360 = vadd.f32 %v215, %v359
  %v361 = vpop.f32.mrf.mxu0
  %v362 = vadd.f32 %v217, %v361
  %363 = vmatmul.bf16.gmra.mxu0 %v267
  %v364 = vpop.f32.mrf.mxu0
  %v365 = vadd.f32 %v220, %v364
  %v366 = vpop.f32.mrf.mxu0
  %v367 = vadd.f32 %v222, %v366
  %368 = vmatmul.bf16.gmra.mxu0 %v268
  %v369 = vpop.f32.mrf.mxu0
  %v370 = vadd.f32 %v225, %v369
  %v371 = vpop.f32.mrf.mxu0
  %v372 = vadd.f32 %v227, %v371
  %373 = vdwg.mxu0
  %v374 = vld [vmem:[%s4] sm:$0x1]
  %v376 = vperm.slane %v374, 0
  %v378 = vadd.f32 %v335, %v376
  %v379 = vadd.f32 %v337, %v376
  %v380 = vadd.f32 %v340, %v376
  %v381 = vadd.f32 %v342, %v376
  %v382 = vadd.f32 %v345, %v376
  %v383 = vadd.f32 %v347, %v376
  %v384 = vadd.f32 %v350, %v376
  %v385 = vadd.f32 %v352, %v376
  %v386 = vadd.f32 %v355, %v376
  %v387 = vadd.f32 %v357, %v376
  %v388 = vadd.f32 %v360, %v376
  %v389 = vadd.f32 %v362, %v376
  %v390 = vadd.f32 %v365, %v376
  %v391 = vadd.f32 %v367, %v376
  %v392 = vadd.f32 %v370, %v376
  %v393 = vadd.f32 %v372, %v376
  %v394 = vmax.f32 %v378, 0.0
  %v395 = vmax.f32 %v379, 0.0
  %v396 = vmax.f32 %v380, 0.0
  %v397 = vmax.f32 %v381, 0.0
  %v398 = vmax.f32 %v382, 0.0
  %v399 = vmax.f32 %v383, 0.0
  %v400 = vmax.f32 %v384, 0.0
  %v401 = vmax.f32 %v385, 0.0
  %v402 = vmax.f32 %v386, 0.0
  %v403 = vmax.f32 %v387, 0.0
  %v404 = vmax.f32 %v388, 0.0
  %v405 = vmax.f32 %v389, 0.0
  %v406 = vmax.f32 %v390, 0.0
  %v407 = vmax.f32 %v391, 0.0
  %v408 = vmax.f32 %v392, 0.0
  %v409 = vmax.f32 %v393, 0.0
  %v410 = vpack.c.bf16 %v394, %v394
  %v411 = vpack.c.bf16 %v395, %v395
  %v412 = vpack.c.bf16 %v396, %v396
  %v413 = vpack.c.bf16 %v397, %v397
  %v414 = vpack.c.bf16 %v398, %v398
  %v415 = vpack.c.bf16 %v399, %v399
  %v416 = vpack.c.bf16 %v400, %v400
  %v417 = vpack.c.bf16 %v401, %v401
  %v418 = vpack.c.bf16 %v402, %v402
  %v419 = vpack.c.bf16 %v403, %v403
  %v420 = vpack.c.bf16 %v404, %v404
  %v421 = vpack.c.bf16 %v405, %v405
  %v422 = vpack.c.bf16 %v406, %v406
  %v423 = vpack.c.bf16 %v407, %v407
  %v424 = vpack.c.bf16 %v408, %v408
  %v425 = vpack.c.bf16 %v409, %v409
  %426 = vst [vmem:[%s5] sm:$0xf] %v410
  %427 = vst [vmem:[%s5 + $0x4] sm:$0xf] %v411
  %428 = vst [vmem:[%s5 + $0x8] sm:$0xf] %v412
  %429 = vst [vmem:[%s5 + $0xc] sm:$0xf] %v413
  %430 = vst [vmem:[%s5 + $0x10] sm:$0xf] %v414
  %431 = vst [vmem:[%s5 + $0x14] sm:$0xf] %v415
  %432 = vst [vmem:[%s5 + $0x18] sm:$0xf] %v416
  %433 = vst [vmem:[%s5 + $0x1c] sm:$0xf] %v417
  %434 = vst [vmem:[%s5 + $0x20] sm:$0xf] %v418
  %435 = vst [vmem:[%s5 + $0x24] sm:$0xf] %v419
  %436 = vst [vmem:[%s5 + $0x28] sm:$0xf] %v420
  %437 = vst [vmem:[%s5 + $0x2c] sm:$0xf] %v421
  %438 = vst [vmem:[%s5 + $0x30] sm:$0xf] %v422
  %439 = vst [vmem:[%s5 + $0x34] sm:$0xf] %v423
  %440 = vst [vmem:[%s5 + $0x38] sm:$0xf] %v424
  %441 = vst [vmem:[%s5 + $0x3c] sm:$0xf] %v425
  // Predicated region
  $region22: #{bottleneck_forward.5} parent=0 // pred_check
    _
  $region23: #{bottleneck_forward.5} parent=0 // pred_check_branch
    %443 = sbr.rel (0) target = $region25
  $region24: #{bottleneck_forward.5} parent=0 // pred_region
    _
  $region25: #{bottleneck_forward.5} parent=0 // pred_fallthru
    _
  // Predicated region
  $region26: #{bottleneck_forward.5} parent=0 // pred_check
    _
  $region27: #{bottleneck_forward.5} parent=0 // pred_check_branch
    %445 = sbr.rel (0) target = $region29
  $region28: #{bottleneck_forward.5} parent=0 // pred_region
    _
  $region29: #{bottleneck_forward.5} parent=0 // pred_fallthru
    _

</llo_original>
